<compile_context>
chip_gen: v7x
topology: tpu7x:2x2x1
jax: 0.10.0
libtpu: 0.0.40
codegen_flags: <defaults>
</compile_context>

<pallas_src>
import jax
import jax.numpy as jnp
from jax.experimental import pallas as pl
from jax.experimental.pallas import tpu as pltpu

VMEM_SPEC = pl.BlockSpec(memory_space=pltpu.MemorySpace.VMEM)


# ----------------------------------------------------------------------------
# Fused kernel: linear1 + dropout(eval) + ReLU + input projection (both dirs)
#               + interleaved bidirectional LSTM recurrence + fused linear2.
# ----------------------------------------------------------------------------
def _lstm_fused_kernel(x_ref, w1_ref, b1_ref, wih_ref, bg_ref, whh_ref, w2_ref, *rest):
    # x_ref:   (T*B, F)        time-major flattened input rows (row = t*B + b)
    # w1_ref:  (F, F)          linear1 weight, pre-transposed for x @ W
    # b1_ref:  (1, F)
    # wih_ref: (F, nd*4*HP)    [W_ih fwd | W_ih bwd], gate-padded, pre-transposed
    # bg_ref:  (1, nd*4*HP)    fused b_ih + b_hh, gate-padded
    # whh_ref: (nd, HP, 4*HP)  recurrent weights (padded, pre-transposed)
    # w2_ref:  (nd, 1, HP)     per-direction slice of linear2 weight (padded)
    # rest:    nd output refs of shape (B, T), then one VMEM gate-slab scratch (T*B, nd*4*HP)
    nd, hp, G = whh_ref.shape            # G == 4*hp
    out_refs = rest[:nd]
    g_scr = rest[nd]
    B, T = out_refs[0].shape

    # linear1 (+ dropout eval = identity) + ReLU over all (t, b) rows in one MXU pass.
    y = jnp.dot(x_ref[...], w1_ref[...], preferred_element_type=jnp.float32) + b1_ref[...]
    y = jnp.maximum(y, 0.0)
    # LSTM input projection for both directions with fused bias; kept in VMEM (no HBM trip).
    g_scr[...] = jnp.dot(y, wih_ref[...], preferred_element_type=jnp.float32) + bg_ref[...]

    # Hoist recurrent weights / linear2 rows out of the recurrence loop.
    whh = [whh_ref[d] for d in range(nd)]                       # (hp, 4*hp) each
    w2 = [w2_ref[d] for d in range(nd)]                         # (1, hp) each
    h = [jnp.zeros((B, hp), jnp.float32) for _ in range(nd)]    # vreg-resident carries
    c = [jnp.zeros((B, hp), jnp.float32) for _ in range(nd)]

    # Statically unrolled recurrence; both directions interleaved every step so their
    # independent MXU/EUP chains overlap on single-TC chips.
    # TODO(synk): at production T use a T-chunk grid + bounded-unroll fori_loop instead.
    for t in range(T):
        for d in range(nd):
            td = t if d == 0 else T - 1 - t          # static in-kernel time reversal
            gates = (g_scr[td * B:(td + 1) * B, d * G:(d + 1) * G]
                     + jnp.dot(h[d], whh[d], preferred_element_type=jnp.float32))
            ig = jax.nn.sigmoid(gates[:, 0 * hp:1 * hp])   # lane-aligned 128-wide slices
            fg = jax.nn.sigmoid(gates[:, 1 * hp:2 * hp])
            gg = jnp.tanh(gates[:, 2 * hp:3 * hp])
            og = jax.nn.sigmoid(gates[:, 3 * hp:4 * hp])
            c[d] = fg * c[d] + ig * gg
            h[d] = og * jnp.tanh(c[d])
            # Fused linear2 partial for this direction/time: VPU multiply + lane reduce.
            out_refs[d][:, td:td + 1] = jnp.sum(h[d] * w2[d], axis=-1, keepdims=True)


# ----------------------------------------------------------------------------
# Forward pass
# ----------------------------------------------------------------------------
@jax.jit
def lstm_model_forward(x, params):
    B, T, F = x.shape
    nd, hp, _ = params["whh_stack"].shape
    # Time-major flattened rows: one lane/sublane-dense projection matmul, and each
    # recurrence step reads a contiguous row block of the gate slab.
    x_tm = jnp.transpose(x, (1, 0, 2)).reshape(T * B, F)

    outs = pl.pallas_call(
        _lstm_fused_kernel,
        out_shape=tuple(jax.ShapeDtypeStruct((B, T), jnp.float32) for _ in range(nd)),
        in_specs=[VMEM_SPEC] * 7,
        out_specs=tuple(VMEM_SPEC for _ in range(nd)),
        scratch_shapes=[pltpu.VMEM((T * B, nd * 4 * hp), jnp.float32)],  # gate slab
    )(x_tm, params["w1"], params["b1"], params["wih_cat"], params["bg_cat"],
      params["whh_stack"], params["w2_stack"])

    out = outs[0]
    for o in outs[1:]:
        out = out + o
    out = out + params["b2"]            # (B, T): both direction partials + linear2 bias
    return out[:, :, None]              # (B, T, 1) -- no transpose needed


# ----------------------------------------------------------------------------
# Parameters: torch-shaped logical params -> padded / fused kernel params
# ----------------------------------------------------------------------------
def init_logical_params(key, in_feature, bidirectional=True):
    """Synthetic parameters in native PyTorch layouts (gate order i,f,g,o)."""
    F = H = in_feature
    nd = 2 if bidirectional else 1
    n_keys = 4 + 4 * nd
    keys = jax.random.split(key, n_keys)
    s = 0.1
    idx = iter(range(n_keys))
    lstm_dirs = []
    for _ in range(nd):
        lstm_dirs.append({
            "w_ih": jax.random.normal(keys[next(idx)], (4 * H, F), jnp.float32) * s,
            "w_hh": jax.random.normal(keys[next(idx)], (4 * H, H), jnp.float32) * s,
            "b_ih": jax.random.normal(keys[next(idx)], (4 * H,), jnp.float32) * s,
            "b_hh": jax.random.normal(keys[next(idx)], (4 * H,), jnp.float32) * s,
        })
    return {
        "w1": jax.random.normal(keys[next(idx)], (F, F), jnp.float32) * s,
        "b1": jax.random.normal(keys[next(idx)], (F,), jnp.float32) * s,
        "w2": jax.random.normal(keys[next(idx)], (1, nd * H), jnp.float32) * s,
        "b2": jax.random.normal(keys[next(idx)], (), jnp.float32) * s,
        "lstm": lstm_dirs,
    }


def prepare_params(lp):
    """Pad hidden size to a 128-lane multiple (exact: padded lanes stay zero),
    fuse biases, concat direction input-projections, stack recurrent weights."""
    H = lp["lstm"][0]["w_hh"].shape[1]
    nd = len(lp["lstm"])
    hp = ((H + 127) // 128) * 128

    def pad_gate_cols(w):
        # (rows, 4H) -> (rows, 4*hp): zero-pad each gate block to hp lanes.
        r = w.shape[0]
        return jnp.pad(w.reshape(r, 4, H), ((0, 0), (0, 0), (0, hp - H))).reshape(r, 4 * hp)

    wih_l, bg_l, whh_l, w2_l = [], [], [], []
    for d in range(nd):
        lw = lp["lstm"][d]
        wih_l.append(pad_gate_cols(lw["w_ih"].T))                        # (F, 4*hp)
        whh = pad_gate_cols(lw["w_hh"].T)                                # (H, 4*hp)
        whh_l.append(jnp.pad(whh, ((0, hp - H), (0, 0))))                # (hp, 4*hp)
        bg_l.append(pad_gate_cols((lw["b_ih"] + lw["b_hh"])[None, :]))   # (1, 4*hp)
        w2d = lp["w2"][0, d * H:(d + 1) * H]                             # (H,)
        w2_l.append(jnp.pad(w2d, (0, hp - H))[None, :])                  # (1, hp)

    return {
        "w1": lp["w1"].T,                               # (F, F) for x @ W layout
        "b1": lp["b1"][None, :],                        # (1, F)
        "wih_cat": jnp.concatenate(wih_l, axis=1),      # (F, nd*4*hp)
        "bg_cat": jnp.concatenate(bg_l, axis=1),        # (1, nd*4*hp)
        "whh_stack": jnp.stack(whh_l, axis=0),          # (nd, hp, 4*hp)
        "w2_stack": jnp.stack(w2_l, axis=0),            # (nd, 1, hp)
        "b2": lp["b2"],                                 # ()
    }


# ----------------------------------------------------------------------------
# Pure-JAX reference (mirrors the PyTorch module, eval mode) for validation.
# ----------------------------------------------------------------------------
def reference_forward(x, lp):
    B, T, F = x.shape
    H = lp["lstm"][0]["w_hh"].shape[1]
    hi = jax.lax.Precision.HIGHEST
    y = jnp.maximum(jnp.einsum("btf,gf->btg", x, lp["w1"], precision=hi) + lp["b1"], 0.0)

    def run_dir(d, reverse):
        lw = lp["lstm"][d]
        seq = y[:, ::-1, :] if reverse else y
        h = jnp.zeros((B, H), jnp.float32)
        c = jnp.zeros((B, H), jnp.float32)
        outs = []
        for t in range(T):
            gates = (jnp.dot(seq[:, t, :], lw["w_ih"].T, precision=hi) + lw["b_ih"]
                     + jnp.dot(h, lw["w_hh"].T, precision=hi) + lw["b_hh"])
            i = jax.nn.sigmoid(gates[:, 0:H])
            f = jax.nn.sigmoid(gates[:, H:2 * H])
            g = jnp.tanh(gates[:, 2 * H:3 * H])
            o = jax.nn.sigmoid(gates[:, 3 * H:4 * H])
            c = f * c + i * g
            h = o * jnp.tanh(c)
            outs.append(h)
        hs = jnp.stack(outs, axis=1)
        return hs[:, ::-1, :] if reverse else hs

    hs = [run_dir(0, False)]
    if len(lp["lstm"]) == 2:
        hs.append(run_dir(1, True))
    hcat = jnp.concatenate(hs, axis=-1)
    return jnp.dot(hcat, lp["w2"].T, precision=hi) + lp["b2"]   # (B, T, 1)


if __name__ == "__main__":
    B, T, F = 2, 8, 32            # batch, seq, in_feature (= hidden_size)
    bidirectional = True

    key = jax.random.PRNGKey(0)
    k_x, k_p = jax.random.split(key)
    x = jax.random.normal(k_x, (B, T, F), jnp.float32)
    logical_params = init_logical_params(k_p, F, bidirectional)
    params = prepare_params(logical_params)

    out = jax.block_until_ready(lstm_model_forward(x, params))
    assert out.shape == (B, T, 1), out.shape

    ref = jax.block_until_ready(reference_forward(x, logical_params))
    max_err = float(jnp.max(jnp.abs(out - ref)))
    # Tightened from 2e-2: catches any layout/indexing/time-reversal regression (those give
    # O(0.1) errors) while tolerating MXU-vs-XLA f32 matmul pass-count differences.
    assert max_err < 5e-3, f"mismatch vs reference: {max_err}"

    print("KERNEL_OK")
</pallas_src>

<mosaic_0001>
module attributes {stable_mosaic.version = 11 : i64} {
  func.func @_lstm_fused_kernel(%arg0: memref<16x32xf32, #tpu.memory_space<vmem>>, %arg1: memref<32x32xf32, #tpu.memory_space<vmem>>, %arg2: memref<1x32xf32, #tpu.memory_space<vmem>>, %arg3: memref<32x1024xf32, #tpu.memory_space<vmem>>, %arg4: memref<1x1024xf32, #tpu.memory_space<vmem>>, %arg5: memref<2x128x512xf32, #tpu.memory_space<vmem>>, %arg6: memref<2x1x128xf32, #tpu.memory_space<vmem>>, %arg7: memref<2x8xf32, #tpu.memory_space<vmem>>, %arg8: memref<2x8xf32, #tpu.memory_space<vmem>>, %arg9: memref<16x1024xf32, #tpu.memory_space<vmem>>) attributes {dimension_semantics = [], scalar_prefetch = 0 : i64, scratch_operands = 1 : i64, tpu.core_type = #tpu.core_type<tc>} {
    %c0 = arith.constant 0 : index
    %c0_0 = arith.constant 0 : index
    %0 = vector.load %arg0[%c0, %c0_0] : memref<16x32xf32, #tpu.memory_space<vmem>>, vector<16x32xf32>
    %c0_1 = arith.constant 0 : index
    %c0_2 = arith.constant 0 : index
    %1 = vector.load %arg1[%c0_1, %c0_2] : memref<32x32xf32, #tpu.memory_space<vmem>>, vector<32x32xf32>
    %cst = arith.constant dense<0.000000e+00> : vector<16x32xf32>
    %2 = tpu.matmul %0, %1, %cst {dimension_numbers = #tpu.dot_dimension_numbers<[1], [0], [0], [1], [0, 0, 1, 1], [], []>} : vector<16x32xf32>, vector<32x32xf32>, vector<16x32xf32> -> vector<16x32xf32>
    %c0_3 = arith.constant 0 : index
    %c0_4 = arith.constant 0 : index
    %3 = vector.load %arg2[%c0_3, %c0_4] : memref<1x32xf32, #tpu.memory_space<vmem>>, vector<1x32xf32>
    %4 = vector.broadcast %3 : vector<1x32xf32> to vector<16x32xf32>
    %5 = arith.addf %2, %4 : vector<16x32xf32>
    %cst_5 = arith.constant 0.000000e+00 : f32
    %6 = vector.broadcast %cst_5 : f32 to vector<16x32xf32>
    %7 = arith.maximumf %5, %6 : vector<16x32xf32>
    %c0_6 = arith.constant 0 : index
    %c0_7 = arith.constant 0 : index
    %8 = vector.load %arg3[%c0_6, %c0_7] : memref<32x1024xf32, #tpu.memory_space<vmem>>, vector<32x1024xf32>
    %cst_8 = arith.constant dense<0.000000e+00> : vector<16x1024xf32>
    %9 = tpu.matmul %7, %8, %cst_8 {dimension_numbers = #tpu.dot_dimension_numbers<[1], [0], [0], [1], [0, 0, 1, 1], [], []>} : vector<16x32xf32>, vector<32x1024xf32>, vector<16x1024xf32> -> vector<16x1024xf32>
    %c0_9 = arith.constant 0 : index
    %c0_10 = arith.constant 0 : index
    %10 = vector.load %arg4[%c0_9, %c0_10] : memref<1x1024xf32, #tpu.memory_space<vmem>>, vector<1x1024xf32>
    %11 = vector.broadcast %10 : vector<1x1024xf32> to vector<16x1024xf32>
    %12 = arith.addf %9, %11 : vector<16x1024xf32>
    %c0_11 = arith.constant 0 : index
    %c0_12 = arith.constant 0 : index
    %13 = vector.load %arg9[%c0_11, %c0_12] : memref<16x1024xf32, #tpu.memory_space<vmem>>, vector<16x1024xf32>
    tpu.vector_store %arg9[%c0_11, %c0_12], %12 {strides = array<i32>} : memref<16x1024xf32, #tpu.memory_space<vmem>>, vector<16x1024xf32>,
    %c0_13 = arith.constant 0 : index
    %c0_14 = arith.constant 0 : index
    %c0_15 = arith.constant 0 : index
    %14 = vector.load %arg5[%c0_13, %c0_14, %c0_15] : memref<2x128x512xf32, #tpu.memory_space<vmem>>, vector<1x128x512xf32>
    %15 = vector.shape_cast %14 : vector<1x128x512xf32> to vector<128x512xf32>
    %c1 = arith.constant 1 : index
    %c0_16 = arith.constant 0 : index
    %c0_17 = arith.constant 0 : index
    %16 = vector.load %arg5[%c1, %c0_16, %c0_17] : memref<2x128x512xf32, #tpu.memory_space<vmem>>, vector<1x128x512xf32>
    %17 = vector.shape_cast %16 : vector<1x128x512xf32> to vector<128x512xf32>
    %c0_18 = arith.constant 0 : index
    %c0_19 = arith.constant 0 : index
    %c0_20 = arith.constant 0 : index
    %18 = vector.load %arg6[%c0_18, %c0_19, %c0_20] : memref<2x1x128xf32, #tpu.memory_space<vmem>>, vector<1x1x128xf32>
    %19 = vector.shape_cast %18 : vector<1x1x128xf32> to vector<1x128xf32>
    %c1_21 = arith.constant 1 : index
    %c0_22 = arith.constant 0 : index
    %c0_23 = arith.constant 0 : index
    %20 = vector.load %arg6[%c1_21, %c0_22, %c0_23] : memref<2x1x128xf32, #tpu.memory_space<vmem>>, vector<1x1x128xf32>
    %21 = vector.shape_cast %20 : vector<1x1x128xf32> to vector<1x128xf32>
    %cst_24 = arith.constant 0.000000e+00 : f32
    %22 = vector.broadcast %cst_24 : f32 to vector<2x128xf32>
    %cst_25 = arith.constant 0.000000e+00 : f32
    %23 = vector.broadcast %cst_25 : f32 to vector<2x128xf32>
    %cst_26 = arith.constant 0.000000e+00 : f32
    %24 = vector.broadcast %cst_26 : f32 to vector<2x128xf32>
    %cst_27 = arith.constant 0.000000e+00 : f32
    %25 = vector.broadcast %cst_27 : f32 to vector<2x128xf32>
    %c0_28 = arith.constant 0 : index
    %c0_29 = arith.constant 0 : index
    %26 = vector.load %arg9[%c0_28, %c0_29] : memref<16x1024xf32, #tpu.memory_space<vmem>>, vector<2x512xf32>
    %cst_30 = arith.constant dense<0.000000e+00> : vector<2x512xf32>
    %27 = tpu.matmul %22, %15, %cst_30 {dimension_numbers = #tpu.dot_dimension_numbers<[1], [0], [0], [1], [0, 0, 1, 1], [], []>} : vector<2x128xf32>, vector<128x512xf32>, vector<2x512xf32> -> vector<2x512xf32>
    %28 = arith.addf %26, %27 : vector<2x512xf32>
    %29 = vector.extract_strided_slice %28 {offsets = [0, 0], sizes = [2, 128], strides = [1, 1]} : vector<2x512xf32> to vector<2x128xf32>
    %30 = arith.negf %29 : vector<2x128xf32>
    %31 = math.exp %30 : vector<2x128xf32>
    %cst_31 = arith.constant 1.000000e+00 : f32
    %32 = vector.broadcast %cst_31 : f32 to vector<2x128xf32>
    %33 = arith.addf %32, %31 : vector<2x128xf32>
    %34 = arith.divf %32, %33 : vector<2x128xf32>
    %35 = vector.extract_strided_slice %28 {offsets = [0, 128], sizes = [2, 128], strides = [1, 1]} : vector<2x512xf32> to vector<2x128xf32>
    %36 = arith.negf %35 : vector<2x128xf32>
    %37 = math.exp %36 : vector<2x128xf32>
    %cst_32 = arith.constant 1.000000e+00 : f32
    %38 = vector.broadcast %cst_32 : f32 to vector<2x128xf32>
    %39 = arith.addf %38, %37 : vector<2x128xf32>
    %40 = arith.divf %38, %39 : vector<2x128xf32>
    %41 = vector.extract_strided_slice %28 {offsets = [0, 256], sizes = [2, 128], strides = [1, 1]} : vector<2x512xf32> to vector<2x128xf32>
    %42 = math.tanh %41 : vector<2x128xf32>
    %43 = vector.extract_strided_slice %28 {offsets = [0, 384], sizes = [2, 128], strides = [1, 1]} : vector<2x512xf32> to vector<2x128xf32>
    %44 = arith.negf %43 : vector<2x128xf32>
    %45 = math.exp %44 : vector<2x128xf32>
    %cst_33 = arith.constant 1.000000e+00 : f32
    %46 = vector.broadcast %cst_33 : f32 to vector<2x128xf32>
    %47 = arith.addf %46, %45 : vector<2x128xf32>
    %48 = arith.divf %46, %47 : vector<2x128xf32>
    %49 = arith.mulf %40, %24 : vector<2x128xf32>
    %50 = arith.mulf %34, %42 : vector<2x128xf32>
    %51 = arith.addf %49, %50 : vector<2x128xf32>
    %52 = math.tanh %51 : vector<2x128xf32>
    %53 = arith.mulf %48, %52 : vector<2x128xf32>
    %54 = vector.broadcast %19 : vector<1x128xf32> to vector<2x128xf32>
    %55 = arith.mulf %53, %54 : vector<2x128xf32>
    %cst_34 = arith.constant dense<0.000000e+00> : vector<2xf32>
    %56 = vector.multi_reduction <add>, %55, %cst_34 [1] : vector<2x128xf32> to vector<2xf32>
    %57 = vector.shape_cast %56 : vector<2xf32> to vector<2x1xf32>
    %c0_35 = arith.constant 0 : index
    %c0_36 = arith.constant 0 : index
    %58 = vector.load %arg7[%c0_35, %c0_36] : memref<2x8xf32, #tpu.memory_space<vmem>>, vector<2x1xf32>
    tpu.vector_store %arg7[%c0_35, %c0_36], %57 {strides = array<i32>} : memref<2x8xf32, #tpu.memory_space<vmem>>, vector<2x1xf32>,
    %c14 = arith.constant 14 : index
    %c512 = arith.constant 512 : index
    %59 = vector.load %arg9[%c14, %c512] : memref<16x1024xf32, #tpu.memory_space<vmem>>, vector<2x512xf32>
    %cst_37 = arith.constant dense<0.000000e+00> : vector<2x512xf32>
    %60 = tpu.matmul %23, %17, %cst_37 {dimension_numbers = #tpu.dot_dimension_numbers<[1], [0], [0], [1], [0, 0, 1, 1], [], []>} : vector<2x128xf32>, vector<128x512xf32>, vector<2x512xf32> -> vector<2x512xf32>
    %61 = arith.addf %59, %60 : vector<2x512xf32>
    %62 = vector.extract_strided_slice %61 {offsets = [0, 0], sizes = [2, 128], strides = [1, 1]} : vector<2x512xf32> to vector<2x128xf32>
    %63 = arith.negf %62 : vector<2x128xf32>
    %64 = math.exp %63 : vector<2x128xf32>
    %cst_38 = arith.constant 1.000000e+00 : f32
    %65 = vector.broadcast %cst_38 : f32 to vector<2x128xf32>
    %66 = arith.addf %65, %64 : vector<2x128xf32>
    %67 = arith.divf %65, %66 : vector<2x128xf32>
    %68 = vector.extract_strided_slice %61 {offsets = [0, 128], sizes = [2, 128], strides = [1, 1]} : vector<2x512xf32> to vector<2x128xf32>
    %69 = arith.negf %68 : vector<2x128xf32>
    %70 = math.exp %69 : vector<2x128xf32>
    %cst_39 = arith.constant 1.000000e+00 : f32
    %71 = vector.broadcast %cst_39 : f32 to vector<2x128xf32>
    %72 = arith.addf %71, %70 : vector<2x128xf32>
    %73 = arith.divf %71, %72 : vector<2x128xf32>
    %74 = vector.extract_strided_slice %61 {offsets = [0, 256], sizes = [2, 128], strides = [1, 1]} : vector<2x512xf32> to vector<2x128xf32>
    %75 = math.tanh %74 : vector<2x128xf32>
    %76 = vector.extract_strided_slice %61 {offsets = [0, 384], sizes = [2, 128], strides = [1, 1]} : vector<2x512xf32> to vector<2x128xf32>
    %77 = arith.negf %76 : vector<2x128xf32>
    %78 = math.exp %77 : vector<2x128xf32>
    %cst_40 = arith.constant 1.000000e+00 : f32
    %79 = vector.broadcast %cst_40 : f32 to vector<2x128xf32>
    %80 = arith.addf %79, %78 : vector<2x128xf32>
    %81 = arith.divf %79, %80 : vector<2x128xf32>
    %82 = arith.mulf %73, %25 : vector<2x128xf32>
    %83 = arith.mulf %67, %75 : vector<2x128xf32>
    %84 = arith.addf %82, %83 : vector<2x128xf32>
    %85 = math.tanh %84 : vector<2x128xf32>
    %86 = arith.mulf %81, %85 : vector<2x128xf32>
    %87 = vector.broadcast %21 : vector<1x128xf32> to vector<2x128xf32>
    %88 = arith.mulf %86, %87 : vector<2x128xf32>
    %cst_41 = arith.constant dense<0.000000e+00> : vector<2xf32>
    %89 = vector.multi_reduction <add>, %88, %cst_41 [1] : vector<2x128xf32> to vector<2xf32>
    %90 = vector.shape_cast %89 : vector<2xf32> to vector<2x1xf32>
    %c0_42 = arith.constant 0 : index
    %c7 = arith.constant 7 : index
    %91 = vector.load %arg8[%c0_42, %c7] : memref<2x8xf32, #tpu.memory_space<vmem>>, vector<2x1xf32>
    tpu.vector_store %arg8[%c0_42, %c7], %90 {strides = array<i32>} : memref<2x8xf32, #tpu.memory_space<vmem>>, vector<2x1xf32>,
    %c2 = arith.constant 2 : index
    %c0_43 = arith.constant 0 : index
    %92 = vector.load %arg9[%c2, %c0_43] : memref<16x1024xf32, #tpu.memory_space<vmem>>, vector<2x512xf32>
    %cst_44 = arith.constant dense<0.000000e+00> : vector<2x512xf32>
    %93 = tpu.matmul %53, %15, %cst_44 {dimension_numbers = #tpu.dot_dimension_numbers<[1], [0], [0], [1], [0, 0, 1, 1], [], []>} : vector<2x128xf32>, vector<128x512xf32>, vector<2x512xf32> -> vector<2x512xf32>
    %94 = arith.addf %92, %93 : vector<2x512xf32>
    %95 = vector.extract_strided_slice %94 {offsets = [0, 0], sizes = [2, 128], strides = [1, 1]} : vector<2x512xf32> to vector<2x128xf32>
    %96 = arith.negf %95 : vector<2x128xf32>
    %97 = math.exp %96 : vector<2x128xf32>
    %cst_45 = arith.constant 1.000000e+00 : f32
    %98 = vector.broadcast %cst_45 : f32 to vector<2x128xf32>
    %99 = arith.addf %98, %97 : vector<2x128xf32>
    %100 = arith.divf %98, %99 : vector<2x128xf32>
    %101 = vector.extract_strided_slice %94 {offsets = [0, 128], sizes = [2, 128], strides = [1, 1]} : vector<2x512xf32> to vector<2x128xf32>
    %102 = arith.negf %101 : vector<2x128xf32>
    %103 = math.exp %102 : vector<2x128xf32>
    %cst_46 = arith.constant 1.000000e+00 : f32
    %104 = vector.broadcast %cst_46 : f32 to vector<2x128xf32>
    %105 = arith.addf %104, %103 : vector<2x128xf32>
    %106 = arith.divf %104, %105 : vector<2x128xf32>
    %107 = vector.extract_strided_slice %94 {offsets = [0, 256], sizes = [2, 128], strides = [1, 1]} : vector<2x512xf32> to vector<2x128xf32>
    %108 = math.tanh %107 : vector<2x128xf32>
    %109 = vector.extract_strided_slice %94 {offsets = [0, 384], sizes = [2, 128], strides = [1, 1]} : vector<2x512xf32> to vector<2x128xf32>
    %110 = arith.negf %109 : vector<2x128xf32>
    %111 = math.exp %110 : vector<2x128xf32>
    %cst_47 = arith.constant 1.000000e+00 : f32
    %112 = vector.broadcast %cst_47 : f32 to vector<2x128xf32>
    %113 = arith.addf %112, %111 : vector<2x128xf32>
    %114 = arith.divf %112, %113 : vector<2x128xf32>
    %115 = arith.mulf %106, %51 : vector<2x128xf32>
    %116 = arith.mulf %100, %108 : vector<2x128xf32>
    %117 = arith.addf %115, %116 : vector<2x128xf32>
    %118 = math.tanh %117 : vector<2x128xf32>
    %119 = arith.mulf %114, %118 : vector<2x128xf32>
    %120 = vector.broadcast %19 : vector<1x128xf32> to vector<2x128xf32>
    %121 = arith.mulf %119, %120 : vector<2x128xf32>
    %cst_48 = arith.constant dense<0.000000e+00> : vector<2xf32>
    %122 = vector.multi_reduction <add>, %121, %cst_48 [1] : vector<2x128xf32> to vector<2xf32>
    %123 = vector.shape_cast %122 : vector<2xf32> to vector<2x1xf32>
    %c0_49 = arith.constant 0 : index
    %c1_50 = arith.constant 1 : index
    %124 = vector.load %arg7[%c0_49, %c1_50] : memref<2x8xf32, #tpu.memory_space<vmem>>, vector<2x1xf32>
    tpu.vector_store %arg7[%c0_49, %c1_50], %123 {strides = array<i32>} : memref<2x8xf32, #tpu.memory_space<vmem>>, vector<2x1xf32>,
    %c12 = arith.constant 12 : index
    %c512_51 = arith.constant 512 : index
    %125 = vector.load %arg9[%c12, %c512_51] : memref<16x1024xf32, #tpu.memory_space<vmem>>, vector<2x512xf32>
    %cst_52 = arith.constant dense<0.000000e+00> : vector<2x512xf32>
    %126 = tpu.matmul %86, %17, %cst_52 {dimension_numbers = #tpu.dot_dimension_numbers<[1], [0], [0], [1], [0, 0, 1, 1], [], []>} : vector<2x128xf32>, vector<128x512xf32>, vector<2x512xf32> -> vector<2x512xf32>
    %127 = arith.addf %125, %126 : vector<2x512xf32>
    %128 = vector.extract_strided_slice %127 {offsets = [0, 0], sizes = [2, 128], strides = [1, 1]} : vector<2x512xf32> to vector<2x128xf32>
    %129 = arith.negf %128 : vector<2x128xf32>
    %130 = math.exp %129 : vector<2x128xf32>
    %cst_53 = arith.constant 1.000000e+00 : f32
    %131 = vector.broadcast %cst_53 : f32 to vector<2x128xf32>
    %132 = arith.addf %131, %130 : vector<2x128xf32>
    %133 = arith.divf %131, %132 : vector<2x128xf32>
    %134 = vector.extract_strided_slice %127 {offsets = [0, 128], sizes = [2, 128], strides = [1, 1]} : vector<2x512xf32> to vector<2x128xf32>
    %135 = arith.negf %134 : vector<2x128xf32>
    %136 = math.exp %135 : vector<2x128xf32>
    %cst_54 = arith.constant 1.000000e+00 : f32
    %137 = vector.broadcast %cst_54 : f32 to vector<2x128xf32>
    %138 = arith.addf %137, %136 : vector<2x128xf32>
    %139 = arith.divf %137, %138 : vector<2x128xf32>
    %140 = vector.extract_strided_slice %127 {offsets = [0, 256], sizes = [2, 128], strides = [1, 1]} : vector<2x512xf32> to vector<2x128xf32>
    %141 = math.tanh %140 : vector<2x128xf32>
    %142 = vector.extract_strided_slice %127 {offsets = [0, 384], sizes = [2, 128], strides = [1, 1]} : vector<2x512xf32> to vector<2x128xf32>
    %143 = arith.negf %142 : vector<2x128xf32>
    %144 = math.exp %143 : vector<2x128xf32>
    %cst_55 = arith.constant 1.000000e+00 : f32
    %145 = vector.broadcast %cst_55 : f32 to vector<2x128xf32>
    %146 = arith.addf %145, %144 : vector<2x128xf32>
    %147 = arith.divf %145, %146 : vector<2x128xf32>
    %148 = arith.mulf %139, %84 : vector<2x128xf32>
    %149 = arith.mulf %133, %141 : vector<2x128xf32>
    %150 = arith.addf %148, %149 : vector<2x128xf32>
    %151 = math.tanh %150 : vector<2x128xf32>
    %152 = arith.mulf %147, %151 : vector<2x128xf32>
    %153 = vector.broadcast %21 : vector<1x128xf32> to vector<2x128xf32>
    %154 = arith.mulf %152, %153 : vector<2x128xf32>
    %cst_56 = arith.constant dense<0.000000e+00> : vector<2xf32>
    %155 = vector.multi_reduction <add>, %154, %cst_56 [1] : vector<2x128xf32> to vector<2xf32>
    %156 = vector.shape_cast %155 : vector<2xf32> to vector<2x1xf32>
    %c0_57 = arith.constant 0 : index
    %c6 = arith.constant 6 : index
    %157 = vector.load %arg8[%c0_57, %c6] : memref<2x8xf32, #tpu.memory_space<vmem>>, vector<2x1xf32>
    tpu.vector_store %arg8[%c0_57, %c6], %156 {strides = array<i32>} : memref<2x8xf32, #tpu.memory_space<vmem>>, vector<2x1xf32>,
    %c4 = arith.constant 4 : index
    %c0_58 = arith.constant 0 : index
    %158 = vector.load %arg9[%c4, %c0_58] : memref<16x1024xf32, #tpu.memory_space<vmem>>, vector<2x512xf32>
    %cst_59 = arith.constant dense<0.000000e+00> : vector<2x512xf32>
    %159 = tpu.matmul %119, %15, %cst_59 {dimension_numbers = #tpu.dot_dimension_numbers<[1], [0], [0], [1], [0, 0, 1, 1], [], []>} : vector<2x128xf32>, vector<128x512xf32>, vector<2x512xf32> -> vector<2x512xf32>
    %160 = arith.addf %158, %159 : vector<2x512xf32>
    %161 = vector.extract_strided_slice %160 {offsets = [0, 0], sizes = [2, 128], strides = [1, 1]} : vector<2x512xf32> to vector<2x128xf32>
    %162 = arith.negf %161 : vector<2x128xf32>
    %163 = math.exp %162 : vector<2x128xf32>
    %cst_60 = arith.constant 1.000000e+00 : f32
    %164 = vector.broadcast %cst_60 : f32 to vector<2x128xf32>
    %165 = arith.addf %164, %163 : vector<2x128xf32>
    %166 = arith.divf %164, %165 : vector<2x128xf32>
    %167 = vector.extract_strided_slice %160 {offsets = [0, 128], sizes = [2, 128], strides = [1, 1]} : vector<2x512xf32> to vector<2x128xf32>
    %168 = arith.negf %167 : vector<2x128xf32>
    %169 = math.exp %168 : vector<2x128xf32>
    %cst_61 = arith.constant 1.000000e+00 : f32
    %170 = vector.broadcast %cst_61 : f32 to vector<2x128xf32>
    %171 = arith.addf %170, %169 : vector<2x128xf32>
    %172 = arith.divf %170, %171 : vector<2x128xf32>
    %173 = vector.extract_strided_slice %160 {offsets = [0, 256], sizes = [2, 128], strides = [1, 1]} : vector<2x512xf32> to vector<2x128xf32>
    %174 = math.tanh %173 : vector<2x128xf32>
    %175 = vector.extract_strided_slice %160 {offsets = [0, 384], sizes = [2, 128], strides = [1, 1]} : vector<2x512xf32> to vector<2x128xf32>
    %176 = arith.negf %175 : vector<2x128xf32>
    %177 = math.exp %176 : vector<2x128xf32>
    %cst_62 = arith.constant 1.000000e+00 : f32
    %178 = vector.broadcast %cst_62 : f32 to vector<2x128xf32>
    %179 = arith.addf %178, %177 : vector<2x128xf32>
    %180 = arith.divf %178, %179 : vector<2x128xf32>
    %181 = arith.mulf %172, %117 : vector<2x128xf32>
    %182 = arith.mulf %166, %174 : vector<2x128xf32>
    %183 = arith.addf %181, %182 : vector<2x128xf32>
    %184 = math.tanh %183 : vector<2x128xf32>
    %185 = arith.mulf %180, %184 : vector<2x128xf32>
    %186 = vector.broadcast %19 : vector<1x128xf32> to vector<2x128xf32>
    %187 = arith.mulf %185, %186 : vector<2x128xf32>
    %cst_63 = arith.constant dense<0.000000e+00> : vector<2xf32>
    %188 = vector.multi_reduction <add>, %187, %cst_63 [1] : vector<2x128xf32> to vector<2xf32>
    %189 = vector.shape_cast %188 : vector<2xf32> to vector<2x1xf32>
    %c0_64 = arith.constant 0 : index
    %c2_65 = arith.constant 2 : index
    %190 = vector.load %arg7[%c0_64, %c2_65] : memref<2x8xf32, #tpu.memory_space<vmem>>, vector<2x1xf32>
    tpu.vector_store %arg7[%c0_64, %c2_65], %189 {strides = array<i32>} : memref<2x8xf32, #tpu.memory_space<vmem>>, vector<2x1xf32>,
    %c10 = arith.constant 10 : index
    %c512_66 = arith.constant 512 : index
    %191 = vector.load %arg9[%c10, %c512_66] : memref<16x1024xf32, #tpu.memory_space<vmem>>, vector<2x512xf32>
    %cst_67 = arith.constant dense<0.000000e+00> : vector<2x512xf32>
    %192 = tpu.matmul %152, %17, %cst_67 {dimension_numbers = #tpu.dot_dimension_numbers<[1], [0], [0], [1], [0, 0, 1, 1], [], []>} : vector<2x128xf32>, vector<128x512xf32>, vector<2x512xf32> -> vector<2x512xf32>
    %193 = arith.addf %191, %192 : vector<2x512xf32>
    %194 = vector.extract_strided_slice %193 {offsets = [0, 0], sizes = [2, 128], strides = [1, 1]} : vector<2x512xf32> to vector<2x128xf32>
    %195 = arith.negf %194 : vector<2x128xf32>
    %196 = math.exp %195 : vector<2x128xf32>
    %cst_68 = arith.constant 1.000000e+00 : f32
    %197 = vector.broadcast %cst_68 : f32 to vector<2x128xf32>
    %198 = arith.addf %197, %196 : vector<2x128xf32>
    %199 = arith.divf %197, %198 : vector<2x128xf32>
    %200 = vector.extract_strided_slice %193 {offsets = [0, 128], sizes = [2, 128], strides = [1, 1]} : vector<2x512xf32> to vector<2x128xf32>
    %201 = arith.negf %200 : vector<2x128xf32>
    %202 = math.exp %201 : vector<2x128xf32>
    %cst_69 = arith.constant 1.000000e+00 : f32
    %203 = vector.broadcast %cst_69 : f32 to vector<2x128xf32>
    %204 = arith.addf %203, %202 : vector<2x128xf32>
    %205 = arith.divf %203, %204 : vector<2x128xf32>
    %206 = vector.extract_strided_slice %193 {offsets = [0, 256], sizes = [2, 128], strides = [1, 1]} : vector<2x512xf32> to vector<2x128xf32>
    %207 = math.tanh %206 : vector<2x128xf32>
    %208 = vector.extract_strided_slice %193 {offsets = [0, 384], sizes = [2, 128], strides = [1, 1]} : vector<2x512xf32> to vector<2x128xf32>
    %209 = arith.negf %208 : vector<2x128xf32>
    %210 = math.exp %209 : vector<2x128xf32>
    %cst_70 = arith.constant 1.000000e+00 : f32
    %211 = vector.broadcast %cst_70 : f32 to vector<2x128xf32>
    %212 = arith.addf %211, %210 : vector<2x128xf32>
    %213 = arith.divf %211, %212 : vector<2x128xf32>
    %214 = arith.mulf %205, %150 : vector<2x128xf32>
    %215 = arith.mulf %199, %207 : vector<2x128xf32>
    %216 = arith.addf %214, %215 : vector<2x128xf32>
    %217 = math.tanh %216 : vector<2x128xf32>
    %218 = arith.mulf %213, %217 : vector<2x128xf32>
    %219 = vector.broadcast %21 : vector<1x128xf32> to vector<2x128xf32>
    %220 = arith.mulf %218, %219 : vector<2x128xf32>
    %cst_71 = arith.constant dense<0.000000e+00> : vector<2xf32>
    %221 = vector.multi_reduction <add>, %220, %cst_71 [1] : vector<2x128xf32> to vector<2xf32>
    %222 = vector.shape_cast %221 : vector<2xf32> to vector<2x1xf32>
    %c0_72 = arith.constant 0 : index
    %c5 = arith.constant 5 : index
    %223 = vector.load %arg8[%c0_72, %c5] : memref<2x8xf32, #tpu.memory_space<vmem>>, vector<2x1xf32>
    tpu.vector_store %arg8[%c0_72, %c5], %222 {strides = array<i32>} : memref<2x8xf32, #tpu.memory_space<vmem>>, vector<2x1xf32>,
    %c6_73 = arith.constant 6 : index
    %c0_74 = arith.constant 0 : index
    %224 = vector.load %arg9[%c6_73, %c0_74] : memref<16x1024xf32, #tpu.memory_space<vmem>>, vector<2x512xf32>
    %cst_75 = arith.constant dense<0.000000e+00> : vector<2x512xf32>
    %225 = tpu.matmul %185, %15, %cst_75 {dimension_numbers = #tpu.dot_dimension_numbers<[1], [0], [0], [1], [0, 0, 1, 1], [], []>} : vector<2x128xf32>, vector<128x512xf32>, vector<2x512xf32> -> vector<2x512xf32>
    %226 = arith.addf %224, %225 : vector<2x512xf32>
    %227 = vector.extract_strided_slice %226 {offsets = [0, 0], sizes = [2, 128], strides = [1, 1]} : vector<2x512xf32> to vector<2x128xf32>
    %228 = arith.negf %227 : vector<2x128xf32>
    %229 = math.exp %228 : vector<2x128xf32>
    %cst_76 = arith.constant 1.000000e+00 : f32
    %230 = vector.broadcast %cst_76 : f32 to vector<2x128xf32>
    %231 = arith.addf %230, %229 : vector<2x128xf32>
    %232 = arith.divf %230, %231 : vector<2x128xf32>
    %233 = vector.extract_strided_slice %226 {offsets = [0, 128], sizes = [2, 128], strides = [1, 1]} : vector<2x512xf32> to vector<2x128xf32>
    %234 = arith.negf %233 : vector<2x128xf32>
    %235 = math.exp %234 : vector<2x128xf32>
    %cst_77 = arith.constant 1.000000e+00 : f32
    %236 = vector.broadcast %cst_77 : f32 to vector<2x128xf32>
    %237 = arith.addf %236, %235 : vector<2x128xf32>
    %238 = arith.divf %236, %237 : vector<2x128xf32>
    %239 = vector.extract_strided_slice %226 {offsets = [0, 256], sizes = [2, 128], strides = [1, 1]} : vector<2x512xf32> to vector<2x128xf32>
    %240 = math.tanh %239 : vector<2x128xf32>
    %241 = vector.extract_strided_slice %226 {offsets = [0, 384], sizes = [2, 128], strides = [1, 1]} : vector<2x512xf32> to vector<2x128xf32>
    %242 = arith.negf %241 : vector<2x128xf32>
    %243 = math.exp %242 : vector<2x128xf32>
    %cst_78 = arith.constant 1.000000e+00 : f32
    %244 = vector.broadcast %cst_78 : f32 to vector<2x128xf32>
    %245 = arith.addf %244, %243 : vector<2x128xf32>
    %246 = arith.divf %244, %245 : vector<2x128xf32>
    %247 = arith.mulf %238, %183 : vector<2x128xf32>
    %248 = arith.mulf %232, %240 : vector<2x128xf32>
    %249 = arith.addf %247, %248 : vector<2x128xf32>
    %250 = math.tanh %249 : vector<2x128xf32>
    %251 = arith.mulf %246, %250 : vector<2x128xf32>
    %252 = vector.broadcast %19 : vector<1x128xf32> to vector<2x128xf32>
    %253 = arith.mulf %251, %252 : vector<2x128xf32>
    %cst_79 = arith.constant dense<0.000000e+00> : vector<2xf32>
    %254 = vector.multi_reduction <add>, %253, %cst_79 [1] : vector<2x128xf32> to vector<2xf32>
    %255 = vector.shape_cast %254 : vector<2xf32> to vector<2x1xf32>
    %c0_80 = arith.constant 0 : index
    %c3 = arith.constant 3 : index
    %256 = vector.load %arg7[%c0_80, %c3] : memref<2x8xf32, #tpu.memory_space<vmem>>, vector<2x1xf32>
    tpu.vector_store %arg7[%c0_80, %c3], %255 {strides = array<i32>} : memref<2x8xf32, #tpu.memory_space<vmem>>, vector<2x1xf32>,
    %c8 = arith.constant 8 : index
    %c512_81 = arith.constant 512 : index
    %257 = vector.load %arg9[%c8, %c512_81] : memref<16x1024xf32, #tpu.memory_space<vmem>>, vector<2x512xf32>
    %cst_82 = arith.constant dense<0.000000e+00> : vector<2x512xf32>
    %258 = tpu.matmul %218, %17, %cst_82 {dimension_numbers = #tpu.dot_dimension_numbers<[1], [0], [0], [1], [0, 0, 1, 1], [], []>} : vector<2x128xf32>, vector<128x512xf32>, vector<2x512xf32> -> vector<2x512xf32>
    %259 = arith.addf %257, %258 : vector<2x512xf32>
    %260 = vector.extract_strided_slice %259 {offsets = [0, 0], sizes = [2, 128], strides = [1, 1]} : vector<2x512xf32> to vector<2x128xf32>
    %261 = arith.negf %260 : vector<2x128xf32>
    %262 = math.exp %261 : vector<2x128xf32>
    %cst_83 = arith.constant 1.000000e+00 : f32
    %263 = vector.broadcast %cst_83 : f32 to vector<2x128xf32>
    %264 = arith.addf %263, %262 : vector<2x128xf32>
    %265 = arith.divf %263, %264 : vector<2x128xf32>
    %266 = vector.extract_strided_slice %259 {offsets = [0, 128], sizes = [2, 128], strides = [1, 1]} : vector<2x512xf32> to vector<2x128xf32>
    %267 = arith.negf %266 : vector<2x128xf32>
    %268 = math.exp %267 : vector<2x128xf32>
    %cst_84 = arith.constant 1.000000e+00 : f32
    %269 = vector.broadcast %cst_84 : f32 to vector<2x128xf32>
    %270 = arith.addf %269, %268 : vector<2x128xf32>
    %271 = arith.divf %269, %270 : vector<2x128xf32>
    %272 = vector.extract_strided_slice %259 {offsets = [0, 256], sizes = [2, 128], strides = [1, 1]} : vector<2x512xf32> to vector<2x128xf32>
    %273 = math.tanh %272 : vector<2x128xf32>
    %274 = vector.extract_strided_slice %259 {offsets = [0, 384], sizes = [2, 128], strides = [1, 1]} : vector<2x512xf32> to vector<2x128xf32>
    %275 = arith.negf %274 : vector<2x128xf32>
    %276 = math.exp %275 : vector<2x128xf32>
    %cst_85 = arith.constant 1.000000e+00 : f32
    %277 = vector.broadcast %cst_85 : f32 to vector<2x128xf32>
    %278 = arith.addf %277, %276 : vector<2x128xf32>
    %279 = arith.divf %277, %278 : vector<2x128xf32>
    %280 = arith.mulf %271, %216 : vector<2x128xf32>
    %281 = arith.mulf %265, %273 : vector<2x128xf32>
    %282 = arith.addf %280, %281 : vector<2x128xf32>
    %283 = math.tanh %282 : vector<2x128xf32>
    %284 = arith.mulf %279, %283 : vector<2x128xf32>
    %285 = vector.broadcast %21 : vector<1x128xf32> to vector<2x128xf32>
    %286 = arith.mulf %284, %285 : vector<2x128xf32>
    %cst_86 = arith.constant dense<0.000000e+00> : vector<2xf32>
    %287 = vector.multi_reduction <add>, %286, %cst_86 [1] : vector<2x128xf32> to vector<2xf32>
    %288 = vector.shape_cast %287 : vector<2xf32> to vector<2x1xf32>
    %c0_87 = arith.constant 0 : index
    %c4_88 = arith.constant 4 : index
    %289 = vector.load %arg8[%c0_87, %c4_88] : memref<2x8xf32, #tpu.memory_space<vmem>>, vector<2x1xf32>
    tpu.vector_store %arg8[%c0_87, %c4_88], %288 {strides = array<i32>} : memref<2x8xf32, #tpu.memory_space<vmem>>, vector<2x1xf32>,
    %c8_89 = arith.constant 8 : index
    %c0_90 = arith.constant 0 : index
    %290 = vector.load %arg9[%c8_89, %c0_90] : memref<16x1024xf32, #tpu.memory_space<vmem>>, vector<2x512xf32>
    %cst_91 = arith.constant dense<0.000000e+00> : vector<2x512xf32>
    %291 = tpu.matmul %251, %15, %cst_91 {dimension_numbers = #tpu.dot_dimension_numbers<[1], [0], [0], [1], [0, 0, 1, 1], [], []>} : vector<2x128xf32>, vector<128x512xf32>, vector<2x512xf32> -> vector<2x512xf32>
    %292 = arith.addf %290, %291 : vector<2x512xf32>
    %293 = vector.extract_strided_slice %292 {offsets = [0, 0], sizes = [2, 128], strides = [1, 1]} : vector<2x512xf32> to vector<2x128xf32>
    %294 = arith.negf %293 : vector<2x128xf32>
    %295 = math.exp %294 : vector<2x128xf32>
    %cst_92 = arith.constant 1.000000e+00 : f32
    %296 = vector.broadcast %cst_92 : f32 to vector<2x128xf32>
    %297 = arith.addf %296, %295 : vector<2x128xf32>
    %298 = arith.divf %296, %297 : vector<2x128xf32>
    %299 = vector.extract_strided_slice %292 {offsets = [0, 128], sizes = [2, 128], strides = [1, 1]} : vector<2x512xf32> to vector<2x128xf32>
    %300 = arith.negf %299 : vector<2x128xf32>
    %301 = math.exp %300 : vector<2x128xf32>
    %cst_93 = arith.constant 1.000000e+00 : f32
    %302 = vector.broadcast %cst_93 : f32 to vector<2x128xf32>
    %303 = arith.addf %302, %301 : vector<2x128xf32>
    %304 = arith.divf %302, %303 : vector<2x128xf32>
    %305 = vector.extract_strided_slice %292 {offsets = [0, 256], sizes = [2, 128], strides = [1, 1]} : vector<2x512xf32> to vector<2x128xf32>
    %306 = math.tanh %305 : vector<2x128xf32>
    %307 = vector.extract_strided_slice %292 {offsets = [0, 384], sizes = [2, 128], strides = [1, 1]} : vector<2x512xf32> to vector<2x128xf32>
    %308 = arith.negf %307 : vector<2x128xf32>
    %309 = math.exp %308 : vector<2x128xf32>
    %cst_94 = arith.constant 1.000000e+00 : f32
    %310 = vector.broadcast %cst_94 : f32 to vector<2x128xf32>
    %311 = arith.addf %310, %309 : vector<2x128xf32>
    %312 = arith.divf %310, %311 : vector<2x128xf32>
    %313 = arith.mulf %304, %249 : vector<2x128xf32>
    %314 = arith.mulf %298, %306 : vector<2x128xf32>
    %315 = arith.addf %313, %314 : vector<2x128xf32>
    %316 = math.tanh %315 : vector<2x128xf32>
    %317 = arith.mulf %312, %316 : vector<2x128xf32>
    %318 = vector.broadcast %19 : vector<1x128xf32> to vector<2x128xf32>
    %319 = arith.mulf %317, %318 : vector<2x128xf32>
    %cst_95 = arith.constant dense<0.000000e+00> : vector<2xf32>
    %320 = vector.multi_reduction <add>, %319, %cst_95 [1] : vector<2x128xf32> to vector<2xf32>
    %321 = vector.shape_cast %320 : vector<2xf32> to vector<2x1xf32>
    %c0_96 = arith.constant 0 : index
    %c4_97 = arith.constant 4 : index
    %322 = vector.load %arg7[%c0_96, %c4_97] : memref<2x8xf32, #tpu.memory_space<vmem>>, vector<2x1xf32>
    tpu.vector_store %arg7[%c0_96, %c4_97], %321 {strides = array<i32>} : memref<2x8xf32, #tpu.memory_space<vmem>>, vector<2x1xf32>,
    %c6_98 = arith.constant 6 : index
    %c512_99 = arith.constant 512 : index
    %323 = vector.load %arg9[%c6_98, %c512_99] : memref<16x1024xf32, #tpu.memory_space<vmem>>, vector<2x512xf32>
    %cst_100 = arith.constant dense<0.000000e+00> : vector<2x512xf32>
    %324 = tpu.matmul %284, %17, %cst_100 {dimension_numbers = #tpu.dot_dimension_numbers<[1], [0], [0], [1], [0, 0, 1, 1], [], []>} : vector<2x128xf32>, vector<128x512xf32>, vector<2x512xf32> -> vector<2x512xf32>
    %325 = arith.addf %323, %324 : vector<2x512xf32>
    %326 = vector.extract_strided_slice %325 {offsets = [0, 0], sizes = [2, 128], strides = [1, 1]} : vector<2x512xf32> to vector<2x128xf32>
    %327 = arith.negf %326 : vector<2x128xf32>
    %328 = math.exp %327 : vector<2x128xf32>
    %cst_101 = arith.constant 1.000000e+00 : f32
    %329 = vector.broadcast %cst_101 : f32 to vector<2x128xf32>
    %330 = arith.addf %329, %328 : vector<2x128xf32>
    %331 = arith.divf %329, %330 : vector<2x128xf32>
    %332 = vector.extract_strided_slice %325 {offsets = [0, 128], sizes = [2, 128], strides = [1, 1]} : vector<2x512xf32> to vector<2x128xf32>
    %333 = arith.negf %332 : vector<2x128xf32>
    %334 = math.exp %333 : vector<2x128xf32>
    %cst_102 = arith.constant 1.000000e+00 : f32
    %335 = vector.broadcast %cst_102 : f32 to vector<2x128xf32>
    %336 = arith.addf %335, %334 : vector<2x128xf32>
    %337 = arith.divf %335, %336 : vector<2x128xf32>
    %338 = vector.extract_strided_slice %325 {offsets = [0, 256], sizes = [2, 128], strides = [1, 1]} : vector<2x512xf32> to vector<2x128xf32>
    %339 = math.tanh %338 : vector<2x128xf32>
    %340 = vector.extract_strided_slice %325 {offsets = [0, 384], sizes = [2, 128], strides = [1, 1]} : vector<2x512xf32> to vector<2x128xf32>
    %341 = arith.negf %340 : vector<2x128xf32>
    %342 = math.exp %341 : vector<2x128xf32>
    %cst_103 = arith.constant 1.000000e+00 : f32
    %343 = vector.broadcast %cst_103 : f32 to vector<2x128xf32>
    %344 = arith.addf %343, %342 : vector<2x128xf32>
    %345 = arith.divf %343, %344 : vector<2x128xf32>
    %346 = arith.mulf %337, %282 : vector<2x128xf32>
    %347 = arith.mulf %331, %339 : vector<2x128xf32>
    %348 = arith.addf %346, %347 : vector<2x128xf32>
    %349 = math.tanh %348 : vector<2x128xf32>
    %350 = arith.mulf %345, %349 : vector<2x128xf32>
    %351 = vector.broadcast %21 : vector<1x128xf32> to vector<2x128xf32>
    %352 = arith.mulf %350, %351 : vector<2x128xf32>
    %cst_104 = arith.constant dense<0.000000e+00> : vector<2xf32>
    %353 = vector.multi_reduction <add>, %352, %cst_104 [1] : vector<2x128xf32> to vector<2xf32>
    %354 = vector.shape_cast %353 : vector<2xf32> to vector<2x1xf32>
    %c0_105 = arith.constant 0 : index
    %c3_106 = arith.constant 3 : index
    %355 = vector.load %arg8[%c0_105, %c3_106] : memref<2x8xf32, #tpu.memory_space<vmem>>, vector<2x1xf32>
    tpu.vector_store %arg8[%c0_105, %c3_106], %354 {strides = array<i32>} : memref<2x8xf32, #tpu.memory_space<vmem>>, vector<2x1xf32>,
    %c10_107 = arith.constant 10 : index
    %c0_108 = arith.constant 0 : index
    %356 = vector.load %arg9[%c10_107, %c0_108] : memref<16x1024xf32, #tpu.memory_space<vmem>>, vector<2x512xf32>
    %cst_109 = arith.constant dense<0.000000e+00> : vector<2x512xf32>
    %357 = tpu.matmul %317, %15, %cst_109 {dimension_numbers = #tpu.dot_dimension_numbers<[1], [0], [0], [1], [0, 0, 1, 1], [], []>} : vector<2x128xf32>, vector<128x512xf32>, vector<2x512xf32> -> vector<2x512xf32>
    %358 = arith.addf %356, %357 : vector<2x512xf32>
    %359 = vector.extract_strided_slice %358 {offsets = [0, 0], sizes = [2, 128], strides = [1, 1]} : vector<2x512xf32> to vector<2x128xf32>
    %360 = arith.negf %359 : vector<2x128xf32>
    %361 = math.exp %360 : vector<2x128xf32>
    %cst_110 = arith.constant 1.000000e+00 : f32
    %362 = vector.broadcast %cst_110 : f32 to vector<2x128xf32>
    %363 = arith.addf %362, %361 : vector<2x128xf32>
    %364 = arith.divf %362, %363 : vector<2x128xf32>
    %365 = vector.extract_strided_slice %358 {offsets = [0, 128], sizes = [2, 128], strides = [1, 1]} : vector<2x512xf32> to vector<2x128xf32>
    %366 = arith.negf %365 : vector<2x128xf32>
    %367 = math.exp %366 : vector<2x128xf32>
    %cst_111 = arith.constant 1.000000e+00 : f32
    %368 = vector.broadcast %cst_111 : f32 to vector<2x128xf32>
    %369 = arith.addf %368, %367 : vector<2x128xf32>
    %370 = arith.divf %368, %369 : vector<2x128xf32>
    %371 = vector.extract_strided_slice %358 {offsets = [0, 256], sizes = [2, 128], strides = [1, 1]} : vector<2x512xf32> to vector<2x128xf32>
    %372 = math.tanh %371 : vector<2x128xf32>
    %373 = vector.extract_strided_slice %358 {offsets = [0, 384], sizes = [2, 128], strides = [1, 1]} : vector<2x512xf32> to vector<2x128xf32>
    %374 = arith.negf %373 : vector<2x128xf32>
    %375 = math.exp %374 : vector<2x128xf32>
    %cst_112 = arith.constant 1.000000e+00 : f32
    %376 = vector.broadcast %cst_112 : f32 to vector<2x128xf32>
    %377 = arith.addf %376, %375 : vector<2x128xf32>
    %378 = arith.divf %376, %377 : vector<2x128xf32>
    %379 = arith.mulf %370, %315 : vector<2x128xf32>
    %380 = arith.mulf %364, %372 : vector<2x128xf32>
    %381 = arith.addf %379, %380 : vector<2x128xf32>
    %382 = math.tanh %381 : vector<2x128xf32>
    %383 = arith.mulf %378, %382 : vector<2x128xf32>
    %384 = vector.broadcast %19 : vector<1x128xf32> to vector<2x128xf32>
    %385 = arith.mulf %383, %384 : vector<2x128xf32>
    %cst_113 = arith.constant dense<0.000000e+00> : vector<2xf32>
    %386 = vector.multi_reduction <add>, %385, %cst_113 [1] : vector<2x128xf32> to vector<2xf32>
    %387 = vector.shape_cast %386 : vector<2xf32> to vector<2x1xf32>
    %c0_114 = arith.constant 0 : index
    %c5_115 = arith.constant 5 : index
    %388 = vector.load %arg7[%c0_114, %c5_115] : memref<2x8xf32, #tpu.memory_space<vmem>>, vector<2x1xf32>
    tpu.vector_store %arg7[%c0_114, %c5_115], %387 {strides = array<i32>} : memref<2x8xf32, #tpu.memory_space<vmem>>, vector<2x1xf32>,
    %c4_116 = arith.constant 4 : index
    %c512_117 = arith.constant 512 : index
    %389 = vector.load %arg9[%c4_116, %c512_117] : memref<16x1024xf32, #tpu.memory_space<vmem>>, vector<2x512xf32>
    %cst_118 = arith.constant dense<0.000000e+00> : vector<2x512xf32>
    %390 = tpu.matmul %350, %17, %cst_118 {dimension_numbers = #tpu.dot_dimension_numbers<[1], [0], [0], [1], [0, 0, 1, 1], [], []>} : vector<2x128xf32>, vector<128x512xf32>, vector<2x512xf32> -> vector<2x512xf32>
    %391 = arith.addf %389, %390 : vector<2x512xf32>
    %392 = vector.extract_strided_slice %391 {offsets = [0, 0], sizes = [2, 128], strides = [1, 1]} : vector<2x512xf32> to vector<2x128xf32>
    %393 = arith.negf %392 : vector<2x128xf32>
    %394 = math.exp %393 : vector<2x128xf32>
    %cst_119 = arith.constant 1.000000e+00 : f32
    %395 = vector.broadcast %cst_119 : f32 to vector<2x128xf32>
    %396 = arith.addf %395, %394 : vector<2x128xf32>
    %397 = arith.divf %395, %396 : vector<2x128xf32>
    %398 = vector.extract_strided_slice %391 {offsets = [0, 128], sizes = [2, 128], strides = [1, 1]} : vector<2x512xf32> to vector<2x128xf32>
    %399 = arith.negf %398 : vector<2x128xf32>
    %400 = math.exp %399 : vector<2x128xf32>
    %cst_120 = arith.constant 1.000000e+00 : f32
    %401 = vector.broadcast %cst_120 : f32 to vector<2x128xf32>
    %402 = arith.addf %401, %400 : vector<2x128xf32>
    %403 = arith.divf %401, %402 : vector<2x128xf32>
    %404 = vector.extract_strided_slice %391 {offsets = [0, 256], sizes = [2, 128], strides = [1, 1]} : vector<2x512xf32> to vector<2x128xf32>
    %405 = math.tanh %404 : vector<2x128xf32>
    %406 = vector.extract_strided_slice %391 {offsets = [0, 384], sizes = [2, 128], strides = [1, 1]} : vector<2x512xf32> to vector<2x128xf32>
    %407 = arith.negf %406 : vector<2x128xf32>
    %408 = math.exp %407 : vector<2x128xf32>
    %cst_121 = arith.constant 1.000000e+00 : f32
    %409 = vector.broadcast %cst_121 : f32 to vector<2x128xf32>
    %410 = arith.addf %409, %408 : vector<2x128xf32>
    %411 = arith.divf %409, %410 : vector<2x128xf32>
    %412 = arith.mulf %403, %348 : vector<2x128xf32>
    %413 = arith.mulf %397, %405 : vector<2x128xf32>
    %414 = arith.addf %412, %413 : vector<2x128xf32>
    %415 = math.tanh %414 : vector<2x128xf32>
    %416 = arith.mulf %411, %415 : vector<2x128xf32>
    %417 = vector.broadcast %21 : vector<1x128xf32> to vector<2x128xf32>
    %418 = arith.mulf %416, %417 : vector<2x128xf32>
    %cst_122 = arith.constant dense<0.000000e+00> : vector<2xf32>
    %419 = vector.multi_reduction <add>, %418, %cst_122 [1] : vector<2x128xf32> to vector<2xf32>
    %420 = vector.shape_cast %419 : vector<2xf32> to vector<2x1xf32>
    %c0_123 = arith.constant 0 : index
    %c2_124 = arith.constant 2 : index
    %421 = vector.load %arg8[%c0_123, %c2_124] : memref<2x8xf32, #tpu.memory_space<vmem>>, vector<2x1xf32>
    tpu.vector_store %arg8[%c0_123, %c2_124], %420 {strides = array<i32>} : memref<2x8xf32, #tpu.memory_space<vmem>>, vector<2x1xf32>,
    %c12_125 = arith.constant 12 : index
    %c0_126 = arith.constant 0 : index
    %422 = vector.load %arg9[%c12_125, %c0_126] : memref<16x1024xf32, #tpu.memory_space<vmem>>, vector<2x512xf32>
    %cst_127 = arith.constant dense<0.000000e+00> : vector<2x512xf32>
    %423 = tpu.matmul %383, %15, %cst_127 {dimension_numbers = #tpu.dot_dimension_numbers<[1], [0], [0], [1], [0, 0, 1, 1], [], []>} : vector<2x128xf32>, vector<128x512xf32>, vector<2x512xf32> -> vector<2x512xf32>
    %424 = arith.addf %422, %423 : vector<2x512xf32>
    %425 = vector.extract_strided_slice %424 {offsets = [0, 0], sizes = [2, 128], strides = [1, 1]} : vector<2x512xf32> to vector<2x128xf32>
    %426 = arith.negf %425 : vector<2x128xf32>
    %427 = math.exp %426 : vector<2x128xf32>
    %cst_128 = arith.constant 1.000000e+00 : f32
    %428 = vector.broadcast %cst_128 : f32 to vector<2x128xf32>
    %429 = arith.addf %428, %427 : vector<2x128xf32>
    %430 = arith.divf %428, %429 : vector<2x128xf32>
    %431 = vector.extract_strided_slice %424 {offsets = [0, 128], sizes = [2, 128], strides = [1, 1]} : vector<2x512xf32> to vector<2x128xf32>
    %432 = arith.negf %431 : vector<2x128xf32>
    %433 = math.exp %432 : vector<2x128xf32>
    %cst_129 = arith.constant 1.000000e+00 : f32
    %434 = vector.broadcast %cst_129 : f32 to vector<2x128xf32>
    %435 = arith.addf %434, %433 : vector<2x128xf32>
    %436 = arith.divf %434, %435 : vector<2x128xf32>
    %437 = vector.extract_strided_slice %424 {offsets = [0, 256], sizes = [2, 128], strides = [1, 1]} : vector<2x512xf32> to vector<2x128xf32>
    %438 = math.tanh %437 : vector<2x128xf32>
    %439 = vector.extract_strided_slice %424 {offsets = [0, 384], sizes = [2, 128], strides = [1, 1]} : vector<2x512xf32> to vector<2x128xf32>
    %440 = arith.negf %439 : vector<2x128xf32>
    %441 = math.exp %440 : vector<2x128xf32>
    %cst_130 = arith.constant 1.000000e+00 : f32
    %442 = vector.broadcast %cst_130 : f32 to vector<2x128xf32>
    %443 = arith.addf %442, %441 : vector<2x128xf32>
    %444 = arith.divf %442, %443 : vector<2x128xf32>
    %445 = arith.mulf %436, %381 : vector<2x128xf32>
    %446 = arith.mulf %430, %438 : vector<2x128xf32>
    %447 = arith.addf %445, %446 : vector<2x128xf32>
    %448 = math.tanh %447 : vector<2x128xf32>
    %449 = arith.mulf %444, %448 : vector<2x128xf32>
    %450 = vector.broadcast %19 : vector<1x128xf32> to vector<2x128xf32>
    %451 = arith.mulf %449, %450 : vector<2x128xf32>
    %cst_131 = arith.constant dense<0.000000e+00> : vector<2xf32>
    %452 = vector.multi_reduction <add>, %451, %cst_131 [1] : vector<2x128xf32> to vector<2xf32>
    %453 = vector.shape_cast %452 : vector<2xf32> to vector<2x1xf32>
    %c0_132 = arith.constant 0 : index
    %c6_133 = arith.constant 6 : index
    %454 = vector.load %arg7[%c0_132, %c6_133] : memref<2x8xf32, #tpu.memory_space<vmem>>, vector<2x1xf32>
    tpu.vector_store %arg7[%c0_132, %c6_133], %453 {strides = array<i32>} : memref<2x8xf32, #tpu.memory_space<vmem>>, vector<2x1xf32>,
    %c2_134 = arith.constant 2 : index
    %c512_135 = arith.constant 512 : index
    %455 = vector.load %arg9[%c2_134, %c512_135] : memref<16x1024xf32, #tpu.memory_space<vmem>>, vector<2x512xf32>
    %cst_136 = arith.constant dense<0.000000e+00> : vector<2x512xf32>
    %456 = tpu.matmul %416, %17, %cst_136 {dimension_numbers = #tpu.dot_dimension_numbers<[1], [0], [0], [1], [0, 0, 1, 1], [], []>} : vector<2x128xf32>, vector<128x512xf32>, vector<2x512xf32> -> vector<2x512xf32>
    %457 = arith.addf %455, %456 : vector<2x512xf32>
    %458 = vector.extract_strided_slice %457 {offsets = [0, 0], sizes = [2, 128], strides = [1, 1]} : vector<2x512xf32> to vector<2x128xf32>
    %459 = arith.negf %458 : vector<2x128xf32>
    %460 = math.exp %459 : vector<2x128xf32>
    %cst_137 = arith.constant 1.000000e+00 : f32
    %461 = vector.broadcast %cst_137 : f32 to vector<2x128xf32>
    %462 = arith.addf %461, %460 : vector<2x128xf32>
    %463 = arith.divf %461, %462 : vector<2x128xf32>
    %464 = vector.extract_strided_slice %457 {offsets = [0, 128], sizes = [2, 128], strides = [1, 1]} : vector<2x512xf32> to vector<2x128xf32>
    %465 = arith.negf %464 : vector<2x128xf32>
    %466 = math.exp %465 : vector<2x128xf32>
    %cst_138 = arith.constant 1.000000e+00 : f32
    %467 = vector.broadcast %cst_138 : f32 to vector<2x128xf32>
    %468 = arith.addf %467, %466 : vector<2x128xf32>
    %469 = arith.divf %467, %468 : vector<2x128xf32>
    %470 = vector.extract_strided_slice %457 {offsets = [0, 256], sizes = [2, 128], strides = [1, 1]} : vector<2x512xf32> to vector<2x128xf32>
    %471 = math.tanh %470 : vector<2x128xf32>
    %472 = vector.extract_strided_slice %457 {offsets = [0, 384], sizes = [2, 128], strides = [1, 1]} : vector<2x512xf32> to vector<2x128xf32>
    %473 = arith.negf %472 : vector<2x128xf32>
    %474 = math.exp %473 : vector<2x128xf32>
    %cst_139 = arith.constant 1.000000e+00 : f32
    %475 = vector.broadcast %cst_139 : f32 to vector<2x128xf32>
    %476 = arith.addf %475, %474 : vector<2x128xf32>
    %477 = arith.divf %475, %476 : vector<2x128xf32>
    %478 = arith.mulf %469, %414 : vector<2x128xf32>
    %479 = arith.mulf %463, %471 : vector<2x128xf32>
    %480 = arith.addf %478, %479 : vector<2x128xf32>
    %481 = math.tanh %480 : vector<2x128xf32>
    %482 = arith.mulf %477, %481 : vector<2x128xf32>
    %483 = vector.broadcast %21 : vector<1x128xf32> to vector<2x128xf32>
    %484 = arith.mulf %482, %483 : vector<2x128xf32>
    %cst_140 = arith.constant dense<0.000000e+00> : vector<2xf32>
    %485 = vector.multi_reduction <add>, %484, %cst_140 [1] : vector<2x128xf32> to vector<2xf32>
    %486 = vector.shape_cast %485 : vector<2xf32> to vector<2x1xf32>
    %c0_141 = arith.constant 0 : index
    %c1_142 = arith.constant 1 : index
    %487 = vector.load %arg8[%c0_141, %c1_142] : memref<2x8xf32, #tpu.memory_space<vmem>>, vector<2x1xf32>
    tpu.vector_store %arg8[%c0_141, %c1_142], %486 {strides = array<i32>} : memref<2x8xf32, #tpu.memory_space<vmem>>, vector<2x1xf32>,
    %c14_143 = arith.constant 14 : index
    %c0_144 = arith.constant 0 : index
    %488 = vector.load %arg9[%c14_143, %c0_144] : memref<16x1024xf32, #tpu.memory_space<vmem>>, vector<2x512xf32>
    %cst_145 = arith.constant dense<0.000000e+00> : vector<2x512xf32>
    %489 = tpu.matmul %449, %15, %cst_145 {dimension_numbers = #tpu.dot_dimension_numbers<[1], [0], [0], [1], [0, 0, 1, 1], [], []>} : vector<2x128xf32>, vector<128x512xf32>, vector<2x512xf32> -> vector<2x512xf32>
    %490 = arith.addf %488, %489 : vector<2x512xf32>
    %491 = vector.extract_strided_slice %490 {offsets = [0, 0], sizes = [2, 128], strides = [1, 1]} : vector<2x512xf32> to vector<2x128xf32>
    %492 = arith.negf %491 : vector<2x128xf32>
    %493 = math.exp %492 : vector<2x128xf32>
    %cst_146 = arith.constant 1.000000e+00 : f32
    %494 = vector.broadcast %cst_146 : f32 to vector<2x128xf32>
    %495 = arith.addf %494, %493 : vector<2x128xf32>
    %496 = arith.divf %494, %495 : vector<2x128xf32>
    %497 = vector.extract_strided_slice %490 {offsets = [0, 128], sizes = [2, 128], strides = [1, 1]} : vector<2x512xf32> to vector<2x128xf32>
    %498 = arith.negf %497 : vector<2x128xf32>
    %499 = math.exp %498 : vector<2x128xf32>
    %cst_147 = arith.constant 1.000000e+00 : f32
    %500 = vector.broadcast %cst_147 : f32 to vector<2x128xf32>
    %501 = arith.addf %500, %499 : vector<2x128xf32>
    %502 = arith.divf %500, %501 : vector<2x128xf32>
    %503 = vector.extract_strided_slice %490 {offsets = [0, 256], sizes = [2, 128], strides = [1, 1]} : vector<2x512xf32> to vector<2x128xf32>
    %504 = math.tanh %503 : vector<2x128xf32>
    %505 = vector.extract_strided_slice %490 {offsets = [0, 384], sizes = [2, 128], strides = [1, 1]} : vector<2x512xf32> to vector<2x128xf32>
    %506 = arith.negf %505 : vector<2x128xf32>
    %507 = math.exp %506 : vector<2x128xf32>
    %cst_148 = arith.constant 1.000000e+00 : f32
    %508 = vector.broadcast %cst_148 : f32 to vector<2x128xf32>
    %509 = arith.addf %508, %507 : vector<2x128xf32>
    %510 = arith.divf %508, %509 : vector<2x128xf32>
    %511 = arith.mulf %502, %447 : vector<2x128xf32>
    %512 = arith.mulf %496, %504 : vector<2x128xf32>
    %513 = arith.addf %511, %512 : vector<2x128xf32>
    %514 = math.tanh %513 : vector<2x128xf32>
    %515 = arith.mulf %510, %514 : vector<2x128xf32>
    %516 = vector.broadcast %19 : vector<1x128xf32> to vector<2x128xf32>
    %517 = arith.mulf %515, %516 : vector<2x128xf32>
    %cst_149 = arith.constant dense<0.000000e+00> : vector<2xf32>
    %518 = vector.multi_reduction <add>, %517, %cst_149 [1] : vector<2x128xf32> to vector<2xf32>
    %519 = vector.shape_cast %518 : vector<2xf32> to vector<2x1xf32>
    %c0_150 = arith.constant 0 : index
    %c7_151 = arith.constant 7 : index
    %520 = vector.load %arg7[%c0_150, %c7_151] : memref<2x8xf32, #tpu.memory_space<vmem>>, vector<2x1xf32>
    tpu.vector_store %arg7[%c0_150, %c7_151], %519 {strides = array<i32>} : memref<2x8xf32, #tpu.memory_space<vmem>>, vector<2x1xf32>,
    %c0_152 = arith.constant 0 : index
    %c512_153 = arith.constant 512 : index
    %521 = vector.load %arg9[%c0_152, %c512_153] : memref<16x1024xf32, #tpu.memory_space<vmem>>, vector<2x512xf32>
    %cst_154 = arith.constant dense<0.000000e+00> : vector<2x512xf32>
    %522 = tpu.matmul %482, %17, %cst_154 {dimension_numbers = #tpu.dot_dimension_numbers<[1], [0], [0], [1], [0, 0, 1, 1], [], []>} : vector<2x128xf32>, vector<128x512xf32>, vector<2x512xf32> -> vector<2x512xf32>
    %523 = arith.addf %521, %522 : vector<2x512xf32>
    %524 = vector.extract_strided_slice %523 {offsets = [0, 0], sizes = [2, 128], strides = [1, 1]} : vector<2x512xf32> to vector<2x128xf32>
    %525 = arith.negf %524 : vector<2x128xf32>
    %526 = math.exp %525 : vector<2x128xf32>
    %cst_155 = arith.constant 1.000000e+00 : f32
    %527 = vector.broadcast %cst_155 : f32 to vector<2x128xf32>
    %528 = arith.addf %527, %526 : vector<2x128xf32>
    %529 = arith.divf %527, %528 : vector<2x128xf32>
    %530 = vector.extract_strided_slice %523 {offsets = [0, 128], sizes = [2, 128], strides = [1, 1]} : vector<2x512xf32> to vector<2x128xf32>
    %531 = arith.negf %530 : vector<2x128xf32>
    %532 = math.exp %531 : vector<2x128xf32>
    %cst_156 = arith.constant 1.000000e+00 : f32
    %533 = vector.broadcast %cst_156 : f32 to vector<2x128xf32>
    %534 = arith.addf %533, %532 : vector<2x128xf32>
    %535 = arith.divf %533, %534 : vector<2x128xf32>
    %536 = vector.extract_strided_slice %523 {offsets = [0, 256], sizes = [2, 128], strides = [1, 1]} : vector<2x512xf32> to vector<2x128xf32>
    %537 = math.tanh %536 : vector<2x128xf32>
    %538 = vector.extract_strided_slice %523 {offsets = [0, 384], sizes = [2, 128], strides = [1, 1]} : vector<2x512xf32> to vector<2x128xf32>
    %539 = arith.negf %538 : vector<2x128xf32>
    %540 = math.exp %539 : vector<2x128xf32>
    %cst_157 = arith.constant 1.000000e+00 : f32
    %541 = vector.broadcast %cst_157 : f32 to vector<2x128xf32>
    %542 = arith.addf %541, %540 : vector<2x128xf32>
    %543 = arith.divf %541, %542 : vector<2x128xf32>
    %544 = arith.mulf %535, %480 : vector<2x128xf32>
    %545 = arith.mulf %529, %537 : vector<2x128xf32>
    %546 = arith.addf %544, %545 : vector<2x128xf32>
    %547 = math.tanh %546 : vector<2x128xf32>
    %548 = arith.mulf %543, %547 : vector<2x128xf32>
    %549 = vector.broadcast %21 : vector<1x128xf32> to vector<2x128xf32>
    %550 = arith.mulf %548, %549 : vector<2x128xf32>
    %cst_158 = arith.constant dense<0.000000e+00> : vector<2xf32>
    %551 = vector.multi_reduction <add>, %550, %cst_158 [1] : vector<2x128xf32> to vector<2xf32>
    %552 = vector.shape_cast %551 : vector<2xf32> to vector<2x1xf32>
    %c0_159 = arith.constant 0 : index
    %c0_160 = arith.constant 0 : index
    %553 = vector.load %arg8[%c0_159, %c0_160] : memref<2x8xf32, #tpu.memory_space<vmem>>, vector<2x1xf32>
    tpu.vector_store %arg8[%c0_159, %c0_160], %552 {strides = array<i32>} : memref<2x8xf32, #tpu.memory_space<vmem>>, vector<2x1xf32>,
    return
  }
}

</mosaic_0001>

<llo_original>
// kernel: lstm_model_forward.1
$region0: #{lstm_model_forward.1}
  #allocation0 [shape = 'u32[]', space=smem, size = 0x4, offset = 0x4, fixed_abs, tag = 'smem constant byte address 0x4 - core index']
  #allocation1 [shape = 'u32[144,128]{1,0:T(1,128)}', space=vmem, size = 0x12000, scoped, tag = 'internal scratch']
  #allocation2 [shape = 'f32[16,1024]{1,0:T(8,128)}', space=vmem, size = 0x10000, scoped, tag = 'scratch operand']
  %s0 = inlined_call_operand.vmem [shape: f32[16,32], index: 0, kind: input, shape index: {}]
  %s1 = inlined_call_operand.vmem [shape: f32[32,32], index: 1, kind: input, shape index: {}]
  %s2 = inlined_call_operand.vmem [shape: f32[1,32], index: 2, kind: input, shape index: {}]
  %s3 = inlined_call_operand.hbm [shape: f32[32,1024], index: 3, kind: input, shape index: {}]
  %s4 = inlined_call_operand.vmem [shape: f32[1,1024], index: 4, kind: input, shape index: {}]
  %s5 = inlined_call_operand.hbm [shape: f32[2,128,512], index: 5, kind: input, shape index: {}]
  %s6 = inlined_call_operand.vmem [shape: f32[2,1,128], index: 6, kind: input, shape index: {}]
  %s7 = inlined_call_operand.vmem [shape: f32[2,8], index: 7, kind: output, shape index: {0}]
  %s8 = inlined_call_operand.vmem [shape: f32[2,8], index: 8, kind: output, shape index: {1}]
  %9 = xla_tuple %s7, %s8
  %s10 = sld [smem:[#allocation0]]
  $region54: #{lstm_model_forward.1} parent=0
    _
  %s12 = ssub.s32 1, %s10
  %s13 = scalar_select 0, %s12, %s10
  $region1: #{lstm_model_forward.1} parent=0
    #allocation3 [shape = 'u8[131072]{0}', space=vmem, size = 0x20000, scoped, tag = 'input window, operand 3, single buffered']
    #allocation4 [shape = 's32[1]{0}', space=sflag, size = 0x4, scoped, tag = 'scoped memory for lstm_model_forward.1']
    #allocation5 [shape = 'u8[524288]{0}', space=vmem, size = 0x80000, scoped, tag = 'input window, operand 5, single buffered']
    #allocation6 [shape = 's32[1]{0}', space=sflag, size = 0x4, scoped, tag = 'scoped memory for lstm_model_forward.1']
    %14 = vsyncpa [#allocation4], 0
    %15 = vsyncpa [#allocation6], 0
    // Predicated region
    $region2: #{lstm_model_forward.1} parent=1 // pred_check
      _
    $region3: #{lstm_model_forward.1} parent=1 // pred_check_branch
      %17 = sbr.rel (0) target = $region5
    $region4: #{lstm_model_forward.1} parent=1 // pred_region
      _
    $region5: #{lstm_model_forward.1} parent=1 // pred_fallthru
      _
    // Predicated region
    $region6: #{lstm_model_forward.1} parent=1 // pred_check
      _
    $region7: #{lstm_model_forward.1} parent=1 // pred_check_branch
      %19 = sbr.rel (0) target = $region9
    $region8: #{lstm_model_forward.1} parent=1 // pred_region
      _
    $region9: #{lstm_model_forward.1} parent=1 // pred_fallthru
      _
    // Predicated region
    $region10: #{lstm_model_forward.1} parent=1 // pred_check
      _
    $region11: #{lstm_model_forward.1} parent=1 // pred_check_branch
      %21 = sbr.rel (0) target = $region13
    $region12: #{lstm_model_forward.1} parent=1 // pred_region
      _
    $region13: #{lstm_model_forward.1} parent=1 // pred_fallthru
      _
    // Predicated region
    $region14: #{lstm_model_forward.1} parent=1 // pred_check
      _
    $region15: #{lstm_model_forward.1} parent=1 // pred_check_branch
      %23 = sbr.rel (0) target = $region17
    $region16: #{lstm_model_forward.1} parent=1 // pred_region
      %s25 = ssub.s32 4096, 4096
      %26 = vsyncadd [#allocation4], %s25
      %s27 = sshll.u32 [#allocation3], 4
      %s28 = int_to_ptr.vmem [resolvable:$true] %s27
      %33 = dma.hbm_to_vmem [thread:$0]  %s3, 4096, %s28, [#allocation4], 1024, 1024, 64
    $region17: #{lstm_model_forward.1} parent=1 // pred_fallthru
      _
    // Predicated region
    $region18: #{lstm_model_forward.1} parent=1 // pred_check
      _
    $region19: #{lstm_model_forward.1} parent=1 // pred_check_branch
      %35 = sbr.rel (0) target = $region21
    $region20: #{lstm_model_forward.1} parent=1 // pred_region
      _
    $region21: #{lstm_model_forward.1} parent=1 // pred_fallthru
      _
    // Predicated region
    $region22: #{lstm_model_forward.1} parent=1 // pred_check
      _
    $region23: #{lstm_model_forward.1} parent=1 // pred_check_branch
      %37 = sbr.rel (0) target = $region25
    $region24: #{lstm_model_forward.1} parent=1 // pred_region
      %s39 = ssub.s32 16384, 16384
      %40 = vsyncadd [#allocation6], %s39
      %s41 = sshll.u32 [#allocation5], 4
      %s42 = int_to_ptr.vmem [resolvable:$true] %s41
      %47 = dma.hbm_to_vmem [thread:$0]  %s5, 16384, %s42, [#allocation6], 512, 512, 32
    $region25: #{lstm_model_forward.1} parent=1 // pred_fallthru
      _
    // Predicated region
    $region26: #{lstm_model_forward.1} parent=1 // pred_check
      _
    $region27: #{lstm_model_forward.1} parent=1 // pred_check_branch
      %49 = sbr.rel (0) target = $region29
    $region28: #{lstm_model_forward.1} parent=1 // pred_region
      _
    $region29: #{lstm_model_forward.1} parent=1 // pred_fallthru
      _
    // Predicated region
    $region30: #{lstm_model_forward.1} parent=1 // pred_check
      _
    $region31: #{lstm_model_forward.1} parent=1 // pred_check_branch
      %51 = sbr.rel (0) target = $region33
    $region32: #{lstm_model_forward.1} parent=1 // pred_region
      %52 = dma.done [#allocation4], 4096
    $region33: #{lstm_model_forward.1} parent=1 // pred_fallthru
      _
    // Predicated region
    $region34: #{lstm_model_forward.1} parent=1 // pred_check
      _
    $region35: #{lstm_model_forward.1} parent=1 // pred_check_branch
      %54 = sbr.rel (0) target = $region37
    $region36: #{lstm_model_forward.1} parent=1 // pred_region
      %55 = dma.done [#allocation6], 16384
    $region37: #{lstm_model_forward.1} parent=1 // pred_fallthru
      _
    %v56 = vld [vmem:[%s0] sm:$0xff]
    %v57 = vld [vmem:[%s0 + $0x8] sm:$0xff]
    %v58 = vld [vmem:[%s1] sm:$0xff]
    %v59 = vld [vmem:[%s1 + $0x8] sm:$0xff]
    %v60 = vld [vmem:[%s1 + $0x10] sm:$0xff]
    %v61 = vld [vmem:[%s1 + $0x18] sm:$0xff]
    %v62 = vld [vmem:[%s2] sm:$0x1]
    %v64 = vlaneseq
    %v65 = vshrl.u32 %v64, 7
    %v66 = vsub.s32 0, %v65
    %v67 = vrot.slane %v62, %v66
    %vm69 = vcmask 261120
    %v71 = vsel %vm69, %v56, 0
    %v74 = vsel %vm69, %v57, 0
    %76 = vmatprep.subr.mxu0 0.0
    %77 = vmatpush1.msra.mxu0 %v58
    %78 = vmatprep.subr.mxu0 0.0
    %79 = vmatpush1.msra.mxu0 %v59
    %80 = vmatprep.subr.mxu0 0.0
    %81 = vmatpush1.msra.mxu0 %v60
    %82 = vmatprep.subr.mxu0 0.0
    %83 = vmatpush1.msra.mxu0 %v61
    %84 = vmatprep.subr.mxu0 0.0
    %85 = vmatpush1.msra.mxu0 0.0
    %86 = vmatprep.subr.mxu0 0.0
    %87 = vmatpush1.msra.mxu0 0.0
    %88 = vmatprep.subr.mxu0 0.0
    %89 = vmatpush1.msra.mxu0 0.0
    %90 = vmatprep.subr.mxu0 0.0
    %91 = vmatpush1.msra.mxu0 0.0
    %92 = vmatprep.subr.mxu0 0.0
    %93 = vmatpush1.msra.mxu0 0.0
    %94 = vmatprep.subr.mxu0 0.0
    %95 = vmatpush1.msra.mxu0 0.0
    %96 = vmatprep.subr.mxu0 0.0
    %97 = vmatpush1.msra.mxu0 0.0
    %98 = vmatprep.subr.mxu0 0.0
    %99 = vmatpush1.msra.mxu0 0.0
    %100 = vmatprep.subr.mxu0 0.0
    %101 = vmatpush1.msra.mxu0 0.0
    %102 = vmatprep.subr.mxu0 0.0
    %103 = vmatpush1.msra.mxu0 0.0
    %104 = vmatprep.subr.mxu0 0.0
    %105 = vmatpush1.msra.mxu0 0.0
    %106 = vmatprep.subr.mxu0 0.0
    %107 = vmatpush1.msra.mxu0 0.0
    %108 = vmatprep.subr.mxu0 0.0
    %109 = vmatpush1.msra.mxu0 0.0
    %110 = vmatprep.subr.mxu0 0.0
    %111 = vmatpush1.msra.mxu0 0.0
    %112 = vmatprep.subr.mxu0 0.0
    %113 = vmatpush1.msra.mxu0 0.0
    %114 = vmatprep.subr.mxu0 0.0
    %115 = vmatpush1.msra.mxu0 0.0
    %116 = vmatprep.subr.mxu0 0.0
    %117 = vmatpush1.msra.mxu0 0.0
    %118 = vmatprep.subr.mxu0 0.0
    %119 = vmatpush1.msra.mxu0 0.0
    %120 = vmatprep.subr.mxu0 0.0
    %121 = vmatpush1.msra.mxu0 0.0
    %122 = vmatprep.subr.mxu0 0.0
    %123 = vmatpush1.msra.mxu0 0.0
    %124 = vmatprep.subr.mxu0 0.0
    %125 = vmatpush1.msra.mxu0 0.0
    %126 = vmatprep.subr.mxu0 0.0
    %127 = vmatpush1.msra.mxu0 0.0
    %128 = vmatprep.subr.mxu0 0.0
    %129 = vmatpush1.msra.mxu0 0.0
    %130 = vmatprep.subr.mxu0 0.0
    %131 = vmatpush1.msra.mxu0 0.0
    %132 = vmatprep.subr.mxu0 0.0
    %133 = vmatpush1.msra.mxu0 0.0
    %134 = vmatprep.subr.mxu0 0.0
    %135 = vmatpush1.msra.mxu0 0.0
    %136 = vmatprep.subr.mxu0 0.0
    %137 = vmatpush1.msra.mxu0 0.0
    %138 = vmatprep.subr.mxu0 0.0
    %139 = vmatpush1.msra.mxu0 0.0
    %140 = vmatprep.mubr.f32.mxu0 0.0
    %141 = vmatmul.mubr.f32.gmra.mrb[0].mxu0 %v71
    %v142 = vpop.f32.mrb[0].mxu0
    %v143 = vadd.f32 %v67, %v142
    %v144 = vpop.f32.mrb[0].mxu0
    %145 = vmatprep.mubr.f32.mxu0 0.0
    %146 = vmatmul.mubr.f32.gmra.mrb[0].mxu0 %v74
    %v147 = vpop.f32.mrb[0].mxu0
    %v148 = vadd.f32 %v67, %v147
    %v149 = vpop.f32.mrb[0].mxu0
    %150 = vdwg.mxu0
    %v151 = vmax.f32 %v143, 0.0
    %v152 = vmax.f32 %v148, 0.0
    %v153 = vld [vmem:[#allocation3] sm:$0xff]
    %v154 = vld [vmem:[#allocation3 + $0x8] sm:$0xff]
    %v155 = vld [vmem:[#allocation3 + $0x10] sm:$0xff]
    %v156 = vld [vmem:[#allocation3 + $0x18] sm:$0xff]
    %v157 = vld [vmem:[#allocation3 + $0x20] sm:$0xff]
    %v158 = vld [vmem:[#allocation3 + $0x28] sm:$0xff]
    %v159 = vld [vmem:[#allocation3 + $0x30] sm:$0xff]
    %v160 = vld [vmem:[#allocation3 + $0x38] sm:$0xff]
    %v161 = vld [vmem:[#allocation3 + $0x40] sm:$0xff]
    %v162 = vld [vmem:[#allocation3 + $0x48] sm:$0xff]
    %v163 = vld [vmem:[#allocation3 + $0x50] sm:$0xff]
    %v164 = vld [vmem:[#allocation3 + $0x58] sm:$0xff]
    %v165 = vld [vmem:[#allocation3 + $0x60] sm:$0xff]
    %v166 = vld [vmem:[#allocation3 + $0x68] sm:$0xff]
    %v167 = vld [vmem:[#allocation3 + $0x70] sm:$0xff]
    %v168 = vld [vmem:[#allocation3 + $0x78] sm:$0xff]
    %v169 = vld [vmem:[#allocation3 + $0x80] sm:$0xff]
    %v170 = vld [vmem:[#allocation3 + $0x88] sm:$0xff]
    %v171 = vld [vmem:[#allocation3 + $0x90] sm:$0xff]
    %v172 = vld [vmem:[#allocation3 + $0x98] sm:$0xff]
    %v173 = vld [vmem:[#allocation3 + $0xa0] sm:$0xff]
    %v174 = vld [vmem:[#allocation3 + $0xa8] sm:$0xff]
    %v175 = vld [vmem:[#allocation3 + $0xb0] sm:$0xff]
    %v176 = vld [vmem:[#allocation3 + $0xb8] sm:$0xff]
    %v177 = vld [vmem:[#allocation3 + $0xc0] sm:$0xff]
    %v178 = vld [vmem:[#allocation3 + $0xc8] sm:$0xff]
    %v179 = vld [vmem:[#allocation3 + $0xd0] sm:$0xff]
    %v180 = vld [vmem:[#allocation3 + $0xd8] sm:$0xff]
    %v181 = vld [vmem:[#allocation3 + $0xe0] sm:$0xff]
    %v182 = vld [vmem:[#allocation3 + $0xe8] sm:$0xff]
    %v183 = vld [vmem:[#allocation3 + $0xf0] sm:$0xff]
    %v184 = vld [vmem:[#allocation3 + $0xf8] sm:$0xff]
    %v185 = vld [vmem:[%s4] sm:$0xff]
    %v187 = vlaneseq
    %v188 = vshrl.u32 %v187, 7
    %v189 = vsub.s32 0, %v188
    %v190 = vrot.slane %v185, %v189
    %v191 = vlaneseq
    %v192 = vshrl.u32 %v191, 7
    %v193 = vsub.s32 1, %v192
    %v194 = vrot.slane %v185, %v193
    %v195 = vlaneseq
    %v196 = vshrl.u32 %v195, 7
    %v197 = vsub.s32 2, %v196
    %v198 = vrot.slane %v185, %v197
    %v199 = vlaneseq
    %v200 = vshrl.u32 %v199, 7
    %v201 = vsub.s32 3, %v200
    %v202 = vrot.slane %v185, %v201
    %v203 = vlaneseq
    %v204 = vshrl.u32 %v203, 7
    %v205 = vsub.s32 4, %v204
    %v206 = vrot.slane %v185, %v205
    %v207 = vlaneseq
    %v208 = vshrl.u32 %v207, 7
    %v209 = vsub.s32 5, %v208
    %v210 = vrot.slane %v185, %v209
    %v211 = vlaneseq
    %v212 = vshrl.u32 %v211, 7
    %v213 = vsub.s32 6, %v212
    %v214 = vrot.slane %v185, %v213
    %v215 = vlaneseq
    %v216 = vshrl.u32 %v215, 7
    %v217 = vsub.s32 7, %v216
    %v218 = vrot.slane %v185, %v217
    %v228 = vsel %vm69, %v151, 0
    %v231 = vsel %vm69, %v152, 0
    %233 = vmatprep.subr.mxu0 %v154
    %234 = vmatpush1.msra.mxu0 %v153
    %235 = vmatprep.subr.mxu0 %v162
    %236 = vmatpush1.msra.mxu0 %v161
    %237 = vmatprep.subr.mxu0 %v170
    %238 = vmatpush1.msra.mxu0 %v169
    %239 = vmatprep.subr.mxu0 %v178
    %240 = vmatpush1.msra.mxu0 %v177
    %241 = vmatprep.subr.mxu0 0.0
    %242 = vmatpush1.msra.mxu0 0.0
    %243 = vmatprep.subr.mxu0 0.0
    %244 = vmatpush1.msra.mxu0 0.0
    %245 = vmatprep.subr.mxu0 0.0
    %246 = vmatpush1.msra.mxu0 0.0
    %247 = vmatprep.subr.mxu0 0.0
    %248 = vmatpush1.msra.mxu0 0.0
    %249 = vmatprep.subr.mxu0 0.0
    %250 = vmatpush1.msra.mxu0 0.0
    %251 = vmatprep.subr.mxu0 0.0
    %252 = vmatpush1.msra.mxu0 0.0
    %253 = vmatprep.subr.mxu0 0.0
    %254 = vmatpush1.msra.mxu0 0.0
    %255 = vmatprep.subr.mxu0 0.0
    %256 = vmatpush1.msra.mxu0 0.0
    %257 = vmatprep.subr.mxu0 0.0
    %258 = vmatpush1.msra.mxu0 0.0
    %259 = vmatprep.subr.mxu0 0.0
    %260 = vmatpush1.msra.mxu0 0.0
    %261 = vmatprep.subr.mxu0 0.0
    %262 = vmatpush1.msra.mxu0 0.0
    %263 = vmatprep.subr.mxu0 0.0
    %264 = vmatpush1.msra.mxu0 0.0
    %265 = vmatprep.subr.mxu0 0.0
    %266 = vmatpush1.msra.mxu0 0.0
    %267 = vmatprep.subr.mxu0 0.0
    %268 = vmatpush1.msra.mxu0 0.0
    %269 = vmatprep.subr.mxu0 0.0
    %270 = vmatpush1.msra.mxu0 0.0
    %271 = vmatprep.subr.mxu0 0.0
    %272 = vmatpush1.msra.mxu0 0.0
    %273 = vmatprep.subr.mxu0 0.0
    %274 = vmatpush1.msra.mxu0 0.0
    %275 = vmatprep.subr.mxu0 0.0
    %276 = vmatpush1.msra.mxu0 0.0
    %277 = vmatprep.subr.mxu0 0.0
    %278 = vmatpush1.msra.mxu0 0.0
    %279 = vmatprep.subr.mxu0 0.0
    %280 = vmatpush1.msra.mxu0 0.0
    %281 = vmatprep.subr.mxu0 0.0
    %282 = vmatpush1.msra.mxu0 0.0
    %283 = vmatprep.subr.mxu0 0.0
    %284 = vmatpush1.msra.mxu0 0.0
    %285 = vmatprep.subr.mxu0 0.0
    %286 = vmatpush1.msra.mxu0 0.0
    %287 = vmatprep.subr.mxu0 0.0
    %288 = vmatpush1.msra.mxu0 0.0
    %289 = vmatprep.subr.mxu0 0.0
    %290 = vmatpush1.msra.mxu0 0.0
    %291 = vmatprep.subr.mxu0 0.0
    %292 = vmatpush1.msra.mxu0 0.0
    %293 = vmatprep.subr.mxu0 0.0
    %294 = vmatpush1.msra.mxu0 0.0
    %295 = vmatprep.subr.mxu0 0.0
    %296 = vmatpush1.msra.mxu0 0.0
    %297 = vmatprep.mubr.f32.mxu0 0.0
    %298 = vmatmul.mubr.f32.gmra.mrb[0].mxu0 %v228
    %v299 = vpop.f32.mrb[0].mxu0
    %v300 = vadd.f32 %v190, %v299
    %v301 = vpop.f32.mrb[0].mxu0
    %v302 = vadd.f32 %v194, %v301
    %303 = vmatprep.mubr.f32.mxu0 0.0
    %304 = vmatmul.mubr.f32.gmra.mrb[0].mxu0 %v231
    %v305 = vpop.f32.mrb[0].mxu0
    %v306 = vadd.f32 %v190, %v305
    %v307 = vpop.f32.mrb[0].mxu0
    %v308 = vadd.f32 %v194, %v307
    %309 = vdwg.mxu0
    %310 = vmatprep.subr.mxu0 %v156
    %311 = vmatpush1.msra.mxu0 %v155
    %312 = vmatprep.subr.mxu0 %v164
    %313 = vmatpush1.msra.mxu0 %v163
    %314 = vmatprep.subr.mxu0 %v172
    %315 = vmatpush1.msra.mxu0 %v171
    %316 = vmatprep.subr.mxu0 %v180
    %317 = vmatpush1.msra.mxu0 %v179
    %318 = vmatprep.subr.mxu0 0.0
    %319 = vmatpush1.msra.mxu0 0.0
    %320 = vmatprep.subr.mxu0 0.0
    %321 = vmatpush1.msra.mxu0 0.0
    %322 = vmatprep.subr.mxu0 0.0
    %323 = vmatpush1.msra.mxu0 0.0
    %324 = vmatprep.subr.mxu0 0.0
    %325 = vmatpush1.msra.mxu0 0.0
    %326 = vmatprep.subr.mxu0 0.0
    %327 = vmatpush1.msra.mxu0 0.0
    %328 = vmatprep.subr.mxu0 0.0
    %329 = vmatpush1.msra.mxu0 0.0
    %330 = vmatprep.subr.mxu0 0.0
    %331 = vmatpush1.msra.mxu0 0.0
    %332 = vmatprep.subr.mxu0 0.0
    %333 = vmatpush1.msra.mxu0 0.0
    %334 = vmatprep.subr.mxu0 0.0
    %335 = vmatpush1.msra.mxu0 0.0
    %336 = vmatprep.subr.mxu0 0.0
    %337 = vmatpush1.msra.mxu0 0.0
    %338 = vmatprep.subr.mxu0 0.0
    %339 = vmatpush1.msra.mxu0 0.0
    %340 = vmatprep.subr.mxu0 0.0
    %341 = vmatpush1.msra.mxu0 0.0
    %342 = vmatprep.subr.mxu0 0.0
    %343 = vmatpush1.msra.mxu0 0.0
    %344 = vmatprep.subr.mxu0 0.0
    %345 = vmatpush1.msra.mxu0 0.0
    %346 = vmatprep.subr.mxu0 0.0
    %347 = vmatpush1.msra.mxu0 0.0
    %348 = vmatprep.subr.mxu0 0.0
    %349 = vmatpush1.msra.mxu0 0.0
    %350 = vmatprep.subr.mxu0 0.0
    %351 = vmatpush1.msra.mxu0 0.0
    %352 = vmatprep.subr.mxu0 0.0
    %353 = vmatpush1.msra.mxu0 0.0
    %354 = vmatprep.subr.mxu0 0.0
    %355 = vmatpush1.msra.mxu0 0.0
    %356 = vmatprep.subr.mxu0 0.0
    %357 = vmatpush1.msra.mxu0 0.0
    %358 = vmatprep.subr.mxu0 0.0
    %359 = vmatpush1.msra.mxu0 0.0
    %360 = vmatprep.subr.mxu0 0.0
    %361 = vmatpush1.msra.mxu0 0.0
    %362 = vmatprep.subr.mxu0 0.0
    %363 = vmatpush1.msra.mxu0 0.0
    %364 = vmatprep.subr.mxu0 0.0
    %365 = vmatpush1.msra.mxu0 0.0
    %366 = vmatprep.subr.mxu0 0.0
    %367 = vmatpush1.msra.mxu0 0.0
    %368 = vmatprep.subr.mxu0 0.0
    %369 = vmatpush1.msra.mxu0 0.0
    %370 = vmatprep.subr.mxu0 0.0
    %371 = vmatpush1.msra.mxu0 0.0
    %372 = vmatprep.subr.mxu0 0.0
    %373 = vmatpush1.msra.mxu0 0.0
    %374 = vmatprep.mubr.f32.mxu0 0.0
    %375 = vmatmul.mubr.f32.gmra.mrb[0].mxu0 %v228
    %v376 = vpop.f32.mrb[0].mxu0
    %v377 = vadd.f32 %v198, %v376
    %v378 = vpop.f32.mrb[0].mxu0
    %v379 = vadd.f32 %v202, %v378
    %380 = vmatprep.mubr.f32.mxu0 0.0
    %381 = vmatmul.mubr.f32.gmra.mrb[0].mxu0 %v231
    %v382 = vpop.f32.mrb[0].mxu0
    %v383 = vadd.f32 %v198, %v382
    %v384 = vpop.f32.mrb[0].mxu0
    %v385 = vadd.f32 %v202, %v384
    %386 = vdwg.mxu0
    %387 = vmatprep.subr.mxu0 %v158
    %388 = vmatpush1.msra.mxu0 %v157
    %389 = vmatprep.subr.mxu0 %v166
    %390 = vmatpush1.msra.mxu0 %v165
    %391 = vmatprep.subr.mxu0 %v174
    %392 = vmatpush1.msra.mxu0 %v173
    %393 = vmatprep.subr.mxu0 %v182
    %394 = vmatpush1.msra.mxu0 %v181
    %395 = vmatprep.subr.mxu0 0.0
    %396 = vmatpush1.msra.mxu0 0.0
    %397 = vmatprep.subr.mxu0 0.0
    %398 = vmatpush1.msra.mxu0 0.0
    %399 = vmatprep.subr.mxu0 0.0
    %400 = vmatpush1.msra.mxu0 0.0
    %401 = vmatprep.subr.mxu0 0.0
    %402 = vmatpush1.msra.mxu0 0.0
    %403 = vmatprep.subr.mxu0 0.0
    %404 = vmatpush1.msra.mxu0 0.0
    %405 = vmatprep.subr.mxu0 0.0
    %406 = vmatpush1.msra.mxu0 0.0
    %407 = vmatprep.subr.mxu0 0.0
    %408 = vmatpush1.msra.mxu0 0.0
    %409 = vmatprep.subr.mxu0 0.0
    %410 = vmatpush1.msra.mxu0 0.0
    %411 = vmatprep.subr.mxu0 0.0
    %412 = vmatpush1.msra.mxu0 0.0
    %413 = vmatprep.subr.mxu0 0.0
    %414 = vmatpush1.msra.mxu0 0.0
    %415 = vmatprep.subr.mxu0 0.0
    %416 = vmatpush1.msra.mxu0 0.0
    %417 = vmatprep.subr.mxu0 0.0
    %418 = vmatpush1.msra.mxu0 0.0
    %419 = vmatprep.subr.mxu0 0.0
    %420 = vmatpush1.msra.mxu0 0.0
    %421 = vmatprep.subr.mxu0 0.0
    %422 = vmatpush1.msra.mxu0 0.0
    %423 = vmatprep.subr.mxu0 0.0
    %424 = vmatpush1.msra.mxu0 0.0
    %425 = vmatprep.subr.mxu0 0.0
    %426 = vmatpush1.msra.mxu0 0.0
    %427 = vmatprep.subr.mxu0 0.0
    %428 = vmatpush1.msra.mxu0 0.0
    %429 = vmatprep.subr.mxu0 0.0
    %430 = vmatpush1.msra.mxu0 0.0
    %431 = vmatprep.subr.mxu0 0.0
    %432 = vmatpush1.msra.mxu0 0.0
    %433 = vmatprep.subr.mxu0 0.0
    %434 = vmatpush1.msra.mxu0 0.0
    %435 = vmatprep.subr.mxu0 0.0
    %436 = vmatpush1.msra.mxu0 0.0
    %437 = vmatprep.subr.mxu0 0.0
    %438 = vmatpush1.msra.mxu0 0.0
    %439 = vmatprep.subr.mxu0 0.0
    %440 = vmatpush1.msra.mxu0 0.0
    %441 = vmatprep.subr.mxu0 0.0
    %442 = vmatpush1.msra.mxu0 0.0
    %443 = vmatprep.subr.mxu0 0.0
    %444 = vmatpush1.msra.mxu0 0.0
    %445 = vmatprep.subr.mxu0 0.0
    %446 = vmatpush1.msra.mxu0 0.0
    %447 = vmatprep.subr.mxu0 0.0
    %448 = vmatpush1.msra.mxu0 0.0
    %449 = vmatprep.subr.mxu0 0.0
    %450 = vmatpush1.msra.mxu0 0.0
    %451 = vmatprep.mubr.f32.mxu0 0.0
    %452 = vmatmul.mubr.f32.gmra.mrb[0].mxu0 %v228
    %v453 = vpop.f32.mrb[0].mxu0
    %v454 = vadd.f32 %v206, %v453
    %v455 = vpop.f32.mrb[0].mxu0
    %v456 = vadd.f32 %v210, %v455
    %457 = vmatprep.mubr.f32.mxu0 0.0
    %458 = vmatmul.mubr.f32.gmra.mrb[0].mxu0 %v231
    %v459 = vpop.f32.mrb[0].mxu0
    %v460 = vadd.f32 %v206, %v459
    %v461 = vpop.f32.mrb[0].mxu0
    %v462 = vadd.f32 %v210, %v461
    %463 = vdwg.mxu0
    %464 = vmatprep.subr.mxu0 %v160
    %465 = vmatpush1.msra.mxu0 %v159
    %466 = vmatprep.subr.mxu0 %v168
    %467 = vmatpush1.msra.mxu0 %v167
    %468 = vmatprep.subr.mxu0 %v176
    %469 = vmatpush1.msra.mxu0 %v175
    %470 = vmatprep.subr.mxu0 %v184
    %471 = vmatpush1.msra.mxu0 %v183
    %472 = vmatprep.subr.mxu0 0.0
    %473 = vmatpush1.msra.mxu0 0.0
    %474 = vmatprep.subr.mxu0 0.0
    %475 = vmatpush1.msra.mxu0 0.0
    %476 = vmatprep.subr.mxu0 0.0
    %477 = vmatpush1.msra.mxu0 0.0
    %478 = vmatprep.subr.mxu0 0.0
    %479 = vmatpush1.msra.mxu0 0.0
    %480 = vmatprep.subr.mxu0 0.0
    %481 = vmatpush1.msra.mxu0 0.0
    %482 = vmatprep.subr.mxu0 0.0
    %483 = vmatpush1.msra.mxu0 0.0
    %484 = vmatprep.subr.mxu0 0.0
    %485 = vmatpush1.msra.mxu0 0.0
    %486 = vmatprep.subr.mxu0 0.0
    %487 = vmatpush1.msra.mxu0 0.0
    %488 = vmatprep.subr.mxu0 0.0
    %489 = vmatpush1.msra.mxu0 0.0
    %490 = vmatprep.subr.mxu0 0.0
    %491 = vmatpush1.msra.mxu0 0.0
    %492 = vmatprep.subr.mxu0 0.0
    %493 = vmatpush1.msra.mxu0 0.0
    %494 = vmatprep.subr.mxu0 0.0
    %495 = vmatpush1.msra.mxu0 0.0
    %496 = vmatprep.subr.mxu0 0.0
    %497 = vmatpush1.msra.mxu0 0.0
    %498 = vmatprep.subr.mxu0 0.0
    %499 = vmatpush1.msra.mxu0 0.0
    %500 = vmatprep.subr.mxu0 0.0
    %501 = vmatpush1.msra.mxu0 0.0
    %502 = vmatprep.subr.mxu0 0.0
    %503 = vmatpush1.msra.mxu0 0.0
    %504 = vmatprep.subr.mxu0 0.0
    %505 = vmatpush1.msra.mxu0 0.0
    %506 = vmatprep.subr.mxu0 0.0
    %507 = vmatpush1.msra.mxu0 0.0
    %508 = vmatprep.subr.mxu0 0.0
    %509 = vmatpush1.msra.mxu0 0.0
    %510 = vmatprep.subr.mxu0 0.0
    %511 = vmatpush1.msra.mxu0 0.0
    %512 = vmatprep.subr.mxu0 0.0
    %513 = vmatpush1.msra.mxu0 0.0
    %514 = vmatprep.subr.mxu0 0.0
    %515 = vmatpush1.msra.mxu0 0.0
    %516 = vmatprep.subr.mxu0 0.0
    %517 = vmatpush1.msra.mxu0 0.0
    %518 = vmatprep.subr.mxu0 0.0
    %519 = vmatpush1.msra.mxu0 0.0
    %520 = vmatprep.subr.mxu0 0.0
    %521 = vmatpush1.msra.mxu0 0.0
    %522 = vmatprep.subr.mxu0 0.0
    %523 = vmatpush1.msra.mxu0 0.0
    %524 = vmatprep.subr.mxu0 0.0
    %525 = vmatpush1.msra.mxu0 0.0
    %526 = vmatprep.subr.mxu0 0.0
    %527 = vmatpush1.msra.mxu0 0.0
    %528 = vmatprep.mubr.f32.mxu0 0.0
    %529 = vmatmul.mubr.f32.gmra.mrb[0].mxu0 %v228
    %v530 = vpop.f32.mrb[0].mxu0
    %v531 = vadd.f32 %v214, %v530
    %v532 = vpop.f32.mrb[0].mxu0
    %v533 = vadd.f32 %v218, %v532
    %534 = vmatprep.mubr.f32.mxu0 0.0
    %535 = vmatmul.mubr.f32.gmra.mrb[0].mxu0 %v231
    %v536 = vpop.f32.mrb[0].mxu0
    %v537 = vadd.f32 %v214, %v536
    %v538 = vpop.f32.mrb[0].mxu0
    %v539 = vadd.f32 %v218, %v538
    %540 = vdwg.mxu0
    %541 = vst [vmem:[#allocation2] sm:$0xff] %v300
    %542 = vst [vmem:[#allocation2 + $0x8] sm:$0xff] %v302
    %543 = vst [vmem:[#allocation2 + $0x10] sm:$0xff] %v377
    %544 = vst [vmem:[#allocation2 + $0x18] sm:$0xff] %v379
    %545 = vst [vmem:[#allocation2 + $0x20] sm:$0xff] %v454
    %546 = vst [vmem:[#allocation2 + $0x28] sm:$0xff] %v456
    %547 = vst [vmem:[#allocation2 + $0x30] sm:$0xff] %v531
    %548 = vst [vmem:[#allocation2 + $0x38] sm:$0xff] %v533
    %549 = vst [vmem:[#allocation2 + $0x40] sm:$0xff] %v306
    %550 = vst [vmem:[#allocation2 + $0x48] sm:$0xff] %v308
    %551 = vst [vmem:[#allocation2 + $0x50] sm:$0xff] %v383
    %552 = vst [vmem:[#allocation2 + $0x58] sm:$0xff] %v385
    %553 = vst [vmem:[#allocation2 + $0x60] sm:$0xff] %v460
    %554 = vst [vmem:[#allocation2 + $0x68] sm:$0xff] %v462
    %555 = vst [vmem:[#allocation2 + $0x70] sm:$0xff] %v537
    %556 = vst [vmem:[#allocation2 + $0x78] sm:$0xff] %v539
    %v557 = vld [vmem:[#allocation5] sm:$0xff]
    %v558 = vld [vmem:[#allocation5 + $0x8] sm:$0xff]
    %v559 = vld [vmem:[#allocation5 + $0x10] sm:$0xff]
    %v560 = vld [vmem:[#allocation5 + $0x18] sm:$0xff]
    %v561 = vld [vmem:[#allocation5 + $0x20] sm:$0xff]
    %v562 = vld [vmem:[#allocation5 + $0x28] sm:$0xff]
    %v563 = vld [vmem:[#allocation5 + $0x30] sm:$0xff]
    %v564 = vld [vmem:[#allocation5 + $0x38] sm:$0xff]
    %v565 = vld [vmem:[#allocation5 + $0x40] sm:$0xff]
    %v566 = vld [vmem:[#allocation5 + $0x48] sm:$0xff]
    %v567 = vld [vmem:[#allocation5 + $0x50] sm:$0xff]
    %v568 = vld [vmem:[#allocation5 + $0x58] sm:$0xff]
    %v569 = vld [vmem:[#allocation5 + $0x60] sm:$0xff]
    %v570 = vld [vmem:[#allocation5 + $0x68] sm:$0xff]
    %v571 = vld [vmem:[#allocation5 + $0x70] sm:$0xff]
    %v572 = vld [vmem:[#allocation5 + $0x78] sm:$0xff]
    %v573 = vld [vmem:[#allocation5 + $0x80] sm:$0xff]
    %v574 = vld [vmem:[#allocation5 + $0x88] sm:$0xff]
    %v575 = vld [vmem:[#allocation5 + $0x90] sm:$0xff]
    %v576 = vld [vmem:[#allocation5 + $0x98] sm:$0xff]
    %v577 = vld [vmem:[#allocation5 + $0xa0] sm:$0xff]
    %v578 = vld [vmem:[#allocation5 + $0xa8] sm:$0xff]
    %v579 = vld [vmem:[#allocation5 + $0xb0] sm:$0xff]
    %v580 = vld [vmem:[#allocation5 + $0xb8] sm:$0xff]
    %v581 = vld [vmem:[#allocation5 + $0xc0] sm:$0xff]
    %v582 = vld [vmem:[#allocation5 + $0xc8] sm:$0xff]
    %v583 = vld [vmem:[#allocation5 + $0xd0] sm:$0xff]
    %v584 = vld [vmem:[#allocation5 + $0xd8] sm:$0xff]
    %v585 = vld [vmem:[#allocation5 + $0xe0] sm:$0xff]
    %v586 = vld [vmem:[#allocation5 + $0xe8] sm:$0xff]
    %v587 = vld [vmem:[#allocation5 + $0xf0] sm:$0xff]
    %v588 = vld [vmem:[#allocation5 + $0xf8] sm:$0xff]
    %v589 = vld [vmem:[#allocation5 + $0x100] sm:$0xff]
    %v590 = vld [vmem:[#allocation5 + $0x108] sm:$0xff]
    %v591 = vld [vmem:[#allocation5 + $0x110] sm:$0xff]
    %v592 = vld [vmem:[#allocation5 + $0x118] sm:$0xff]
    %v593 = vld [vmem:[#allocation5 + $0x120] sm:$0xff]
    %v594 = vld [vmem:[#allocation5 + $0x128] sm:$0xff]
    %v595 = vld [vmem:[#allocation5 + $0x130] sm:$0xff]
    %v596 = vld [vmem:[#allocation5 + $0x138] sm:$0xff]
    %v597 = vld [vmem:[#allocation5 + $0x140] sm:$0xff]
    %v598 = vld [vmem:[#allocation5 + $0x148] sm:$0xff]
    %v599 = vld [vmem:[#allocation5 + $0x150] sm:$0xff]
    %v600 = vld [vmem:[#allocation5 + $0x158] sm:$0xff]
    %v601 = vld [vmem:[#allocation5 + $0x160] sm:$0xff]
    %v602 = vld [vmem:[#allocation5 + $0x168] sm:$0xff]
    %v603 = vld [vmem:[#allocation5 + $0x170] sm:$0xff]
    %v604 = vld [vmem:[#allocation5 + $0x178] sm:$0xff]
    %v605 = vld [vmem:[#allocation5 + $0x180] sm:$0xff]
    %v606 = vld [vmem:[#allocation5 + $0x188] sm:$0xff]
    %v607 = vld [vmem:[#allocation5 + $0x190] sm:$0xff]
    %v608 = vld [vmem:[#allocation5 + $0x198] sm:$0xff]
    %v609 = vld [vmem:[#allocation5 + $0x1a0] sm:$0xff]
    %v610 = vld [vmem:[#allocation5 + $0x1a8] sm:$0xff]
    %v611 = vld [vmem:[#allocation5 + $0x1b0] sm:$0xff]
    %v612 = vld [vmem:[#allocation5 + $0x1b8] sm:$0xff]
    %v613 = vld [vmem:[#allocation5 + $0x1c0] sm:$0xff]
    %v614 = vld [vmem:[#allocation5 + $0x1c8] sm:$0xff]
    %v615 = vld [vmem:[#allocation5 + $0x1d0] sm:$0xff]
    %v616 = vld [vmem:[#allocation5 + $0x1d8] sm:$0xff]
    %v617 = vld [vmem:[#allocation5 + $0x1e0] sm:$0xff]
    %v618 = vld [vmem:[#allocation5 + $0x1e8] sm:$0xff]
    %v619 = vld [vmem:[#allocation5 + $0x1f0] sm:$0xff]
    %v620 = vld [vmem:[#allocation5 + $0x1f8] sm:$0xff]
    %s621 = scalar_lea.vmem [#allocation5], 512
    %v622 = vld [vmem:[%s621] sm:$0xff]
    %v623 = vld [vmem:[%s621 + $0x8] sm:$0xff]
    %v624 = vld [vmem:[%s621 + $0x10] sm:$0xff]
    %v625 = vld [vmem:[%s621 + $0x18] sm:$0xff]
    %v626 = vld [vmem:[%s621 + $0x20] sm:$0xff]
    %v627 = vld [vmem:[%s621 + $0x28] sm:$0xff]
    %v628 = vld [vmem:[%s621 + $0x30] sm:$0xff]
    %v629 = vld [vmem:[%s621 + $0x38] sm:$0xff]
    %v630 = vld [vmem:[%s621 + $0x40] sm:$0xff]
    %v631 = vld [vmem:[%s621 + $0x48] sm:$0xff]
    %v632 = vld [vmem:[%s621 + $0x50] sm:$0xff]
    %v633 = vld [vmem:[%s621 + $0x58] sm:$0xff]
    %v634 = vld [vmem:[%s621 + $0x60] sm:$0xff]
    %v635 = vld [vmem:[%s621 + $0x68] sm:$0xff]
    %v636 = vld [vmem:[%s621 + $0x70] sm:$0xff]
    %v637 = vld [vmem:[%s621 + $0x78] sm:$0xff]
    %v638 = vld [vmem:[%s621 + $0x80] sm:$0xff]
    %v639 = vld [vmem:[%s621 + $0x88] sm:$0xff]
    %v640 = vld [vmem:[%s621 + $0x90] sm:$0xff]
    %v641 = vld [vmem:[%s621 + $0x98] sm:$0xff]
    %v642 = vld [vmem:[%s621 + $0xa0] sm:$0xff]
    %v643 = vld [vmem:[%s621 + $0xa8] sm:$0xff]
    %v644 = vld [vmem:[%s621 + $0xb0] sm:$0xff]
    %v645 = vld [vmem:[%s621 + $0xb8] sm:$0xff]
    %v646 = vld [vmem:[%s621 + $0xc0] sm:$0xff]
    %v647 = vld [vmem:[%s621 + $0xc8] sm:$0xff]
    %v648 = vld [vmem:[%s621 + $0xd0] sm:$0xff]
    %v649 = vld [vmem:[%s621 + $0xd8] sm:$0xff]
    %v650 = vld [vmem:[%s621 + $0xe0] sm:$0xff]
    %v651 = vld [vmem:[%s621 + $0xe8] sm:$0xff]
    %v652 = vld [vmem:[%s621 + $0xf0] sm:$0xff]
    %v653 = vld [vmem:[%s621 + $0xf8] sm:$0xff]
    %v654 = vld [vmem:[%s621 + $0x100] sm:$0xff]
    %v655 = vld [vmem:[%s621 + $0x108] sm:$0xff]
    %v656 = vld [vmem:[%s621 + $0x110] sm:$0xff]
    %v657 = vld [vmem:[%s621 + $0x118] sm:$0xff]
    %v658 = vld [vmem:[%s621 + $0x120] sm:$0xff]
    %v659 = vld [vmem:[%s621 + $0x128] sm:$0xff]
    %v660 = vld [vmem:[%s621 + $0x130] sm:$0xff]
    %v661 = vld [vmem:[%s621 + $0x138] sm:$0xff]
    %v662 = vld [vmem:[%s621 + $0x140] sm:$0xff]
    %v663 = vld [vmem:[%s621 + $0x148] sm:$0xff]
    %v664 = vld [vmem:[%s621 + $0x150] sm:$0xff]
    %v665 = vld [vmem:[%s621 + $0x158] sm:$0xff]
    %v666 = vld [vmem:[%s621 + $0x160] sm:$0xff]
    %v667 = vld [vmem:[%s621 + $0x168] sm:$0xff]
    %v668 = vld [vmem:[%s621 + $0x170] sm:$0xff]
    %v669 = vld [vmem:[%s621 + $0x178] sm:$0xff]
    %v670 = vld [vmem:[%s621 + $0x180] sm:$0xff]
    %v671 = vld [vmem:[%s621 + $0x188] sm:$0xff]
    %v672 = vld [vmem:[%s621 + $0x190] sm:$0xff]
    %v673 = vld [vmem:[%s621 + $0x198] sm:$0xff]
    %v674 = vld [vmem:[%s621 + $0x1a0] sm:$0xff]
    %v675 = vld [vmem:[%s621 + $0x1a8] sm:$0xff]
    %v676 = vld [vmem:[%s621 + $0x1b0] sm:$0xff]
    %v677 = vld [vmem:[%s621 + $0x1b8] sm:$0xff]
    %v678 = vld [vmem:[%s621 + $0x1c0] sm:$0xff]
    %v679 = vld [vmem:[%s621 + $0x1c8] sm:$0xff]
    %v680 = vld [vmem:[%s621 + $0x1d0] sm:$0xff]
    %v681 = vld [vmem:[%s621 + $0x1d8] sm:$0xff]
    %v682 = vld [vmem:[%s621 + $0x1e0] sm:$0xff]
    %v683 = vld [vmem:[%s621 + $0x1e8] sm:$0xff]
    %v684 = vld [vmem:[%s621 + $0x1f0] sm:$0xff]
    %v685 = vld [vmem:[%s621 + $0x1f8] sm:$0xff]
    %v686 = vld [vmem:[%s6] sm:$0x1]
    %s687 = scalar_lea.vmem %s6, 1
    %v688 = vld [vmem:[%s687] sm:$0x1]
    %v689 = vld [vmem:[#allocation2] sm:$0x3]
    %v690 = vld [vmem:[#allocation2 + $0x8] sm:$0x3]
    %v691 = vld [vmem:[#allocation2 + $0x10] sm:$0x3]
    %v692 = vld [vmem:[#allocation2 + $0x18] sm:$0x3]
    %693 = vmatprep.subr.mxu0 %v558
    %694 = vmatpush1.msra.mxu0 %v557
    %695 = vmatprep.subr.mxu0 %v562
    %696 = vmatpush1.msra.mxu0 %v561
    %697 = vmatprep.subr.mxu0 %v566
    %698 = vmatpush1.msra.mxu0 %v565
    %699 = vmatprep.subr.mxu0 %v570
    %700 = vmatpush1.msra.mxu0 %v569
    %701 = vmatprep.subr.mxu0 %v574
    %702 = vmatpush1.msra.mxu0 %v573
    %703 = vmatprep.subr.mxu0 %v578
    %704 = vmatpush1.msra.mxu0 %v577
    %705 = vmatprep.subr.mxu0 %v582
    %706 = vmatpush1.msra.mxu0 %v581
    %707 = vmatprep.subr.mxu0 %v586
    %708 = vmatpush1.msra.mxu0 %v585
    %709 = vmatprep.subr.mxu0 %v590
    %710 = vmatpush1.msra.mxu0 %v589
    %711 = vmatprep.subr.mxu0 %v594
    %712 = vmatpush1.msra.mxu0 %v593
    %713 = vmatprep.subr.mxu0 %v598
    %714 = vmatpush1.msra.mxu0 %v597
    %715 = vmatprep.subr.mxu0 %v602
    %716 = vmatpush1.msra.mxu0 %v601
    %717 = vmatprep.subr.mxu0 %v606
    %718 = vmatpush1.msra.mxu0 %v605
    %719 = vmatprep.subr.mxu0 %v610
    %720 = vmatpush1.msra.mxu0 %v609
    %721 = vmatprep.subr.mxu0 %v614
    %722 = vmatpush1.msra.mxu0 %v613
    %723 = vmatprep.subr.mxu0 %v618
    %724 = vmatpush1.msra.mxu0 %v617
    %725 = vmatprep.subr.mxu0 0.0
    %726 = vmatpush1.msra.mxu0 0.0
    %727 = vmatprep.subr.mxu0 0.0
    %728 = vmatpush1.msra.mxu0 0.0
    %729 = vmatprep.subr.mxu0 0.0
    %730 = vmatpush1.msra.mxu0 0.0
    %731 = vmatprep.subr.mxu0 0.0
    %732 = vmatpush1.msra.mxu0 0.0
    %733 = vmatprep.subr.mxu0 0.0
    %734 = vmatpush1.msra.mxu0 0.0
    %735 = vmatprep.subr.mxu0 0.0
    %736 = vmatpush1.msra.mxu0 0.0
    %737 = vmatprep.subr.mxu0 0.0
    %738 = vmatpush1.msra.mxu0 0.0
    %739 = vmatprep.subr.mxu0 0.0
    %740 = vmatpush1.msra.mxu0 0.0
    %741 = vmatprep.subr.mxu0 0.0
    %742 = vmatpush1.msra.mxu0 0.0
    %743 = vmatprep.subr.mxu0 0.0
    %744 = vmatpush1.msra.mxu0 0.0
    %745 = vmatprep.subr.mxu0 0.0
    %746 = vmatpush1.msra.mxu0 0.0
    %747 = vmatprep.subr.mxu0 0.0
    %748 = vmatpush1.msra.mxu0 0.0
    %749 = vmatprep.subr.mxu0 0.0
    %750 = vmatpush1.msra.mxu0 0.0
    %751 = vmatprep.subr.mxu0 0.0
    %752 = vmatpush1.msra.mxu0 0.0
    %753 = vmatprep.subr.mxu0 0.0
    %754 = vmatpush1.msra.mxu0 0.0
    %755 = vmatprep.subr.mxu0 0.0
    %756 = vmatpush1.msra.mxu0 0.0
    %757 = vmatprep.mubr.f32.mxu0 0.0
    %758 = vmatmul.mubr.f32.gmra.mrb[0].mxu0 0.0
    %v759 = vpop.f32.mrb[0].mxu0
    %v760 = vadd.f32 0.0, %v759
    %v761 = vpop.f32.mrb[0].mxu0
    %v762 = vadd.f32 0.0, %v761
    %763 = vdwg.mxu0
    %764 = vmatprep.subr.mxu0 %v560
    %765 = vmatpush1.msra.mxu0 %v559
    %766 = vmatprep.subr.mxu0 %v564
    %767 = vmatpush1.msra.mxu0 %v563
    %768 = vmatprep.subr.mxu0 %v568
    %769 = vmatpush1.msra.mxu0 %v567
    %770 = vmatprep.subr.mxu0 %v572
    %771 = vmatpush1.msra.mxu0 %v571
    %772 = vmatprep.subr.mxu0 %v576
    %773 = vmatpush1.msra.mxu0 %v575
    %774 = vmatprep.subr.mxu0 %v580
    %775 = vmatpush1.msra.mxu0 %v579
    %776 = vmatprep.subr.mxu0 %v584
    %777 = vmatpush1.msra.mxu0 %v583
    %778 = vmatprep.subr.mxu0 %v588
    %779 = vmatpush1.msra.mxu0 %v587
    %780 = vmatprep.subr.mxu0 %v592
    %781 = vmatpush1.msra.mxu0 %v591
    %782 = vmatprep.subr.mxu0 %v596
    %783 = vmatpush1.msra.mxu0 %v595
    %784 = vmatprep.subr.mxu0 %v600
    %785 = vmatpush1.msra.mxu0 %v599
    %786 = vmatprep.subr.mxu0 %v604
    %787 = vmatpush1.msra.mxu0 %v603
    %788 = vmatprep.subr.mxu0 %v608
    %789 = vmatpush1.msra.mxu0 %v607
    %790 = vmatprep.subr.mxu0 %v612
    %791 = vmatpush1.msra.mxu0 %v611
    %792 = vmatprep.subr.mxu0 %v616
    %793 = vmatpush1.msra.mxu0 %v615
    %794 = vmatprep.subr.mxu0 %v620
    %795 = vmatpush1.msra.mxu0 %v619
    %796 = vmatprep.subr.mxu0 0.0
    %797 = vmatpush1.msra.mxu0 0.0
    %798 = vmatprep.subr.mxu0 0.0
    %799 = vmatpush1.msra.mxu0 0.0
    %800 = vmatprep.subr.mxu0 0.0
    %801 = vmatpush1.msra.mxu0 0.0
    %802 = vmatprep.subr.mxu0 0.0
    %803 = vmatpush1.msra.mxu0 0.0
    %804 = vmatprep.subr.mxu0 0.0
    %805 = vmatpush1.msra.mxu0 0.0
    %806 = vmatprep.subr.mxu0 0.0
    %807 = vmatpush1.msra.mxu0 0.0
    %808 = vmatprep.subr.mxu0 0.0
    %809 = vmatpush1.msra.mxu0 0.0
    %810 = vmatprep.subr.mxu0 0.0
    %811 = vmatpush1.msra.mxu0 0.0
    %812 = vmatprep.subr.mxu0 0.0
    %813 = vmatpush1.msra.mxu0 0.0
    %814 = vmatprep.subr.mxu0 0.0
    %815 = vmatpush1.msra.mxu0 0.0
    %816 = vmatprep.subr.mxu0 0.0
    %817 = vmatpush1.msra.mxu0 0.0
    %818 = vmatprep.subr.mxu0 0.0
    %819 = vmatpush1.msra.mxu0 0.0
    %820 = vmatprep.subr.mxu0 0.0
    %821 = vmatpush1.msra.mxu0 0.0
    %822 = vmatprep.subr.mxu0 0.0
    %823 = vmatpush1.msra.mxu0 0.0
    %824 = vmatprep.subr.mxu0 0.0
    %825 = vmatpush1.msra.mxu0 0.0
    %826 = vmatprep.subr.mxu0 0.0
    %827 = vmatpush1.msra.mxu0 0.0
    %828 = vmatprep.mubr.f32.mxu0 0.0
    %829 = vmatmul.mubr.f32.gmra.mrb[0].mxu0 0.0
    %v830 = vpop.f32.mrb[0].mxu0
    %v831 = vadd.f32 0.0, %v830
    %v832 = vpop.f32.mrb[0].mxu0
    %v833 = vadd.f32 0.0, %v832
    %834 = vdwg.mxu0
    %v835 = vadd.f32 %v689, %v760
    %v836 = vadd.f32 %v690, %v762
    %v837 = vadd.f32 %v691, %v831
    %v838 = vadd.f32 %v692, %v833
    %v839 = vxor.u32 %v835, 2147483648
    %v840 = vmul.f32 %v839, 1.442695
    %v841 = vpow.pop %v840
    %v842 = vadd.f32 %v841, 1.0
    %v843 = vrcp.pop %v842
    %v844 = vmul.f32 1.0, %v843
    %v845 = vxor.u32 %v836, 2147483648
    %v846 = vmul.f32 %v845, 1.442695
    %v847 = vpow.pop %v846
    %v848 = vadd.f32 %v847, 1.0
    %v849 = vrcp.pop %v848
    %v850 = vmul.f32 1.0, %v849
    %v851 = vtanh.pop %v837
    %v852 = vxor.u32 %v838, 2147483648
    %v853 = vmul.f32 %v852, 1.442695
    %v854 = vpow.pop %v853
    %v855 = vadd.f32 %v854, 1.0
    %v856 = vrcp.pop %v855
    %v857 = vmul.f32 1.0, %v856
    %v858 = vmul.f32 %v850, 0.0
    %v859 = vmul.f32 %v844, %v851
    %v860 = vadd.f32 %v858, %v859
    %v861 = vtanh.pop %v860
    %v862 = vmul.f32 %v857, %v861
    %v864 = vlaneseq
    %v865 = vshrl.u32 %v864, 7
    %v866 = vsub.s32 0, %v865
    %v867 = vrot.slane %v686, %v866
    %v869 = vmul.f32 %v862, %v867
    %vm870 = vcmask 1041408
    %v871 = vsel %vm870, %v869, 0.0
    %872 = vadd.xlane.f32.xlu0 %v871
    %v873 = vpop.xlane.xlu0 %872
    %vm874 = vcmask 1024
    %875 = vst.msk [vmem:[%s7] sm:$0x3] %vm874, %v873
    %v876 = vld [vmem:[#allocation2 + $0x60] sm:$0xc0]
    %v877 = vld [vmem:[#allocation2 + $0x68] sm:$0xc0]
    %v878 = vld [vmem:[#allocation2 + $0x70] sm:$0xc0]
    %v879 = vld [vmem:[#allocation2 + $0x78] sm:$0xc0]
    %880 = vmatprep.subr.mxu0 %v623
    %881 = vmatpush1.msra.mxu0 %v622
    %882 = vmatprep.subr.mxu0 %v627
    %883 = vmatpush1.msra.mxu0 %v626
    %884 = vmatprep.subr.mxu0 %v631
    %885 = vmatpush1.msra.mxu0 %v630
    %886 = vmatprep.subr.mxu0 %v635
    %887 = vmatpush1.msra.mxu0 %v634
    %888 = vmatprep.subr.mxu0 %v639
    %889 = vmatpush1.msra.mxu0 %v638
    %890 = vmatprep.subr.mxu0 %v643
    %891 = vmatpush1.msra.mxu0 %v642
    %892 = vmatprep.subr.mxu0 %v647
    %893 = vmatpush1.msra.mxu0 %v646
    %894 = vmatprep.subr.mxu0 %v651
    %895 = vmatpush1.msra.mxu0 %v650
    %896 = vmatprep.subr.mxu0 %v655
    %897 = vmatpush1.msra.mxu0 %v654
    %898 = vmatprep.subr.mxu0 %v659
    %899 = vmatpush1.msra.mxu0 %v658
    %900 = vmatprep.subr.mxu0 %v663
    %901 = vmatpush1.msra.mxu0 %v662
    %902 = vmatprep.subr.mxu0 %v667
    %903 = vmatpush1.msra.mxu0 %v666
    %904 = vmatprep.subr.mxu0 %v671
    %905 = vmatpush1.msra.mxu0 %v670
    %906 = vmatprep.subr.mxu0 %v675
    %907 = vmatpush1.msra.mxu0 %v674
    %908 = vmatprep.subr.mxu0 %v679
    %909 = vmatpush1.msra.mxu0 %v678
    %910 = vmatprep.subr.mxu0 %v683
    %911 = vmatpush1.msra.mxu0 %v682
    %912 = vmatprep.subr.mxu0 0.0
    %913 = vmatpush1.msra.mxu0 0.0
    %914 = vmatprep.subr.mxu0 0.0
    %915 = vmatpush1.msra.mxu0 0.0
    %916 = vmatprep.subr.mxu0 0.0
    %917 = vmatpush1.msra.mxu0 0.0
    %918 = vmatprep.subr.mxu0 0.0
    %919 = vmatpush1.msra.mxu0 0.0
    %920 = vmatprep.subr.mxu0 0.0
    %921 = vmatpush1.msra.mxu0 0.0
    %922 = vmatprep.subr.mxu0 0.0
    %923 = vmatpush1.msra.mxu0 0.0
    %924 = vmatprep.subr.mxu0 0.0
    %925 = vmatpush1.msra.mxu0 0.0
    %926 = vmatprep.subr.mxu0 0.0
    %927 = vmatpush1.msra.mxu0 0.0
    %928 = vmatprep.subr.mxu0 0.0
    %929 = vmatpush1.msra.mxu0 0.0
    %930 = vmatprep.subr.mxu0 0.0
    %931 = vmatpush1.msra.mxu0 0.0
    %932 = vmatprep.subr.mxu0 0.0
    %933 = vmatpush1.msra.mxu0 0.0
    %934 = vmatprep.subr.mxu0 0.0
    %935 = vmatpush1.msra.mxu0 0.0
    %936 = vmatprep.subr.mxu0 0.0
    %937 = vmatpush1.msra.mxu0 0.0
    %938 = vmatprep.subr.mxu0 0.0
    %939 = vmatpush1.msra.mxu0 0.0
    %940 = vmatprep.subr.mxu0 0.0
    %941 = vmatpush1.msra.mxu0 0.0
    %942 = vmatprep.subr.mxu0 0.0
    %943 = vmatpush1.msra.mxu0 0.0
    %944 = vmatprep.mubr.f32.mxu0 0.0
    %945 = vmatmul.mubr.f32.gmra.mrb[0].mxu0 0.0
    %v946 = vpop.f32.mrb[0].mxu0
    %v947 = vadd.f32 0.0, %v946
    %v948 = vpop.f32.mrb[0].mxu0
    %v949 = vadd.f32 0.0, %v948
    %950 = vdwg.mxu0
    %951 = vmatprep.subr.mxu0 %v625
    %952 = vmatpush1.msra.mxu0 %v624
    %953 = vmatprep.subr.mxu0 %v629
    %954 = vmatpush1.msra.mxu0 %v628
    %955 = vmatprep.subr.mxu0 %v633
    %956 = vmatpush1.msra.mxu0 %v632
    %957 = vmatprep.subr.mxu0 %v637
    %958 = vmatpush1.msra.mxu0 %v636
    %959 = vmatprep.subr.mxu0 %v641
    %960 = vmatpush1.msra.mxu0 %v640
    %961 = vmatprep.subr.mxu0 %v645
    %962 = vmatpush1.msra.mxu0 %v644
    %963 = vmatprep.subr.mxu0 %v649
    %964 = vmatpush1.msra.mxu0 %v648
    %965 = vmatprep.subr.mxu0 %v653
    %966 = vmatpush1.msra.mxu0 %v652
    %967 = vmatprep.subr.mxu0 %v657
    %968 = vmatpush1.msra.mxu0 %v656
    %969 = vmatprep.subr.mxu0 %v661
    %970 = vmatpush1.msra.mxu0 %v660
    %971 = vmatprep.subr.mxu0 %v665
    %972 = vmatpush1.msra.mxu0 %v664
    %973 = vmatprep.subr.mxu0 %v669
    %974 = vmatpush1.msra.mxu0 %v668
    %975 = vmatprep.subr.mxu0 %v673
    %976 = vmatpush1.msra.mxu0 %v672
    %977 = vmatprep.subr.mxu0 %v677
    %978 = vmatpush1.msra.mxu0 %v676
    %979 = vmatprep.subr.mxu0 %v681
    %980 = vmatpush1.msra.mxu0 %v680
    %981 = vmatprep.subr.mxu0 %v685
    %982 = vmatpush1.msra.mxu0 %v684
    %983 = vmatprep.subr.mxu0 0.0
    %984 = vmatpush1.msra.mxu0 0.0
    %985 = vmatprep.subr.mxu0 0.0
    %986 = vmatpush1.msra.mxu0 0.0
    %987 = vmatprep.subr.mxu0 0.0
    %988 = vmatpush1.msra.mxu0 0.0
    %989 = vmatprep.subr.mxu0 0.0
    %990 = vmatpush1.msra.mxu0 0.0
    %991 = vmatprep.subr.mxu0 0.0
    %992 = vmatpush1.msra.mxu0 0.0
    %993 = vmatprep.subr.mxu0 0.0
    %994 = vmatpush1.msra.mxu0 0.0
    %995 = vmatprep.subr.mxu0 0.0
    %996 = vmatpush1.msra.mxu0 0.0
    %997 = vmatprep.subr.mxu0 0.0
    %998 = vmatpush1.msra.mxu0 0.0
    %999 = vmatprep.subr.mxu0 0.0
    %1000 = vmatpush1.msra.mxu0 0.0
    %1001 = vmatprep.subr.mxu0 0.0
    %1002 = vmatpush1.msra.mxu0 0.0
    %1003 = vmatprep.subr.mxu0 0.0
    %1004 = vmatpush1.msra.mxu0 0.0
    %1005 = vmatprep.subr.mxu0 0.0
    %1006 = vmatpush1.msra.mxu0 0.0
    %1007 = vmatprep.subr.mxu0 0.0
    %1008 = vmatpush1.msra.mxu0 0.0
    %1009 = vmatprep.subr.mxu0 0.0
    %1010 = vmatpush1.msra.mxu0 0.0
    %1011 = vmatprep.subr.mxu0 0.0
    %1012 = vmatpush1.msra.mxu0 0.0
    %1013 = vmatprep.subr.mxu0 0.0
    %1014 = vmatpush1.msra.mxu0 0.0
    %1015 = vmatprep.mubr.f32.mxu0 0.0
    %1016 = vmatmul.mubr.f32.gmra.mrb[0].mxu0 0.0
    %v1017 = vpop.f32.mrb[0].mxu0
    %v1018 = vadd.f32 0.0, %v1017
    %v1019 = vpop.f32.mrb[0].mxu0
    %v1020 = vadd.f32 0.0, %v1019
    %1021 = vdwg.mxu0
    %v1026 = vrot.slane %v947, 2
    %v1027 = vrot.slane %v949, 2
    %v1028 = vrot.slane %v1018, 2
    %v1029 = vrot.slane %v1020, 2
    %v1034 = vadd.f32 %v876, %v1026
    %v1035 = vadd.f32 %v877, %v1027
    %v1036 = vadd.f32 %v878, %v1028
    %v1037 = vadd.f32 %v879, %v1029
    %v1038 = vxor.u32 %v1034, 2147483648
    %v1039 = vmul.f32 %v1038, 1.442695
    %v1040 = vpow.pop %v1039
    %v1041 = vadd.f32 %v1040, 1.0
    %v1042 = vrcp.pop %v1041
    %v1043 = vmul.f32 1.0, %v1042
    %v1044 = vxor.u32 %v1035, 2147483648
    %v1045 = vmul.f32 %v1044, 1.442695
    %v1046 = vpow.pop %v1045
    %v1047 = vadd.f32 %v1046, 1.0
    %v1048 = vrcp.pop %v1047
    %v1049 = vmul.f32 1.0, %v1048
    %v1050 = vtanh.pop %v1036
    %v1051 = vxor.u32 %v1037, 2147483648
    %v1052 = vmul.f32 %v1051, 1.442695
    %v1053 = vpow.pop %v1052
    %v1054 = vadd.f32 %v1053, 1.0
    %v1055 = vrcp.pop %v1054
    %v1056 = vmul.f32 1.0, %v1055
    %v1057 = vmul.f32 %v1049, 0.0
    %v1058 = vmul.f32 %v1043, %v1050
    %v1059 = vadd.f32 %v1057, %v1058
    %v1060 = vtanh.pop %v1059
    %v1061 = vmul.f32 %v1056, %v1060
    %v1063 = vlaneseq
    %v1064 = vshrl.u32 %v1063, 7
    %v1065 = vsub.s32 0, %v1064
    %v1066 = vrot.slane %v688, %v1065
    %v1068 = vmul.f32 %v1061, %v1066
    %vm1069 = vcmask 1047558
    %v1070 = vsel %vm1069, %v1068, 0.0
    %1071 = vadd.xlane.f32.xlu0 %v1070
    %v1072 = vpop.xlane.xlu0 %1071
    %vm1073 = vcmask 64574
    %1074 = vst.msk [vmem:[%s8 - $0x6] sm:$0xc0] %vm1073, %v1072
    %v1075 = vld [vmem:[#allocation2] sm:$0xc]
    %v1076 = vld [vmem:[#allocation2 + $0x8] sm:$0xc]
    %v1077 = vld [vmem:[#allocation2 + $0x10] sm:$0xc]
    %v1078 = vld [vmem:[#allocation2 + $0x18] sm:$0xc]
    %1079 = vmatprep.subr.mxu0 %v558
    %1080 = vmatpush1.msra.mxu0 %v557
    %1081 = vmatprep.subr.mxu0 %v562
    %1082 = vmatpush1.msra.mxu0 %v561
    %1083 = vmatprep.subr.mxu0 %v566
    %1084 = vmatpush1.msra.mxu0 %v565
    %1085 = vmatprep.subr.mxu0 %v570
    %1086 = vmatpush1.msra.mxu0 %v569
    %1087 = vmatprep.subr.mxu0 %v574
    %1088 = vmatpush1.msra.mxu0 %v573
    %1089 = vmatprep.subr.mxu0 %v578
    %1090 = vmatpush1.msra.mxu0 %v577
    %1091 = vmatprep.subr.mxu0 %v582
    %1092 = vmatpush1.msra.mxu0 %v581
    %1093 = vmatprep.subr.mxu0 %v586
    %1094 = vmatpush1.msra.mxu0 %v585
    %1095 = vmatprep.subr.mxu0 %v590
    %1096 = vmatpush1.msra.mxu0 %v589
    %1097 = vmatprep.subr.mxu0 %v594
    %1098 = vmatpush1.msra.mxu0 %v593
    %1099 = vmatprep.subr.mxu0 %v598
    %1100 = vmatpush1.msra.mxu0 %v597
    %1101 = vmatprep.subr.mxu0 %v602
    %1102 = vmatpush1.msra.mxu0 %v601
    %1103 = vmatprep.subr.mxu0 %v606
    %1104 = vmatpush1.msra.mxu0 %v605
    %1105 = vmatprep.subr.mxu0 %v610
    %1106 = vmatpush1.msra.mxu0 %v609
    %1107 = vmatprep.subr.mxu0 %v614
    %1108 = vmatpush1.msra.mxu0 %v613
    %1109 = vmatprep.subr.mxu0 %v618
    %1110 = vmatpush1.msra.mxu0 %v617
    %1111 = vmatprep.subr.mxu0 0.0
    %1112 = vmatpush1.msra.mxu0 0.0
    %1113 = vmatprep.subr.mxu0 0.0
    %1114 = vmatpush1.msra.mxu0 0.0
    %1115 = vmatprep.subr.mxu0 0.0
    %1116 = vmatpush1.msra.mxu0 0.0
    %1117 = vmatprep.subr.mxu0 0.0
    %1118 = vmatpush1.msra.mxu0 0.0
    %1119 = vmatprep.subr.mxu0 0.0
    %1120 = vmatpush1.msra.mxu0 0.0
    %1121 = vmatprep.subr.mxu0 0.0
    %1122 = vmatpush1.msra.mxu0 0.0
    %1123 = vmatprep.subr.mxu0 0.0
    %1124 = vmatpush1.msra.mxu0 0.0
    %1125 = vmatprep.subr.mxu0 0.0
    %1126 = vmatpush1.msra.mxu0 0.0
    %1127 = vmatprep.subr.mxu0 0.0
    %1128 = vmatpush1.msra.mxu0 0.0
    %1129 = vmatprep.subr.mxu0 0.0
    %1130 = vmatpush1.msra.mxu0 0.0
    %1131 = vmatprep.subr.mxu0 0.0
    %1132 = vmatpush1.msra.mxu0 0.0
    %1133 = vmatprep.subr.mxu0 0.0
    %1134 = vmatpush1.msra.mxu0 0.0
    %1135 = vmatprep.subr.mxu0 0.0
    %1136 = vmatpush1.msra.mxu0 0.0
    %1137 = vmatprep.subr.mxu0 0.0
    %1138 = vmatpush1.msra.mxu0 0.0
    %1139 = vmatprep.subr.mxu0 0.0
    %1140 = vmatpush1.msra.mxu0 0.0
    %1141 = vmatprep.subr.mxu0 0.0
    %1142 = vmatpush1.msra.mxu0 0.0
    %1143 = vmatprep.mubr.f32.mxu0 0.0
    %1144 = vmatmul.mubr.f32.gmra.mrb[0].mxu0 %v862
    %v1145 = vpop.f32.mrb[0].mxu0
    %v1146 = vadd.f32 0.0, %v1145
    %v1147 = vpop.f32.mrb[0].mxu0
    %v1148 = vadd.f32 0.0, %v1147
    %1149 = vdwg.mxu0
    %1150 = vmatprep.subr.mxu0 %v560
    %1151 = vmatpush1.msra.mxu0 %v559
    %1152 = vmatprep.subr.mxu0 %v564
    %1153 = vmatpush1.msra.mxu0 %v563
    %1154 = vmatprep.subr.mxu0 %v568
    %1155 = vmatpush1.msra.mxu0 %v567
    %1156 = vmatprep.subr.mxu0 %v572
    %1157 = vmatpush1.msra.mxu0 %v571
    %1158 = vmatprep.subr.mxu0 %v576
    %1159 = vmatpush1.msra.mxu0 %v575
    %1160 = vmatprep.subr.mxu0 %v580
    %1161 = vmatpush1.msra.mxu0 %v579
    %1162 = vmatprep.subr.mxu0 %v584
    %1163 = vmatpush1.msra.mxu0 %v583
    %1164 = vmatprep.subr.mxu0 %v588
    %1165 = vmatpush1.msra.mxu0 %v587
    %1166 = vmatprep.subr.mxu0 %v592
    %1167 = vmatpush1.msra.mxu0 %v591
    %1168 = vmatprep.subr.mxu0 %v596
    %1169 = vmatpush1.msra.mxu0 %v595
    %1170 = vmatprep.subr.mxu0 %v600
    %1171 = vmatpush1.msra.mxu0 %v599
    %1172 = vmatprep.subr.mxu0 %v604
    %1173 = vmatpush1.msra.mxu0 %v603
    %1174 = vmatprep.subr.mxu0 %v608
    %1175 = vmatpush1.msra.mxu0 %v607
    %1176 = vmatprep.subr.mxu0 %v612
    %1177 = vmatpush1.msra.mxu0 %v611
    %1178 = vmatprep.subr.mxu0 %v616
    %1179 = vmatpush1.msra.mxu0 %v615
    %1180 = vmatprep.subr.mxu0 %v620
    %1181 = vmatpush1.msra.mxu0 %v619
    %1182 = vmatprep.subr.mxu0 0.0
    %1183 = vmatpush1.msra.mxu0 0.0
    %1184 = vmatprep.subr.mxu0 0.0
    %1185 = vmatpush1.msra.mxu0 0.0
    %1186 = vmatprep.subr.mxu0 0.0
    %1187 = vmatpush1.msra.mxu0 0.0
    %1188 = vmatprep.subr.mxu0 0.0
    %1189 = vmatpush1.msra.mxu0 0.0
    %1190 = vmatprep.subr.mxu0 0.0
    %1191 = vmatpush1.msra.mxu0 0.0
    %1192 = vmatprep.subr.mxu0 0.0
    %1193 = vmatpush1.msra.mxu0 0.0
    %1194 = vmatprep.subr.mxu0 0.0
    %1195 = vmatpush1.msra.mxu0 0.0
    %1196 = vmatprep.subr.mxu0 0.0
    %1197 = vmatpush1.msra.mxu0 0.0
    %1198 = vmatprep.subr.mxu0 0.0
    %1199 = vmatpush1.msra.mxu0 0.0
    %1200 = vmatprep.subr.mxu0 0.0
    %1201 = vmatpush1.msra.mxu0 0.0
    %1202 = vmatprep.subr.mxu0 0.0
    %1203 = vmatpush1.msra.mxu0 0.0
    %1204 = vmatprep.subr.mxu0 0.0
    %1205 = vmatpush1.msra.mxu0 0.0
    %1206 = vmatprep.subr.mxu0 0.0
    %1207 = vmatpush1.msra.mxu0 0.0
    %1208 = vmatprep.subr.mxu0 0.0
    %1209 = vmatpush1.msra.mxu0 0.0
    %1210 = vmatprep.subr.mxu0 0.0
    %1211 = vmatpush1.msra.mxu0 0.0
    %1212 = vmatprep.subr.mxu0 0.0
    %1213 = vmatpush1.msra.mxu0 0.0
    %1214 = vmatprep.mubr.f32.mxu0 0.0
    %1215 = vmatmul.mubr.f32.gmra.mrb[0].mxu0 %v862
    %v1216 = vpop.f32.mrb[0].mxu0
    %v1217 = vadd.f32 0.0, %v1216
    %v1218 = vpop.f32.mrb[0].mxu0
    %v1219 = vadd.f32 0.0, %v1218
    %1220 = vdwg.mxu0
    %v1225 = vrot.slane %v1146, 6
    %v1226 = vrot.slane %v1148, 6
    %v1227 = vrot.slane %v1217, 6
    %v1228 = vrot.slane %v1219, 6
    %v1233 = vadd.f32 %v1075, %v1225
    %v1234 = vadd.f32 %v1076, %v1226
    %v1235 = vadd.f32 %v1077, %v1227
    %v1236 = vadd.f32 %v1078, %v1228
    %v1237 = vxor.u32 %v1233, 2147483648
    %v1238 = vmul.f32 %v1237, 1.442695
    %v1239 = vpow.pop %v1238
    %v1240 = vadd.f32 %v1239, 1.0
    %v1241 = vrcp.pop %v1240
    %v1242 = vmul.f32 1.0, %v1241
    %v1243 = vxor.u32 %v1234, 2147483648
    %v1244 = vmul.f32 %v1243, 1.442695
    %v1245 = vpow.pop %v1244
    %v1246 = vadd.f32 %v1245, 1.0
    %v1247 = vrcp.pop %v1246
    %v1248 = vmul.f32 1.0, %v1247
    %v1249 = vtanh.pop %v1235
    %v1250 = vxor.u32 %v1236, 2147483648
    %v1251 = vmul.f32 %v1250, 1.442695
    %v1252 = vpow.pop %v1251
    %v1253 = vadd.f32 %v1252, 1.0
    %v1254 = vrcp.pop %v1253
    %v1255 = vmul.f32 1.0, %v1254
    %v1257 = vrot.slane %v860, 6
    %v1259 = vmul.f32 %v1248, %v1257
    %v1260 = vmul.f32 %v1242, %v1249
    %v1261 = vadd.f32 %v1259, %v1260
    %v1262 = vtanh.pop %v1261
    %v1263 = vmul.f32 %v1255, %v1262
    %v1264 = vmul.f32 %v1263, %v867
    %vm1265 = vcmask 1043458
    %v1266 = vsel %vm1265, %v1264, 0.0
    %1267 = vadd.xlane.f32.xlu0 %v1266
    %v1268 = vpop.xlane.xlu0 %1267
    %vm1269 = vcmask 11274
    %1270 = vst.msk [vmem:[%s7 - $0x2] sm:$0xc] %vm1269, %v1268
    %v1271 = vld [vmem:[#allocation2 + $0x60] sm:$0x30]
    %v1272 = vld [vmem:[#allocation2 + $0x68] sm:$0x30]
    %v1273 = vld [vmem:[#allocation2 + $0x70] sm:$0x30]
    %v1274 = vld [vmem:[#allocation2 + $0x78] sm:$0x30]
    %v1276 = vrot.slane %v1061, 6
    %1278 = vmatprep.subr.mxu0 %v623
    %1279 = vmatpush1.msra.mxu0 %v622
    %1280 = vmatprep.subr.mxu0 %v627
    %1281 = vmatpush1.msra.mxu0 %v626
    %1282 = vmatprep.subr.mxu0 %v631
    %1283 = vmatpush1.msra.mxu0 %v630
    %1284 = vmatprep.subr.mxu0 %v635
    %1285 = vmatpush1.msra.mxu0 %v634
    %1286 = vmatprep.subr.mxu0 %v639
    %1287 = vmatpush1.msra.mxu0 %v638
    %1288 = vmatprep.subr.mxu0 %v643
    %1289 = vmatpush1.msra.mxu0 %v642
    %1290 = vmatprep.subr.mxu0 %v647
    %1291 = vmatpush1.msra.mxu0 %v646
    %1292 = vmatprep.subr.mxu0 %v651
    %1293 = vmatpush1.msra.mxu0 %v650
    %1294 = vmatprep.subr.mxu0 %v655
    %1295 = vmatpush1.msra.mxu0 %v654
    %1296 = vmatprep.subr.mxu0 %v659
    %1297 = vmatpush1.msra.mxu0 %v658
    %1298 = vmatprep.subr.mxu0 %v663
    %1299 = vmatpush1.msra.mxu0 %v662
    %1300 = vmatprep.subr.mxu0 %v667
    %1301 = vmatpush1.msra.mxu0 %v666
    %1302 = vmatprep.subr.mxu0 %v671
    %1303 = vmatpush1.msra.mxu0 %v670
    %1304 = vmatprep.subr.mxu0 %v675
    %1305 = vmatpush1.msra.mxu0 %v674
    %1306 = vmatprep.subr.mxu0 %v679
    %1307 = vmatpush1.msra.mxu0 %v678
    %1308 = vmatprep.subr.mxu0 %v683
    %1309 = vmatpush1.msra.mxu0 %v682
    %1310 = vmatprep.subr.mxu0 0.0
    %1311 = vmatpush1.msra.mxu0 0.0
    %1312 = vmatprep.subr.mxu0 0.0
    %1313 = vmatpush1.msra.mxu0 0.0
    %1314 = vmatprep.subr.mxu0 0.0
    %1315 = vmatpush1.msra.mxu0 0.0
    %1316 = vmatprep.subr.mxu0 0.0
    %1317 = vmatpush1.msra.mxu0 0.0
    %1318 = vmatprep.subr.mxu0 0.0
    %1319 = vmatpush1.msra.mxu0 0.0
    %1320 = vmatprep.subr.mxu0 0.0
    %1321 = vmatpush1.msra.mxu0 0.0
    %1322 = vmatprep.subr.mxu0 0.0
    %1323 = vmatpush1.msra.mxu0 0.0
    %1324 = vmatprep.subr.mxu0 0.0
    %1325 = vmatpush1.msra.mxu0 0.0
    %1326 = vmatprep.subr.mxu0 0.0
    %1327 = vmatpush1.msra.mxu0 0.0
    %1328 = vmatprep.subr.mxu0 0.0
    %1329 = vmatpush1.msra.mxu0 0.0
    %1330 = vmatprep.subr.mxu0 0.0
    %1331 = vmatpush1.msra.mxu0 0.0
    %1332 = vmatprep.subr.mxu0 0.0
    %1333 = vmatpush1.msra.mxu0 0.0
    %1334 = vmatprep.subr.mxu0 0.0
    %1335 = vmatpush1.msra.mxu0 0.0
    %1336 = vmatprep.subr.mxu0 0.0
    %1337 = vmatpush1.msra.mxu0 0.0
    %1338 = vmatprep.subr.mxu0 0.0
    %1339 = vmatpush1.msra.mxu0 0.0
    %1340 = vmatprep.subr.mxu0 0.0
    %1341 = vmatpush1.msra.mxu0 0.0
    %1342 = vmatprep.mubr.f32.mxu0 0.0
    %1343 = vmatmul.mubr.f32.gmra.mrb[0].mxu0 %v1276
    %v1344 = vpop.f32.mrb[0].mxu0
    %v1345 = vadd.f32 0.0, %v1344
    %v1346 = vpop.f32.mrb[0].mxu0
    %v1347 = vadd.f32 0.0, %v1346
    %1348 = vdwg.mxu0
    %1349 = vmatprep.subr.mxu0 %v625
    %1350 = vmatpush1.msra.mxu0 %v624
    %1351 = vmatprep.subr.mxu0 %v629
    %1352 = vmatpush1.msra.mxu0 %v628
    %1353 = vmatprep.subr.mxu0 %v633
    %1354 = vmatpush1.msra.mxu0 %v632
    %1355 = vmatprep.subr.mxu0 %v637
    %1356 = vmatpush1.msra.mxu0 %v636
    %1357 = vmatprep.subr.mxu0 %v641
    %1358 = vmatpush1.msra.mxu0 %v640
    %1359 = vmatprep.subr.mxu0 %v645
    %1360 = vmatpush1.msra.mxu0 %v644
    %1361 = vmatprep.subr.mxu0 %v649
    %1362 = vmatpush1.msra.mxu0 %v648
    %1363 = vmatprep.subr.mxu0 %v653
    %1364 = vmatpush1.msra.mxu0 %v652
    %1365 = vmatprep.subr.mxu0 %v657
    %1366 = vmatpush1.msra.mxu0 %v656
    %1367 = vmatprep.subr.mxu0 %v661
    %1368 = vmatpush1.msra.mxu0 %v660
    %1369 = vmatprep.subr.mxu0 %v665
    %1370 = vmatpush1.msra.mxu0 %v664
    %1371 = vmatprep.subr.mxu0 %v669
    %1372 = vmatpush1.msra.mxu0 %v668
    %1373 = vmatprep.subr.mxu0 %v673
    %1374 = vmatpush1.msra.mxu0 %v672
    %1375 = vmatprep.subr.mxu0 %v677
    %1376 = vmatpush1.msra.mxu0 %v676
    %1377 = vmatprep.subr.mxu0 %v681
    %1378 = vmatpush1.msra.mxu0 %v680
    %1379 = vmatprep.subr.mxu0 %v685
    %1380 = vmatpush1.msra.mxu0 %v684
    %1381 = vmatprep.subr.mxu0 0.0
    %1382 = vmatpush1.msra.mxu0 0.0
    %1383 = vmatprep.subr.mxu0 0.0
    %1384 = vmatpush1.msra.mxu0 0.0
    %1385 = vmatprep.subr.mxu0 0.0
    %1386 = vmatpush1.msra.mxu0 0.0
    %1387 = vmatprep.subr.mxu0 0.0
    %1388 = vmatpush1.msra.mxu0 0.0
    %1389 = vmatprep.subr.mxu0 0.0
    %1390 = vmatpush1.msra.mxu0 0.0
    %1391 = vmatprep.subr.mxu0 0.0
    %1392 = vmatpush1.msra.mxu0 0.0
    %1393 = vmatprep.subr.mxu0 0.0
    %1394 = vmatpush1.msra.mxu0 0.0
    %1395 = vmatprep.subr.mxu0 0.0
    %1396 = vmatpush1.msra.mxu0 0.0
    %1397 = vmatprep.subr.mxu0 0.0
    %1398 = vmatpush1.msra.mxu0 0.0
    %1399 = vmatprep.subr.mxu0 0.0
    %1400 = vmatpush1.msra.mxu0 0.0
    %1401 = vmatprep.subr.mxu0 0.0
    %1402 = vmatpush1.msra.mxu0 0.0
    %1403 = vmatprep.subr.mxu0 0.0
    %1404 = vmatpush1.msra.mxu0 0.0
    %1405 = vmatprep.subr.mxu0 0.0
    %1406 = vmatpush1.msra.mxu0 0.0
    %1407 = vmatprep.subr.mxu0 0.0
    %1408 = vmatpush1.msra.mxu0 0.0
    %1409 = vmatprep.subr.mxu0 0.0
    %1410 = vmatpush1.msra.mxu0 0.0
    %1411 = vmatprep.subr.mxu0 0.0
    %1412 = vmatpush1.msra.mxu0 0.0
    %1413 = vmatprep.mubr.f32.mxu0 0.0
    %1414 = vmatmul.mubr.f32.gmra.mrb[0].mxu0 %v1276
    %v1415 = vpop.f32.mrb[0].mxu0
    %v1416 = vadd.f32 0.0, %v1415
    %v1417 = vpop.f32.mrb[0].mxu0
    %v1418 = vadd.f32 0.0, %v1417
    %1419 = vdwg.mxu0
    %v1424 = vrot.slane %v1345, 4
    %v1425 = vrot.slane %v1347, 4
    %v1426 = vrot.slane %v1416, 4
    %v1427 = vrot.slane %v1418, 4
    %v1432 = vadd.f32 %v1271, %v1424
    %v1433 = vadd.f32 %v1272, %v1425
    %v1434 = vadd.f32 %v1273, %v1426
    %v1435 = vadd.f32 %v1274, %v1427
    %v1436 = vxor.u32 %v1432, 2147483648
    %v1437 = vmul.f32 %v1436, 1.442695
    %v1438 = vpow.pop %v1437
    %v1439 = vadd.f32 %v1438, 1.0
    %v1440 = vrcp.pop %v1439
    %v1441 = vmul.f32 1.0, %v1440
    %v1442 = vxor.u32 %v1433, 2147483648
    %v1443 = vmul.f32 %v1442, 1.442695
    %v1444 = vpow.pop %v1443
    %v1445 = vadd.f32 %v1444, 1.0
    %v1446 = vrcp.pop %v1445
    %v1447 = vmul.f32 1.0, %v1446
    %v1448 = vtanh.pop %v1434
    %v1449 = vxor.u32 %v1435, 2147483648
    %v1450 = vmul.f32 %v1449, 1.442695
    %v1451 = vpow.pop %v1450
    %v1452 = vadd.f32 %v1451, 1.0
    %v1453 = vrcp.pop %v1452
    %v1454 = vmul.f32 1.0, %v1453
    %v1456 = vrot.slane %v1059, 2
    %v1458 = vmul.f32 %v1447, %v1456
    %v1459 = vmul.f32 %v1441, %v1448
    %v1460 = vadd.f32 %v1458, %v1459
    %v1461 = vtanh.pop %v1460
    %v1462 = vmul.f32 %v1454, %v1461
    %v1463 = vmul.f32 %v1462, %v1066
    %vm1464 = vcmask 1045508
    %v1465 = vsel %vm1464, %v1463, 0.0
    %1466 = vadd.xlane.f32.xlu0 %v1465
    %v1467 = vpop.xlane.xlu0 %1466
    %vm1468 = vcmask 54324
    %1469 = vst.msk [vmem:[%s8 - $0x4] sm:$0x30] %vm1468, %v1467
    %v1470 = vld [vmem:[#allocation2] sm:$0x30]
    %v1471 = vld [vmem:[#allocation2 + $0x8] sm:$0x30]
    %v1472 = vld [vmem:[#allocation2 + $0x10] sm:$0x30]
    %v1473 = vld [vmem:[#allocation2 + $0x18] sm:$0x30]
    %v1475 = vrot.slane %v1263, 2
    %1477 = vmatprep.subr.mxu0 %v558
    %1478 = vmatpush1.msra.mxu0 %v557
    %1479 = vmatprep.subr.mxu0 %v562
    %1480 = vmatpush1.msra.mxu0 %v561
    %1481 = vmatprep.subr.mxu0 %v566
    %1482 = vmatpush1.msra.mxu0 %v565
    %1483 = vmatprep.subr.mxu0 %v570
    %1484 = vmatpush1.msra.mxu0 %v569
    %1485 = vmatprep.subr.mxu0 %v574
    %1486 = vmatpush1.msra.mxu0 %v573
    %1487 = vmatprep.subr.mxu0 %v578
    %1488 = vmatpush1.msra.mxu0 %v577
    %1489 = vmatprep.subr.mxu0 %v582
    %1490 = vmatpush1.msra.mxu0 %v581
    %1491 = vmatprep.subr.mxu0 %v586
    %1492 = vmatpush1.msra.mxu0 %v585
    %1493 = vmatprep.subr.mxu0 %v590
    %1494 = vmatpush1.msra.mxu0 %v589
    %1495 = vmatprep.subr.mxu0 %v594
    %1496 = vmatpush1.msra.mxu0 %v593
    %1497 = vmatprep.subr.mxu0 %v598
    %1498 = vmatpush1.msra.mxu0 %v597
    %1499 = vmatprep.subr.mxu0 %v602
    %1500 = vmatpush1.msra.mxu0 %v601
    %1501 = vmatprep.subr.mxu0 %v606
    %1502 = vmatpush1.msra.mxu0 %v605
    %1503 = vmatprep.subr.mxu0 %v610
    %1504 = vmatpush1.msra.mxu0 %v609
    %1505 = vmatprep.subr.mxu0 %v614
    %1506 = vmatpush1.msra.mxu0 %v613
    %1507 = vmatprep.subr.mxu0 %v618
    %1508 = vmatpush1.msra.mxu0 %v617
    %1509 = vmatprep.subr.mxu0 0.0
    %1510 = vmatpush1.msra.mxu0 0.0
    %1511 = vmatprep.subr.mxu0 0.0
    %1512 = vmatpush1.msra.mxu0 0.0
    %1513 = vmatprep.subr.mxu0 0.0
    %1514 = vmatpush1.msra.mxu0 0.0
    %1515 = vmatprep.subr.mxu0 0.0
    %1516 = vmatpush1.msra.mxu0 0.0
    %1517 = vmatprep.subr.mxu0 0.0
    %1518 = vmatpush1.msra.mxu0 0.0
    %1519 = vmatprep.subr.mxu0 0.0
    %1520 = vmatpush1.msra.mxu0 0.0
    %1521 = vmatprep.subr.mxu0 0.0
    %1522 = vmatpush1.msra.mxu0 0.0
    %1523 = vmatprep.subr.mxu0 0.0
    %1524 = vmatpush1.msra.mxu0 0.0
    %1525 = vmatprep.subr.mxu0 0.0
    %1526 = vmatpush1.msra.mxu0 0.0
    %1527 = vmatprep.subr.mxu0 0.0
    %1528 = vmatpush1.msra.mxu0 0.0
    %1529 = vmatprep.subr.mxu0 0.0
    %1530 = vmatpush1.msra.mxu0 0.0
    %1531 = vmatprep.subr.mxu0 0.0
    %1532 = vmatpush1.msra.mxu0 0.0
    %1533 = vmatprep.subr.mxu0 0.0
    %1534 = vmatpush1.msra.mxu0 0.0
    %1535 = vmatprep.subr.mxu0 0.0
    %1536 = vmatpush1.msra.mxu0 0.0
    %1537 = vmatprep.subr.mxu0 0.0
    %1538 = vmatpush1.msra.mxu0 0.0
    %1539 = vmatprep.subr.mxu0 0.0
    %1540 = vmatpush1.msra.mxu0 0.0
    %1541 = vmatprep.mubr.f32.mxu0 0.0
    %1542 = vmatmul.mubr.f32.gmra.mrb[0].mxu0 %v1475
    %v1543 = vpop.f32.mrb[0].mxu0
    %v1544 = vadd.f32 0.0, %v1543
    %v1545 = vpop.f32.mrb[0].mxu0
    %v1546 = vadd.f32 0.0, %v1545
    %1547 = vdwg.mxu0
    %1548 = vmatprep.subr.mxu0 %v560
    %1549 = vmatpush1.msra.mxu0 %v559
    %1550 = vmatprep.subr.mxu0 %v564
    %1551 = vmatpush1.msra.mxu0 %v563
    %1552 = vmatprep.subr.mxu0 %v568
    %1553 = vmatpush1.msra.mxu0 %v567
    %1554 = vmatprep.subr.mxu0 %v572
    %1555 = vmatpush1.msra.mxu0 %v571
    %1556 = vmatprep.subr.mxu0 %v576
    %1557 = vmatpush1.msra.mxu0 %v575
    %1558 = vmatprep.subr.mxu0 %v580
    %1559 = vmatpush1.msra.mxu0 %v579
    %1560 = vmatprep.subr.mxu0 %v584
    %1561 = vmatpush1.msra.mxu0 %v583
    %1562 = vmatprep.subr.mxu0 %v588
    %1563 = vmatpush1.msra.mxu0 %v587
    %1564 = vmatprep.subr.mxu0 %v592
    %1565 = vmatpush1.msra.mxu0 %v591
    %1566 = vmatprep.subr.mxu0 %v596
    %1567 = vmatpush1.msra.mxu0 %v595
    %1568 = vmatprep.subr.mxu0 %v600
    %1569 = vmatpush1.msra.mxu0 %v599
    %1570 = vmatprep.subr.mxu0 %v604
    %1571 = vmatpush1.msra.mxu0 %v603
    %1572 = vmatprep.subr.mxu0 %v608
    %1573 = vmatpush1.msra.mxu0 %v607
    %1574 = vmatprep.subr.mxu0 %v612
    %1575 = vmatpush1.msra.mxu0 %v611
    %1576 = vmatprep.subr.mxu0 %v616
    %1577 = vmatpush1.msra.mxu0 %v615
    %1578 = vmatprep.subr.mxu0 %v620
    %1579 = vmatpush1.msra.mxu0 %v619
    %1580 = vmatprep.subr.mxu0 0.0
    %1581 = vmatpush1.msra.mxu0 0.0
    %1582 = vmatprep.subr.mxu0 0.0
    %1583 = vmatpush1.msra.mxu0 0.0
    %1584 = vmatprep.subr.mxu0 0.0
    %1585 = vmatpush1.msra.mxu0 0.0
    %1586 = vmatprep.subr.mxu0 0.0
    %1587 = vmatpush1.msra.mxu0 0.0
    %1588 = vmatprep.subr.mxu0 0.0
    %1589 = vmatpush1.msra.mxu0 0.0
    %1590 = vmatprep.subr.mxu0 0.0
    %1591 = vmatpush1.msra.mxu0 0.0
    %1592 = vmatprep.subr.mxu0 0.0
    %1593 = vmatpush1.msra.mxu0 0.0
    %1594 = vmatprep.subr.mxu0 0.0
    %1595 = vmatpush1.msra.mxu0 0.0
    %1596 = vmatprep.subr.mxu0 0.0
    %1597 = vmatpush1.msra.mxu0 0.0
    %1598 = vmatprep.subr.mxu0 0.0
    %1599 = vmatpush1.msra.mxu0 0.0
    %1600 = vmatprep.subr.mxu0 0.0
    %1601 = vmatpush1.msra.mxu0 0.0
    %1602 = vmatprep.subr.mxu0 0.0
    %1603 = vmatpush1.msra.mxu0 0.0
    %1604 = vmatprep.subr.mxu0 0.0
    %1605 = vmatpush1.msra.mxu0 0.0
    %1606 = vmatprep.subr.mxu0 0.0
    %1607 = vmatpush1.msra.mxu0 0.0
    %1608 = vmatprep.subr.mxu0 0.0
    %1609 = vmatpush1.msra.mxu0 0.0
    %1610 = vmatprep.subr.mxu0 0.0
    %1611 = vmatpush1.msra.mxu0 0.0
    %1612 = vmatprep.mubr.f32.mxu0 0.0
    %1613 = vmatmul.mubr.f32.gmra.mrb[0].mxu0 %v1475
    %v1614 = vpop.f32.mrb[0].mxu0
    %v1615 = vadd.f32 0.0, %v1614
    %v1616 = vpop.f32.mrb[0].mxu0
    %v1617 = vadd.f32 0.0, %v1616
    %1618 = vdwg.mxu0
    %v1623 = vrot.slane %v1544, 4
    %v1624 = vrot.slane %v1546, 4
    %v1625 = vrot.slane %v1615, 4
    %v1626 = vrot.slane %v1617, 4
    %v1631 = vadd.f32 %v1470, %v1623
    %v1632 = vadd.f32 %v1471, %v1624
    %v1633 = vadd.f32 %v1472, %v1625
    %v1634 = vadd.f32 %v1473, %v1626
    %v1635 = vxor.u32 %v1631, 2147483648
    %v1636 = vmul.f32 %v1635, 1.442695
    %v1637 = vpow.pop %v1636
    %v1638 = vadd.f32 %v1637, 1.0
    %v1639 = vrcp.pop %v1638
    %v1640 = vmul.f32 1.0, %v1639
    %v1641 = vxor.u32 %v1632, 2147483648
    %v1642 = vmul.f32 %v1641, 1.442695
    %v1643 = vpow.pop %v1642
    %v1644 = vadd.f32 %v1643, 1.0
    %v1645 = vrcp.pop %v1644
    %v1646 = vmul.f32 1.0, %v1645
    %v1647 = vtanh.pop %v1633
    %v1648 = vxor.u32 %v1634, 2147483648
    %v1649 = vmul.f32 %v1648, 1.442695
    %v1650 = vpow.pop %v1649
    %v1651 = vadd.f32 %v1650, 1.0
    %v1652 = vrcp.pop %v1651
    %v1653 = vmul.f32 1.0, %v1652
    %v1655 = vrot.slane %v1261, 6
    %v1657 = vmul.f32 %v1646, %v1655
    %v1658 = vmul.f32 %v1640, %v1647
    %v1659 = vadd.f32 %v1657, %v1658
    %v1660 = vtanh.pop %v1659
    %v1661 = vmul.f32 %v1653, %v1660
    %v1662 = vmul.f32 %v1661, %v867
    %v1663 = vsel %vm1464, %v1662, 0.0
    %1664 = vadd.xlane.f32.xlu0 %v1663
    %v1665 = vpop.xlane.xlu0 %1664
    %vm1666 = vcmask 21524
    %1667 = vst.msk [vmem:[%s7 - $0x4] sm:$0x30] %vm1666, %v1665
    %v1668 = vld [vmem:[#allocation2 + $0x60] sm:$0xc]
    %v1669 = vld [vmem:[#allocation2 + $0x68] sm:$0xc]
    %v1670 = vld [vmem:[#allocation2 + $0x70] sm:$0xc]
    %v1671 = vld [vmem:[#allocation2 + $0x78] sm:$0xc]
    %v1673 = vrot.slane %v1462, 4
    %1675 = vmatprep.subr.mxu0 %v623
    %1676 = vmatpush1.msra.mxu0 %v622
    %1677 = vmatprep.subr.mxu0 %v627
    %1678 = vmatpush1.msra.mxu0 %v626
    %1679 = vmatprep.subr.mxu0 %v631
    %1680 = vmatpush1.msra.mxu0 %v630
    %1681 = vmatprep.subr.mxu0 %v635
    %1682 = vmatpush1.msra.mxu0 %v634
    %1683 = vmatprep.subr.mxu0 %v639
    %1684 = vmatpush1.msra.mxu0 %v638
    %1685 = vmatprep.subr.mxu0 %v643
    %1686 = vmatpush1.msra.mxu0 %v642
    %1687 = vmatprep.subr.mxu0 %v647
    %1688 = vmatpush1.msra.mxu0 %v646
    %1689 = vmatprep.subr.mxu0 %v651
    %1690 = vmatpush1.msra.mxu0 %v650
    %1691 = vmatprep.subr.mxu0 %v655
    %1692 = vmatpush1.msra.mxu0 %v654
    %1693 = vmatprep.subr.mxu0 %v659
    %1694 = vmatpush1.msra.mxu0 %v658
    %1695 = vmatprep.subr.mxu0 %v663
    %1696 = vmatpush1.msra.mxu0 %v662
    %1697 = vmatprep.subr.mxu0 %v667
    %1698 = vmatpush1.msra.mxu0 %v666
    %1699 = vmatprep.subr.mxu0 %v671
    %1700 = vmatpush1.msra.mxu0 %v670
    %1701 = vmatprep.subr.mxu0 %v675
    %1702 = vmatpush1.msra.mxu0 %v674
    %1703 = vmatprep.subr.mxu0 %v679
    %1704 = vmatpush1.msra.mxu0 %v678
    %1705 = vmatprep.subr.mxu0 %v683
    %1706 = vmatpush1.msra.mxu0 %v682
    %1707 = vmatprep.subr.mxu0 0.0
    %1708 = vmatpush1.msra.mxu0 0.0
    %1709 = vmatprep.subr.mxu0 0.0
    %1710 = vmatpush1.msra.mxu0 0.0
    %1711 = vmatprep.subr.mxu0 0.0
    %1712 = vmatpush1.msra.mxu0 0.0
    %1713 = vmatprep.subr.mxu0 0.0
    %1714 = vmatpush1.msra.mxu0 0.0
    %1715 = vmatprep.subr.mxu0 0.0
    %1716 = vmatpush1.msra.mxu0 0.0
    %1717 = vmatprep.subr.mxu0 0.0
    %1718 = vmatpush1.msra.mxu0 0.0
    %1719 = vmatprep.subr.mxu0 0.0
    %1720 = vmatpush1.msra.mxu0 0.0
    %1721 = vmatprep.subr.mxu0 0.0
    %1722 = vmatpush1.msra.mxu0 0.0
    %1723 = vmatprep.subr.mxu0 0.0
    %1724 = vmatpush1.msra.mxu0 0.0
    %1725 = vmatprep.subr.mxu0 0.0
    %1726 = vmatpush1.msra.mxu0 0.0
    %1727 = vmatprep.subr.mxu0 0.0
    %1728 = vmatpush1.msra.mxu0 0.0
    %1729 = vmatprep.subr.mxu0 0.0
    %1730 = vmatpush1.msra.mxu0 0.0
    %1731 = vmatprep.subr.mxu0 0.0
    %1732 = vmatpush1.msra.mxu0 0.0
    %1733 = vmatprep.subr.mxu0 0.0
    %1734 = vmatpush1.msra.mxu0 0.0
    %1735 = vmatprep.subr.mxu0 0.0
    %1736 = vmatpush1.msra.mxu0 0.0
    %1737 = vmatprep.subr.mxu0 0.0
    %1738 = vmatpush1.msra.mxu0 0.0
    %1739 = vmatprep.mubr.f32.mxu0 0.0
    %1740 = vmatmul.mubr.f32.gmra.mrb[0].mxu0 %v1673
    %v1741 = vpop.f32.mrb[0].mxu0
    %v1742 = vadd.f32 0.0, %v1741
    %v1743 = vpop.f32.mrb[0].mxu0
    %v1744 = vadd.f32 0.0, %v1743
    %1745 = vdwg.mxu0
    %1746 = vmatprep.subr.mxu0 %v625
    %1747 = vmatpush1.msra.mxu0 %v624
    %1748 = vmatprep.subr.mxu0 %v629
    %1749 = vmatpush1.msra.mxu0 %v628
    %1750 = vmatprep.subr.mxu0 %v633
    %1751 = vmatpush1.msra.mxu0 %v632
    %1752 = vmatprep.subr.mxu0 %v637
    %1753 = vmatpush1.msra.mxu0 %v636
    %1754 = vmatprep.subr.mxu0 %v641
    %1755 = vmatpush1.msra.mxu0 %v640
    %1756 = vmatprep.subr.mxu0 %v645
    %1757 = vmatpush1.msra.mxu0 %v644
    %1758 = vmatprep.subr.mxu0 %v649
    %1759 = vmatpush1.msra.mxu0 %v648
    %1760 = vmatprep.subr.mxu0 %v653
    %1761 = vmatpush1.msra.mxu0 %v652
    %1762 = vmatprep.subr.mxu0 %v657
    %1763 = vmatpush1.msra.mxu0 %v656
    %1764 = vmatprep.subr.mxu0 %v661
    %1765 = vmatpush1.msra.mxu0 %v660
    %1766 = vmatprep.subr.mxu0 %v665
    %1767 = vmatpush1.msra.mxu0 %v664
    %1768 = vmatprep.subr.mxu0 %v669
    %1769 = vmatpush1.msra.mxu0 %v668
    %1770 = vmatprep.subr.mxu0 %v673
    %1771 = vmatpush1.msra.mxu0 %v672
    %1772 = vmatprep.subr.mxu0 %v677
    %1773 = vmatpush1.msra.mxu0 %v676
    %1774 = vmatprep.subr.mxu0 %v681
    %1775 = vmatpush1.msra.mxu0 %v680
    %1776 = vmatprep.subr.mxu0 %v685
    %1777 = vmatpush1.msra.mxu0 %v684
    %1778 = vmatprep.subr.mxu0 0.0
    %1779 = vmatpush1.msra.mxu0 0.0
    %1780 = vmatprep.subr.mxu0 0.0
    %1781 = vmatpush1.msra.mxu0 0.0
    %1782 = vmatprep.subr.mxu0 0.0
    %1783 = vmatpush1.msra.mxu0 0.0
    %1784 = vmatprep.subr.mxu0 0.0
    %1785 = vmatpush1.msra.mxu0 0.0
    %1786 = vmatprep.subr.mxu0 0.0
    %1787 = vmatpush1.msra.mxu0 0.0
    %1788 = vmatprep.subr.mxu0 0.0
    %1789 = vmatpush1.msra.mxu0 0.0
    %1790 = vmatprep.subr.mxu0 0.0
    %1791 = vmatpush1.msra.mxu0 0.0
    %1792 = vmatprep.subr.mxu0 0.0
    %1793 = vmatpush1.msra.mxu0 0.0
    %1794 = vmatprep.subr.mxu0 0.0
    %1795 = vmatpush1.msra.mxu0 0.0
    %1796 = vmatprep.subr.mxu0 0.0
    %1797 = vmatpush1.msra.mxu0 0.0
    %1798 = vmatprep.subr.mxu0 0.0
    %1799 = vmatpush1.msra.mxu0 0.0
    %1800 = vmatprep.subr.mxu0 0.0
    %1801 = vmatpush1.msra.mxu0 0.0
    %1802 = vmatprep.subr.mxu0 0.0
    %1803 = vmatpush1.msra.mxu0 0.0
    %1804 = vmatprep.subr.mxu0 0.0
    %1805 = vmatpush1.msra.mxu0 0.0
    %1806 = vmatprep.subr.mxu0 0.0
    %1807 = vmatpush1.msra.mxu0 0.0
    %1808 = vmatprep.subr.mxu0 0.0
    %1809 = vmatpush1.msra.mxu0 0.0
    %1810 = vmatprep.mubr.f32.mxu0 0.0
    %1811 = vmatmul.mubr.f32.gmra.mrb[0].mxu0 %v1673
    %v1812 = vpop.f32.mrb[0].mxu0
    %v1813 = vadd.f32 0.0, %v1812
    %v1814 = vpop.f32.mrb[0].mxu0
    %v1815 = vadd.f32 0.0, %v1814
    %1816 = vdwg.mxu0
    %v1821 = vrot.slane %v1742, 6
    %v1822 = vrot.slane %v1744, 6
    %v1823 = vrot.slane %v1813, 6
    %v1824 = vrot.slane %v1815, 6
    %v1829 = vadd.f32 %v1668, %v1821
    %v1830 = vadd.f32 %v1669, %v1822
    %v1831 = vadd.f32 %v1670, %v1823
    %v1832 = vadd.f32 %v1671, %v1824
    %v1833 = vxor.u32 %v1829, 2147483648
    %v1834 = vmul.f32 %v1833, 1.442695
    %v1835 = vpow.pop %v1834
    %v1836 = vadd.f32 %v1835, 1.0
    %v1837 = vrcp.pop %v1836
    %v1838 = vmul.f32 1.0, %v1837
    %v1839 = vxor.u32 %v1830, 2147483648
    %v1840 = vmul.f32 %v1839, 1.442695
    %v1841 = vpow.pop %v1840
    %v1842 = vadd.f32 %v1841, 1.0
    %v1843 = vrcp.pop %v1842
    %v1844 = vmul.f32 1.0, %v1843
    %v1845 = vtanh.pop %v1831
    %v1846 = vxor.u32 %v1832, 2147483648
    %v1847 = vmul.f32 %v1846, 1.442695
    %v1848 = vpow.pop %v1847
    %v1849 = vadd.f32 %v1848, 1.0
    %v1850 = vrcp.pop %v1849
    %v1851 = vmul.f32 1.0, %v1850
    %v1853 = vrot.slane %v1460, 2
    %v1855 = vmul.f32 %v1844, %v1853
    %v1856 = vmul.f32 %v1838, %v1845
    %v1857 = vadd.f32 %v1855, %v1856
    %v1858 = vtanh.pop %v1857
    %v1859 = vmul.f32 %v1851, %v1858
    %v1860 = vmul.f32 %v1859, %v1066
    %v1861 = vsel %vm1265, %v1860, 0.0
    %1862 = vadd.xlane.f32.xlu0 %v1861
    %v1863 = vpop.xlane.xlu0 %1862
    %vm1864 = vcmask 44074
    %1865 = vst.msk [vmem:[%s8 - $0x2] sm:$0xc] %vm1864, %v1863
    %v1866 = vld [vmem:[#allocation2] sm:$0xc0]
    %v1867 = vld [vmem:[#allocation2 + $0x8] sm:$0xc0]
    %v1868 = vld [vmem:[#allocation2 + $0x10] sm:$0xc0]
    %v1869 = vld [vmem:[#allocation2 + $0x18] sm:$0xc0]
    %v1871 = vrot.slane %v1661, 4
    %1873 = vmatprep.subr.mxu0 %v558
    %1874 = vmatpush1.msra.mxu0 %v557
    %1875 = vmatprep.subr.mxu0 %v562
    %1876 = vmatpush1.msra.mxu0 %v561
    %1877 = vmatprep.subr.mxu0 %v566
    %1878 = vmatpush1.msra.mxu0 %v565
    %1879 = vmatprep.subr.mxu0 %v570
    %1880 = vmatpush1.msra.mxu0 %v569
    %1881 = vmatprep.subr.mxu0 %v574
    %1882 = vmatpush1.msra.mxu0 %v573
    %1883 = vmatprep.subr.mxu0 %v578
    %1884 = vmatpush1.msra.mxu0 %v577
    %1885 = vmatprep.subr.mxu0 %v582
    %1886 = vmatpush1.msra.mxu0 %v581
    %1887 = vmatprep.subr.mxu0 %v586
    %1888 = vmatpush1.msra.mxu0 %v585
    %1889 = vmatprep.subr.mxu0 %v590
    %1890 = vmatpush1.msra.mxu0 %v589
    %1891 = vmatprep.subr.mxu0 %v594
    %1892 = vmatpush1.msra.mxu0 %v593
    %1893 = vmatprep.subr.mxu0 %v598
    %1894 = vmatpush1.msra.mxu0 %v597
    %1895 = vmatprep.subr.mxu0 %v602
    %1896 = vmatpush1.msra.mxu0 %v601
    %1897 = vmatprep.subr.mxu0 %v606
    %1898 = vmatpush1.msra.mxu0 %v605
    %1899 = vmatprep.subr.mxu0 %v610
    %1900 = vmatpush1.msra.mxu0 %v609
    %1901 = vmatprep.subr.mxu0 %v614
    %1902 = vmatpush1.msra.mxu0 %v613
    %1903 = vmatprep.subr.mxu0 %v618
    %1904 = vmatpush1.msra.mxu0 %v617
    %1905 = vmatprep.subr.mxu0 0.0
    %1906 = vmatpush1.msra.mxu0 0.0
    %1907 = vmatprep.subr.mxu0 0.0
    %1908 = vmatpush1.msra.mxu0 0.0
    %1909 = vmatprep.subr.mxu0 0.0
    %1910 = vmatpush1.msra.mxu0 0.0
    %1911 = vmatprep.subr.mxu0 0.0
    %1912 = vmatpush1.msra.mxu0 0.0
    %1913 = vmatprep.subr.mxu0 0.0
    %1914 = vmatpush1.msra.mxu0 0.0
    %1915 = vmatprep.subr.mxu0 0.0
    %1916 = vmatpush1.msra.mxu0 0.0
    %1917 = vmatprep.subr.mxu0 0.0
    %1918 = vmatpush1.msra.mxu0 0.0
    %1919 = vmatprep.subr.mxu0 0.0
    %1920 = vmatpush1.msra.mxu0 0.0
    %1921 = vmatprep.subr.mxu0 0.0
    %1922 = vmatpush1.msra.mxu0 0.0
    %1923 = vmatprep.subr.mxu0 0.0
    %1924 = vmatpush1.msra.mxu0 0.0
    %1925 = vmatprep.subr.mxu0 0.0
    %1926 = vmatpush1.msra.mxu0 0.0
    %1927 = vmatprep.subr.mxu0 0.0
    %1928 = vmatpush1.msra.mxu0 0.0
    %1929 = vmatprep.subr.mxu0 0.0
    %1930 = vmatpush1.msra.mxu0 0.0
    %1931 = vmatprep.subr.mxu0 0.0
    %1932 = vmatpush1.msra.mxu0 0.0
    %1933 = vmatprep.subr.mxu0 0.0
    %1934 = vmatpush1.msra.mxu0 0.0
    %1935 = vmatprep.subr.mxu0 0.0
    %1936 = vmatpush1.msra.mxu0 0.0
    %1937 = vmatprep.mubr.f32.mxu0 0.0
    %1938 = vmatmul.mubr.f32.gmra.mrb[0].mxu0 %v1871
    %v1939 = vpop.f32.mrb[0].mxu0
    %v1940 = vadd.f32 0.0, %v1939
    %v1941 = vpop.f32.mrb[0].mxu0
    %v1942 = vadd.f32 0.0, %v1941
    %1943 = vdwg.mxu0
    %1944 = vmatprep.subr.mxu0 %v560
    %1945 = vmatpush1.msra.mxu0 %v559
    %1946 = vmatprep.subr.mxu0 %v564
    %1947 = vmatpush1.msra.mxu0 %v563
    %1948 = vmatprep.subr.mxu0 %v568
    %1949 = vmatpush1.msra.mxu0 %v567
    %1950 = vmatprep.subr.mxu0 %v572
    %1951 = vmatpush1.msra.mxu0 %v571
    %1952 = vmatprep.subr.mxu0 %v576
    %1953 = vmatpush1.msra.mxu0 %v575
    %1954 = vmatprep.subr.mxu0 %v580
    %1955 = vmatpush1.msra.mxu0 %v579
    %1956 = vmatprep.subr.mxu0 %v584
    %1957 = vmatpush1.msra.mxu0 %v583
    %1958 = vmatprep.subr.mxu0 %v588
    %1959 = vmatpush1.msra.mxu0 %v587
    %1960 = vmatprep.subr.mxu0 %v592
    %1961 = vmatpush1.msra.mxu0 %v591
    %1962 = vmatprep.subr.mxu0 %v596
    %1963 = vmatpush1.msra.mxu0 %v595
    %1964 = vmatprep.subr.mxu0 %v600
    %1965 = vmatpush1.msra.mxu0 %v599
    %1966 = vmatprep.subr.mxu0 %v604
    %1967 = vmatpush1.msra.mxu0 %v603
    %1968 = vmatprep.subr.mxu0 %v608
    %1969 = vmatpush1.msra.mxu0 %v607
    %1970 = vmatprep.subr.mxu0 %v612
    %1971 = vmatpush1.msra.mxu0 %v611
    %1972 = vmatprep.subr.mxu0 %v616
    %1973 = vmatpush1.msra.mxu0 %v615
    %1974 = vmatprep.subr.mxu0 %v620
    %1975 = vmatpush1.msra.mxu0 %v619
    %1976 = vmatprep.subr.mxu0 0.0
    %1977 = vmatpush1.msra.mxu0 0.0
    %1978 = vmatprep.subr.mxu0 0.0
    %1979 = vmatpush1.msra.mxu0 0.0
    %1980 = vmatprep.subr.mxu0 0.0
    %1981 = vmatpush1.msra.mxu0 0.0
    %1982 = vmatprep.subr.mxu0 0.0
    %1983 = vmatpush1.msra.mxu0 0.0
    %1984 = vmatprep.subr.mxu0 0.0
    %1985 = vmatpush1.msra.mxu0 0.0
    %1986 = vmatprep.subr.mxu0 0.0
    %1987 = vmatpush1.msra.mxu0 0.0
    %1988 = vmatprep.subr.mxu0 0.0
    %1989 = vmatpush1.msra.mxu0 0.0
    %1990 = vmatprep.subr.mxu0 0.0
    %1991 = vmatpush1.msra.mxu0 0.0
    %1992 = vmatprep.subr.mxu0 0.0
    %1993 = vmatpush1.msra.mxu0 0.0
    %1994 = vmatprep.subr.mxu0 0.0
    %1995 = vmatpush1.msra.mxu0 0.0
    %1996 = vmatprep.subr.mxu0 0.0
    %1997 = vmatpush1.msra.mxu0 0.0
    %1998 = vmatprep.subr.mxu0 0.0
    %1999 = vmatpush1.msra.mxu0 0.0
    %2000 = vmatprep.subr.mxu0 0.0
    %2001 = vmatpush1.msra.mxu0 0.0
    %2002 = vmatprep.subr.mxu0 0.0
    %2003 = vmatpush1.msra.mxu0 0.0
    %2004 = vmatprep.subr.mxu0 0.0
    %2005 = vmatpush1.msra.mxu0 0.0
    %2006 = vmatprep.subr.mxu0 0.0
    %2007 = vmatpush1.msra.mxu0 0.0
    %2008 = vmatprep.mubr.f32.mxu0 0.0
    %2009 = vmatmul.mubr.f32.gmra.mrb[0].mxu0 %v1871
    %v2010 = vpop.f32.mrb[0].mxu0
    %v2011 = vadd.f32 0.0, %v2010
    %v2012 = vpop.f32.mrb[0].mxu0
    %v2013 = vadd.f32 0.0, %v2012
    %2014 = vdwg.mxu0
    %v2019 = vrot.slane %v1940, 2
    %v2020 = vrot.slane %v1942, 2
    %v2021 = vrot.slane %v2011, 2
    %v2022 = vrot.slane %v2013, 2
    %v2027 = vadd.f32 %v1866, %v2019
    %v2028 = vadd.f32 %v1867, %v2020
    %v2029 = vadd.f32 %v1868, %v2021
    %v2030 = vadd.f32 %v1869, %v2022
    %v2031 = vxor.u32 %v2027, 2147483648
    %v2032 = vmul.f32 %v2031, 1.442695
    %v2033 = vpow.pop %v2032
    %v2034 = vadd.f32 %v2033, 1.0
    %v2035 = vrcp.pop %v2034
    %v2036 = vmul.f32 1.0, %v2035
    %v2037 = vxor.u32 %v2028, 2147483648
    %v2038 = vmul.f32 %v2037, 1.442695
    %v2039 = vpow.pop %v2038
    %v2040 = vadd.f32 %v2039, 1.0
    %v2041 = vrcp.pop %v2040
    %v2042 = vmul.f32 1.0, %v2041
    %v2043 = vtanh.pop %v2029
    %v2044 = vxor.u32 %v2030, 2147483648
    %v2045 = vmul.f32 %v2044, 1.442695
    %v2046 = vpow.pop %v2045
    %v2047 = vadd.f32 %v2046, 1.0
    %v2048 = vrcp.pop %v2047
    %v2049 = vmul.f32 1.0, %v2048
    %v2051 = vrot.slane %v1659, 6
    %v2053 = vmul.f32 %v2042, %v2051
    %v2054 = vmul.f32 %v2036, %v2043
    %v2055 = vadd.f32 %v2053, %v2054
    %v2056 = vtanh.pop %v2055
    %v2057 = vmul.f32 %v2049, %v2056
    %v2058 = vmul.f32 %v2057, %v867
    %v2059 = vsel %vm1069, %v2058, 0.0
    %2060 = vadd.xlane.f32.xlu0 %v2059
    %v2061 = vpop.xlane.xlu0 %2060
    %vm2062 = vcmask 31774
    %2063 = vst.msk [vmem:[%s7 - $0x6] sm:$0xc0] %vm2062, %v2061
    %v2064 = vld [vmem:[#allocation2 + $0x60] sm:$0x3]
    %v2065 = vld [vmem:[#allocation2 + $0x68] sm:$0x3]
    %v2066 = vld [vmem:[#allocation2 + $0x70] sm:$0x3]
    %v2067 = vld [vmem:[#allocation2 + $0x78] sm:$0x3]
    %v2069 = vrot.slane %v1859, 2
    %2071 = vmatprep.subr.mxu0 %v623
    %2072 = vmatpush1.msra.mxu0 %v622
    %2073 = vmatprep.subr.mxu0 %v627
    %2074 = vmatpush1.msra.mxu0 %v626
    %2075 = vmatprep.subr.mxu0 %v631
    %2076 = vmatpush1.msra.mxu0 %v630
    %2077 = vmatprep.subr.mxu0 %v635
    %2078 = vmatpush1.msra.mxu0 %v634
    %2079 = vmatprep.subr.mxu0 %v639
    %2080 = vmatpush1.msra.mxu0 %v638
    %2081 = vmatprep.subr.mxu0 %v643
    %2082 = vmatpush1.msra.mxu0 %v642
    %2083 = vmatprep.subr.mxu0 %v647
    %2084 = vmatpush1.msra.mxu0 %v646
    %2085 = vmatprep.subr.mxu0 %v651
    %2086 = vmatpush1.msra.mxu0 %v650
    %2087 = vmatprep.subr.mxu0 %v655
    %2088 = vmatpush1.msra.mxu0 %v654
    %2089 = vmatprep.subr.mxu0 %v659
    %2090 = vmatpush1.msra.mxu0 %v658
    %2091 = vmatprep.subr.mxu0 %v663
    %2092 = vmatpush1.msra.mxu0 %v662
    %2093 = vmatprep.subr.mxu0 %v667
    %2094 = vmatpush1.msra.mxu0 %v666
    %2095 = vmatprep.subr.mxu0 %v671
    %2096 = vmatpush1.msra.mxu0 %v670
    %2097 = vmatprep.subr.mxu0 %v675
    %2098 = vmatpush1.msra.mxu0 %v674
    %2099 = vmatprep.subr.mxu0 %v679
    %2100 = vmatpush1.msra.mxu0 %v678
    %2101 = vmatprep.subr.mxu0 %v683
    %2102 = vmatpush1.msra.mxu0 %v682
    %2103 = vmatprep.subr.mxu0 0.0
    %2104 = vmatpush1.msra.mxu0 0.0
    %2105 = vmatprep.subr.mxu0 0.0
    %2106 = vmatpush1.msra.mxu0 0.0
    %2107 = vmatprep.subr.mxu0 0.0
    %2108 = vmatpush1.msra.mxu0 0.0
    %2109 = vmatprep.subr.mxu0 0.0
    %2110 = vmatpush1.msra.mxu0 0.0
    %2111 = vmatprep.subr.mxu0 0.0
    %2112 = vmatpush1.msra.mxu0 0.0
    %2113 = vmatprep.subr.mxu0 0.0
    %2114 = vmatpush1.msra.mxu0 0.0
    %2115 = vmatprep.subr.mxu0 0.0
    %2116 = vmatpush1.msra.mxu0 0.0
    %2117 = vmatprep.subr.mxu0 0.0
    %2118 = vmatpush1.msra.mxu0 0.0
    %2119 = vmatprep.subr.mxu0 0.0
    %2120 = vmatpush1.msra.mxu0 0.0
    %2121 = vmatprep.subr.mxu0 0.0
    %2122 = vmatpush1.msra.mxu0 0.0
    %2123 = vmatprep.subr.mxu0 0.0
    %2124 = vmatpush1.msra.mxu0 0.0
    %2125 = vmatprep.subr.mxu0 0.0
    %2126 = vmatpush1.msra.mxu0 0.0
    %2127 = vmatprep.subr.mxu0 0.0
    %2128 = vmatpush1.msra.mxu0 0.0
    %2129 = vmatprep.subr.mxu0 0.0
    %2130 = vmatpush1.msra.mxu0 0.0
    %2131 = vmatprep.subr.mxu0 0.0
    %2132 = vmatpush1.msra.mxu0 0.0
    %2133 = vmatprep.subr.mxu0 0.0
    %2134 = vmatpush1.msra.mxu0 0.0
    %2135 = vmatprep.mubr.f32.mxu0 0.0
    %2136 = vmatmul.mubr.f32.gmra.mrb[0].mxu0 %v2069
    %v2137 = vpop.f32.mrb[0].mxu0
    %v2138 = vadd.f32 0.0, %v2137
    %v2139 = vpop.f32.mrb[0].mxu0
    %v2140 = vadd.f32 0.0, %v2139
    %2141 = vdwg.mxu0
    %2142 = vmatprep.subr.mxu0 %v625
    %2143 = vmatpush1.msra.mxu0 %v624
    %2144 = vmatprep.subr.mxu0 %v629
    %2145 = vmatpush1.msra.mxu0 %v628
    %2146 = vmatprep.subr.mxu0 %v633
    %2147 = vmatpush1.msra.mxu0 %v632
    %2148 = vmatprep.subr.mxu0 %v637
    %2149 = vmatpush1.msra.mxu0 %v636
    %2150 = vmatprep.subr.mxu0 %v641
    %2151 = vmatpush1.msra.mxu0 %v640
    %2152 = vmatprep.subr.mxu0 %v645
    %2153 = vmatpush1.msra.mxu0 %v644
    %2154 = vmatprep.subr.mxu0 %v649
    %2155 = vmatpush1.msra.mxu0 %v648
    %2156 = vmatprep.subr.mxu0 %v653
    %2157 = vmatpush1.msra.mxu0 %v652
    %2158 = vmatprep.subr.mxu0 %v657
    %2159 = vmatpush1.msra.mxu0 %v656
    %2160 = vmatprep.subr.mxu0 %v661
    %2161 = vmatpush1.msra.mxu0 %v660
    %2162 = vmatprep.subr.mxu0 %v665
    %2163 = vmatpush1.msra.mxu0 %v664
    %2164 = vmatprep.subr.mxu0 %v669
    %2165 = vmatpush1.msra.mxu0 %v668
    %2166 = vmatprep.subr.mxu0 %v673
    %2167 = vmatpush1.msra.mxu0 %v672
    %2168 = vmatprep.subr.mxu0 %v677
    %2169 = vmatpush1.msra.mxu0 %v676
    %2170 = vmatprep.subr.mxu0 %v681
    %2171 = vmatpush1.msra.mxu0 %v680
    %2172 = vmatprep.subr.mxu0 %v685
    %2173 = vmatpush1.msra.mxu0 %v684
    %2174 = vmatprep.subr.mxu0 0.0
    %2175 = vmatpush1.msra.mxu0 0.0
    %2176 = vmatprep.subr.mxu0 0.0
    %2177 = vmatpush1.msra.mxu0 0.0
    %2178 = vmatprep.subr.mxu0 0.0
    %2179 = vmatpush1.msra.mxu0 0.0
    %2180 = vmatprep.subr.mxu0 0.0
    %2181 = vmatpush1.msra.mxu0 0.0
    %2182 = vmatprep.subr.mxu0 0.0
    %2183 = vmatpush1.msra.mxu0 0.0
    %2184 = vmatprep.subr.mxu0 0.0
    %2185 = vmatpush1.msra.mxu0 0.0
    %2186 = vmatprep.subr.mxu0 0.0
    %2187 = vmatpush1.msra.mxu0 0.0
    %2188 = vmatprep.subr.mxu0 0.0
    %2189 = vmatpush1.msra.mxu0 0.0
    %2190 = vmatprep.subr.mxu0 0.0
    %2191 = vmatpush1.msra.mxu0 0.0
    %2192 = vmatprep.subr.mxu0 0.0
    %2193 = vmatpush1.msra.mxu0 0.0
    %2194 = vmatprep.subr.mxu0 0.0
    %2195 = vmatpush1.msra.mxu0 0.0
    %2196 = vmatprep.subr.mxu0 0.0
    %2197 = vmatpush1.msra.mxu0 0.0
    %2198 = vmatprep.subr.mxu0 0.0
    %2199 = vmatpush1.msra.mxu0 0.0
    %2200 = vmatprep.subr.mxu0 0.0
    %2201 = vmatpush1.msra.mxu0 0.0
    %2202 = vmatprep.subr.mxu0 0.0
    %2203 = vmatpush1.msra.mxu0 0.0
    %2204 = vmatprep.subr.mxu0 0.0
    %2205 = vmatpush1.msra.mxu0 0.0
    %2206 = vmatprep.mubr.f32.mxu0 0.0
    %2207 = vmatmul.mubr.f32.gmra.mrb[0].mxu0 %v2069
    %v2208 = vpop.f32.mrb[0].mxu0
    %v2209 = vadd.f32 0.0, %v2208
    %v2210 = vpop.f32.mrb[0].mxu0
    %v2211 = vadd.f32 0.0, %v2210
    %2212 = vdwg.mxu0
    %v2213 = vadd.f32 %v2064, %v2138
    %v2214 = vadd.f32 %v2065, %v2140
    %v2215 = vadd.f32 %v2066, %v2209
    %v2216 = vadd.f32 %v2067, %v2211
    %v2217 = vxor.u32 %v2213, 2147483648
    %v2218 = vmul.f32 %v2217, 1.442695
    %v2219 = vpow.pop %v2218
    %v2220 = vadd.f32 %v2219, 1.0
    %v2221 = vrcp.pop %v2220
    %v2222 = vmul.f32 1.0, %v2221
    %v2223 = vxor.u32 %v2214, 2147483648
    %v2224 = vmul.f32 %v2223, 1.442695
    %v2225 = vpow.pop %v2224
    %v2226 = vadd.f32 %v2225, 1.0
    %v2227 = vrcp.pop %v2226
    %v2228 = vmul.f32 1.0, %v2227
    %v2229 = vtanh.pop %v2215
    %v2230 = vxor.u32 %v2216, 2147483648
    %v2231 = vmul.f32 %v2230, 1.442695
    %v2232 = vpow.pop %v2231
    %v2233 = vadd.f32 %v2232, 1.0
    %v2234 = vrcp.pop %v2233
    %v2235 = vmul.f32 1.0, %v2234
    %v2237 = vrot.slane %v1857, 2
    %v2239 = vmul.f32 %v2228, %v2237
    %v2240 = vmul.f32 %v2222, %v2229
    %v2241 = vadd.f32 %v2239, %v2240
    %v2242 = vtanh.pop %v2241
    %v2243 = vmul.f32 %v2235, %v2242
    %v2244 = vmul.f32 %v2243, %v1066
    %v2245 = vsel %vm870, %v2244, 0.0
    %2246 = vadd.xlane.f32.xlu0 %v2245
    %v2247 = vpop.xlane.xlu0 %2246
    %vm2248 = vcmask 33824
    %2249 = vst.msk [vmem:[%s8] sm:$0x3] %vm2248, %v2247
    %v2250 = vld [vmem:[#allocation2 + $0x40] sm:$0x3]
    %v2251 = vld [vmem:[#allocation2 + $0x48] sm:$0x3]
    %v2252 = vld [vmem:[#allocation2 + $0x50] sm:$0x3]
    %v2253 = vld [vmem:[#allocation2 + $0x58] sm:$0x3]
    %v2255 = vrot.slane %v2057, 6
    %2257 = vmatprep.subr.mxu0 %v558
    %2258 = vmatpush1.msra.mxu0 %v557
    %2259 = vmatprep.subr.mxu0 %v562
    %2260 = vmatpush1.msra.mxu0 %v561
    %2261 = vmatprep.subr.mxu0 %v566
    %2262 = vmatpush1.msra.mxu0 %v565
    %2263 = vmatprep.subr.mxu0 %v570
    %2264 = vmatpush1.msra.mxu0 %v569
    %2265 = vmatprep.subr.mxu0 %v574
    %2266 = vmatpush1.msra.mxu0 %v573
    %2267 = vmatprep.subr.mxu0 %v578
    %2268 = vmatpush1.msra.mxu0 %v577
    %2269 = vmatprep.subr.mxu0 %v582
    %2270 = vmatpush1.msra.mxu0 %v581
    %2271 = vmatprep.subr.mxu0 %v586
    %2272 = vmatpush1.msra.mxu0 %v585
    %2273 = vmatprep.subr.mxu0 %v590
    %2274 = vmatpush1.msra.mxu0 %v589
    %2275 = vmatprep.subr.mxu0 %v594
    %2276 = vmatpush1.msra.mxu0 %v593
    %2277 = vmatprep.subr.mxu0 %v598
    %2278 = vmatpush1.msra.mxu0 %v597
    %2279 = vmatprep.subr.mxu0 %v602
    %2280 = vmatpush1.msra.mxu0 %v601
    %2281 = vmatprep.subr.mxu0 %v606
    %2282 = vmatpush1.msra.mxu0 %v605
    %2283 = vmatprep.subr.mxu0 %v610
    %2284 = vmatpush1.msra.mxu0 %v609
    %2285 = vmatprep.subr.mxu0 %v614
    %2286 = vmatpush1.msra.mxu0 %v613
    %2287 = vmatprep.subr.mxu0 %v618
    %2288 = vmatpush1.msra.mxu0 %v617
    %2289 = vmatprep.subr.mxu0 0.0
    %2290 = vmatpush1.msra.mxu0 0.0
    %2291 = vmatprep.subr.mxu0 0.0
    %2292 = vmatpush1.msra.mxu0 0.0
    %2293 = vmatprep.subr.mxu0 0.0
    %2294 = vmatpush1.msra.mxu0 0.0
    %2295 = vmatprep.subr.mxu0 0.0
    %2296 = vmatpush1.msra.mxu0 0.0
    %2297 = vmatprep.subr.mxu0 0.0
    %2298 = vmatpush1.msra.mxu0 0.0
    %2299 = vmatprep.subr.mxu0 0.0
    %2300 = vmatpush1.msra.mxu0 0.0
    %2301 = vmatprep.subr.mxu0 0.0
    %2302 = vmatpush1.msra.mxu0 0.0
    %2303 = vmatprep.subr.mxu0 0.0
    %2304 = vmatpush1.msra.mxu0 0.0
    %2305 = vmatprep.subr.mxu0 0.0
    %2306 = vmatpush1.msra.mxu0 0.0
    %2307 = vmatprep.subr.mxu0 0.0
    %2308 = vmatpush1.msra.mxu0 0.0
    %2309 = vmatprep.subr.mxu0 0.0
    %2310 = vmatpush1.msra.mxu0 0.0
    %2311 = vmatprep.subr.mxu0 0.0
    %2312 = vmatpush1.msra.mxu0 0.0
    %2313 = vmatprep.subr.mxu0 0.0
    %2314 = vmatpush1.msra.mxu0 0.0
    %2315 = vmatprep.subr.mxu0 0.0
    %2316 = vmatpush1.msra.mxu0 0.0
    %2317 = vmatprep.subr.mxu0 0.0
    %2318 = vmatpush1.msra.mxu0 0.0
    %2319 = vmatprep.subr.mxu0 0.0
    %2320 = vmatpush1.msra.mxu0 0.0
    %2321 = vmatprep.mubr.f32.mxu0 0.0
    %2322 = vmatmul.mubr.f32.gmra.mrb[0].mxu0 %v2255
    %v2323 = vpop.f32.mrb[0].mxu0
    %v2324 = vadd.f32 0.0, %v2323
    %v2325 = vpop.f32.mrb[0].mxu0
    %v2326 = vadd.f32 0.0, %v2325
    %2327 = vdwg.mxu0
    %2328 = vmatprep.subr.mxu0 %v560
    %2329 = vmatpush1.msra.mxu0 %v559
    %2330 = vmatprep.subr.mxu0 %v564
    %2331 = vmatpush1.msra.mxu0 %v563
    %2332 = vmatprep.subr.mxu0 %v568
    %2333 = vmatpush1.msra.mxu0 %v567
    %2334 = vmatprep.subr.mxu0 %v572
    %2335 = vmatpush1.msra.mxu0 %v571
    %2336 = vmatprep.subr.mxu0 %v576
    %2337 = vmatpush1.msra.mxu0 %v575
    %2338 = vmatprep.subr.mxu0 %v580
    %2339 = vmatpush1.msra.mxu0 %v579
    %2340 = vmatprep.subr.mxu0 %v584
    %2341 = vmatpush1.msra.mxu0 %v583
    %2342 = vmatprep.subr.mxu0 %v588
    %2343 = vmatpush1.msra.mxu0 %v587
    %2344 = vmatprep.subr.mxu0 %v592
    %2345 = vmatpush1.msra.mxu0 %v591
    %2346 = vmatprep.subr.mxu0 %v596
    %2347 = vmatpush1.msra.mxu0 %v595
    %2348 = vmatprep.subr.mxu0 %v600
    %2349 = vmatpush1.msra.mxu0 %v599
    %2350 = vmatprep.subr.mxu0 %v604
    %2351 = vmatpush1.msra.mxu0 %v603
    %2352 = vmatprep.subr.mxu0 %v608
    %2353 = vmatpush1.msra.mxu0 %v607
    %2354 = vmatprep.subr.mxu0 %v612
    %2355 = vmatpush1.msra.mxu0 %v611
    %2356 = vmatprep.subr.mxu0 %v616
    %2357 = vmatpush1.msra.mxu0 %v615
    %2358 = vmatprep.subr.mxu0 %v620
    %2359 = vmatpush1.msra.mxu0 %v619
    %2360 = vmatprep.subr.mxu0 0.0
    %2361 = vmatpush1.msra.mxu0 0.0
    %2362 = vmatprep.subr.mxu0 0.0
    %2363 = vmatpush1.msra.mxu0 0.0
    %2364 = vmatprep.subr.mxu0 0.0
    %2365 = vmatpush1.msra.mxu0 0.0
    %2366 = vmatprep.subr.mxu0 0.0
    %2367 = vmatpush1.msra.mxu0 0.0
    %2368 = vmatprep.subr.mxu0 0.0
    %2369 = vmatpush1.msra.mxu0 0.0
    %2370 = vmatprep.subr.mxu0 0.0
    %2371 = vmatpush1.msra.mxu0 0.0
    %2372 = vmatprep.subr.mxu0 0.0
    %2373 = vmatpush1.msra.mxu0 0.0
    %2374 = vmatprep.subr.mxu0 0.0
    %2375 = vmatpush1.msra.mxu0 0.0
    %2376 = vmatprep.subr.mxu0 0.0
    %2377 = vmatpush1.msra.mxu0 0.0
    %2378 = vmatprep.subr.mxu0 0.0
    %2379 = vmatpush1.msra.mxu0 0.0
    %2380 = vmatprep.subr.mxu0 0.0
    %2381 = vmatpush1.msra.mxu0 0.0
    %2382 = vmatprep.subr.mxu0 0.0
    %2383 = vmatpush1.msra.mxu0 0.0
    %2384 = vmatprep.subr.mxu0 0.0
    %2385 = vmatpush1.msra.mxu0 0.0
    %2386 = vmatprep.subr.mxu0 0.0
    %2387 = vmatpush1.msra.mxu0 0.0
    %2388 = vmatprep.subr.mxu0 0.0
    %2389 = vmatpush1.msra.mxu0 0.0
    %2390 = vmatprep.subr.mxu0 0.0
    %2391 = vmatpush1.msra.mxu0 0.0
    %2392 = vmatprep.mubr.f32.mxu0 0.0
    %2393 = vmatmul.mubr.f32.gmra.mrb[0].mxu0 %v2255
    %v2394 = vpop.f32.mrb[0].mxu0
    %v2395 = vadd.f32 0.0, %v2394
    %v2396 = vpop.f32.mrb[0].mxu0
    %v2397 = vadd.f32 0.0, %v2396
    %2398 = vdwg.mxu0
    %v2399 = vadd.f32 %v2250, %v2324
    %v2400 = vadd.f32 %v2251, %v2326
    %v2401 = vadd.f32 %v2252, %v2395
    %v2402 = vadd.f32 %v2253, %v2397
    %v2403 = vxor.u32 %v2399, 2147483648
    %v2404 = vmul.f32 %v2403, 1.442695
    %v2405 = vpow.pop %v2404
    %v2406 = vadd.f32 %v2405, 1.0
    %v2407 = vrcp.pop %v2406
    %v2408 = vmul.f32 1.0, %v2407
    %v2409 = vxor.u32 %v2400, 2147483648
    %v2410 = vmul.f32 %v2409, 1.442695
    %v2411 = vpow.pop %v2410
    %v2412 = vadd.f32 %v2411, 1.0
    %v2413 = vrcp.pop %v2412
    %v2414 = vmul.f32 1.0, %v2413
    %v2415 = vtanh.pop %v2401
    %v2416 = vxor.u32 %v2402, 2147483648
    %v2417 = vmul.f32 %v2416, 1.442695
    %v2418 = vpow.pop %v2417
    %v2419 = vadd.f32 %v2418, 1.0
    %v2420 = vrcp.pop %v2419
    %v2421 = vmul.f32 1.0, %v2420
    %v2423 = vrot.slane %v2055, 6
    %v2425 = vmul.f32 %v2414, %v2423
    %v2426 = vmul.f32 %v2408, %v2415
    %v2427 = vadd.f32 %v2425, %v2426
    %v2428 = vtanh.pop %v2427
    %v2429 = vmul.f32 %v2421, %v2428
    %v2430 = vmul.f32 %v2429, %v867
    %v2431 = vsel %vm870, %v2430, 0.0
    %2432 = vadd.xlane.f32.xlu0 %v2431
    %v2433 = vpop.xlane.xlu0 %2432
    %2434 = vst.msk [vmem:[%s7] sm:$0x3] %vm2248, %v2433
    %v2435 = vld [vmem:[#allocation2 + $0x20] sm:$0xc0]
    %v2436 = vld [vmem:[#allocation2 + $0x28] sm:$0xc0]
    %v2437 = vld [vmem:[#allocation2 + $0x30] sm:$0xc0]
    %v2438 = vld [vmem:[#allocation2 + $0x38] sm:$0xc0]
    %2439 = vmatprep.subr.mxu0 %v623
    %2440 = vmatpush1.msra.mxu0 %v622
    %2441 = vmatprep.subr.mxu0 %v627
    %2442 = vmatpush1.msra.mxu0 %v626
    %2443 = vmatprep.subr.mxu0 %v631
    %2444 = vmatpush1.msra.mxu0 %v630
    %2445 = vmatprep.subr.mxu0 %v635
    %2446 = vmatpush1.msra.mxu0 %v634
    %2447 = vmatprep.subr.mxu0 %v639
    %2448 = vmatpush1.msra.mxu0 %v638
    %2449 = vmatprep.subr.mxu0 %v643
    %2450 = vmatpush1.msra.mxu0 %v642
    %2451 = vmatprep.subr.mxu0 %v647
    %2452 = vmatpush1.msra.mxu0 %v646
    %2453 = vmatprep.subr.mxu0 %v651
    %2454 = vmatpush1.msra.mxu0 %v650
    %2455 = vmatprep.subr.mxu0 %v655
    %2456 = vmatpush1.msra.mxu0 %v654
    %2457 = vmatprep.subr.mxu0 %v659
    %2458 = vmatpush1.msra.mxu0 %v658
    %2459 = vmatprep.subr.mxu0 %v663
    %2460 = vmatpush1.msra.mxu0 %v662
    %2461 = vmatprep.subr.mxu0 %v667
    %2462 = vmatpush1.msra.mxu0 %v666
    %2463 = vmatprep.subr.mxu0 %v671
    %2464 = vmatpush1.msra.mxu0 %v670
    %2465 = vmatprep.subr.mxu0 %v675
    %2466 = vmatpush1.msra.mxu0 %v674
    %2467 = vmatprep.subr.mxu0 %v679
    %2468 = vmatpush1.msra.mxu0 %v678
    %2469 = vmatprep.subr.mxu0 %v683
    %2470 = vmatpush1.msra.mxu0 %v682
    %2471 = vmatprep.subr.mxu0 0.0
    %2472 = vmatpush1.msra.mxu0 0.0
    %2473 = vmatprep.subr.mxu0 0.0
    %2474 = vmatpush1.msra.mxu0 0.0
    %2475 = vmatprep.subr.mxu0 0.0
    %2476 = vmatpush1.msra.mxu0 0.0
    %2477 = vmatprep.subr.mxu0 0.0
    %2478 = vmatpush1.msra.mxu0 0.0
    %2479 = vmatprep.subr.mxu0 0.0
    %2480 = vmatpush1.msra.mxu0 0.0
    %2481 = vmatprep.subr.mxu0 0.0
    %2482 = vmatpush1.msra.mxu0 0.0
    %2483 = vmatprep.subr.mxu0 0.0
    %2484 = vmatpush1.msra.mxu0 0.0
    %2485 = vmatprep.subr.mxu0 0.0
    %2486 = vmatpush1.msra.mxu0 0.0
    %2487 = vmatprep.subr.mxu0 0.0
    %2488 = vmatpush1.msra.mxu0 0.0
    %2489 = vmatprep.subr.mxu0 0.0
    %2490 = vmatpush1.msra.mxu0 0.0
    %2491 = vmatprep.subr.mxu0 0.0
    %2492 = vmatpush1.msra.mxu0 0.0
    %2493 = vmatprep.subr.mxu0 0.0
    %2494 = vmatpush1.msra.mxu0 0.0
    %2495 = vmatprep.subr.mxu0 0.0
    %2496 = vmatpush1.msra.mxu0 0.0
    %2497 = vmatprep.subr.mxu0 0.0
    %2498 = vmatpush1.msra.mxu0 0.0
    %2499 = vmatprep.subr.mxu0 0.0
    %2500 = vmatpush1.msra.mxu0 0.0
    %2501 = vmatprep.subr.mxu0 0.0
    %2502 = vmatpush1.msra.mxu0 0.0
    %2503 = vmatprep.mubr.f32.mxu0 0.0
    %2504 = vmatmul.mubr.f32.gmra.mrb[0].mxu0 %v2243
    %v2505 = vpop.f32.mrb[0].mxu0
    %v2506 = vadd.f32 0.0, %v2505
    %v2507 = vpop.f32.mrb[0].mxu0
    %v2508 = vadd.f32 0.0, %v2507
    %2509 = vdwg.mxu0
    %2510 = vmatprep.subr.mxu0 %v625
    %2511 = vmatpush1.msra.mxu0 %v624
    %2512 = vmatprep.subr.mxu0 %v629
    %2513 = vmatpush1.msra.mxu0 %v628
    %2514 = vmatprep.subr.mxu0 %v633
    %2515 = vmatpush1.msra.mxu0 %v632
    %2516 = vmatprep.subr.mxu0 %v637
    %2517 = vmatpush1.msra.mxu0 %v636
    %2518 = vmatprep.subr.mxu0 %v641
    %2519 = vmatpush1.msra.mxu0 %v640
    %2520 = vmatprep.subr.mxu0 %v645
    %2521 = vmatpush1.msra.mxu0 %v644
    %2522 = vmatprep.subr.mxu0 %v649
    %2523 = vmatpush1.msra.mxu0 %v648
    %2524 = vmatprep.subr.mxu0 %v653
    %2525 = vmatpush1.msra.mxu0 %v652
    %2526 = vmatprep.subr.mxu0 %v657
    %2527 = vmatpush1.msra.mxu0 %v656
    %2528 = vmatprep.subr.mxu0 %v661
    %2529 = vmatpush1.msra.mxu0 %v660
    %2530 = vmatprep.subr.mxu0 %v665
    %2531 = vmatpush1.msra.mxu0 %v664
    %2532 = vmatprep.subr.mxu0 %v669
    %2533 = vmatpush1.msra.mxu0 %v668
    %2534 = vmatprep.subr.mxu0 %v673
    %2535 = vmatpush1.msra.mxu0 %v672
    %2536 = vmatprep.subr.mxu0 %v677
    %2537 = vmatpush1.msra.mxu0 %v676
    %2538 = vmatprep.subr.mxu0 %v681
    %2539 = vmatpush1.msra.mxu0 %v680
    %2540 = vmatprep.subr.mxu0 %v685
    %2541 = vmatpush1.msra.mxu0 %v684
    %2542 = vmatprep.subr.mxu0 0.0
    %2543 = vmatpush1.msra.mxu0 0.0
    %2544 = vmatprep.subr.mxu0 0.0
    %2545 = vmatpush1.msra.mxu0 0.0
    %2546 = vmatprep.subr.mxu0 0.0
    %2547 = vmatpush1.msra.mxu0 0.0
    %2548 = vmatprep.subr.mxu0 0.0
    %2549 = vmatpush1.msra.mxu0 0.0
    %2550 = vmatprep.subr.mxu0 0.0
    %2551 = vmatpush1.msra.mxu0 0.0
    %2552 = vmatprep.subr.mxu0 0.0
    %2553 = vmatpush1.msra.mxu0 0.0
    %2554 = vmatprep.subr.mxu0 0.0
    %2555 = vmatpush1.msra.mxu0 0.0
    %2556 = vmatprep.subr.mxu0 0.0
    %2557 = vmatpush1.msra.mxu0 0.0
    %2558 = vmatprep.subr.mxu0 0.0
    %2559 = vmatpush1.msra.mxu0 0.0
    %2560 = vmatprep.subr.mxu0 0.0
    %2561 = vmatpush1.msra.mxu0 0.0
    %2562 = vmatprep.subr.mxu0 0.0
    %2563 = vmatpush1.msra.mxu0 0.0
    %2564 = vmatprep.subr.mxu0 0.0
    %2565 = vmatpush1.msra.mxu0 0.0
    %2566 = vmatprep.subr.mxu0 0.0
    %2567 = vmatpush1.msra.mxu0 0.0
    %2568 = vmatprep.subr.mxu0 0.0
    %2569 = vmatpush1.msra.mxu0 0.0
    %2570 = vmatprep.subr.mxu0 0.0
    %2571 = vmatpush1.msra.mxu0 0.0
    %2572 = vmatprep.subr.mxu0 0.0
    %2573 = vmatpush1.msra.mxu0 0.0
    %2574 = vmatprep.mubr.f32.mxu0 0.0
    %2575 = vmatmul.mubr.f32.gmra.mrb[0].mxu0 %v2243
    %v2576 = vpop.f32.mrb[0].mxu0
    %v2577 = vadd.f32 0.0, %v2576
    %v2578 = vpop.f32.mrb[0].mxu0
    %v2579 = vadd.f32 0.0, %v2578
    %2580 = vdwg.mxu0
    %v2585 = vrot.slane %v2506, 2
    %v2586 = vrot.slane %v2508, 2
    %v2587 = vrot.slane %v2577, 2
    %v2588 = vrot.slane %v2579, 2
    %v2593 = vadd.f32 %v2435, %v2585
    %v2594 = vadd.f32 %v2436, %v2586
    %v2595 = vadd.f32 %v2437, %v2587
    %v2596 = vadd.f32 %v2438, %v2588
    %v2597 = vxor.u32 %v2593, 2147483648
    %v2598 = vmul.f32 %v2597, 1.442695
    %v2599 = vpow.pop %v2598
    %v2600 = vadd.f32 %v2599, 1.0
    %v2601 = vrcp.pop %v2600
    %v2602 = vmul.f32 1.0, %v2601
    %v2603 = vxor.u32 %v2594, 2147483648
    %v2604 = vmul.f32 %v2603, 1.442695
    %v2605 = vpow.pop %v2604
    %v2606 = vadd.f32 %v2605, 1.0
    %v2607 = vrcp.pop %v2606
    %v2608 = vmul.f32 1.0, %v2607
    %v2609 = vtanh.pop %v2595
    %v2610 = vxor.u32 %v2596, 2147483648
    %v2611 = vmul.f32 %v2610, 1.442695
    %v2612 = vpow.pop %v2611
    %v2613 = vadd.f32 %v2612, 1.0
    %v2614 = vrcp.pop %v2613
    %v2615 = vmul.f32 1.0, %v2614
    %v2617 = vrot.slane %v2241, 2
    %v2619 = vmul.f32 %v2608, %v2617
    %v2620 = vmul.f32 %v2602, %v2609
    %v2621 = vadd.f32 %v2619, %v2620
    %v2622 = vtanh.pop %v2621
    %v2623 = vmul.f32 %v2615, %v2622
    %v2624 = vmul.f32 %v2623, %v1066
    %v2625 = vsel %vm1069, %v2624, 0.0
    %2626 = vadd.xlane.f32.xlu0 %v2625
    %v2627 = vpop.xlane.xlu0 %2626
    %2628 = vst.msk [vmem:[%s8 - $0x6] sm:$0xc0] %vm2062, %v2627
    %v2629 = vld [vmem:[#allocation2 + $0x40] sm:$0xc]
    %v2630 = vld [vmem:[#allocation2 + $0x48] sm:$0xc]
    %v2631 = vld [vmem:[#allocation2 + $0x50] sm:$0xc]
    %v2632 = vld [vmem:[#allocation2 + $0x58] sm:$0xc]
    %2633 = vmatprep.subr.mxu0 %v558
    %2634 = vmatpush1.msra.mxu0 %v557
    %2635 = vmatprep.subr.mxu0 %v562
    %2636 = vmatpush1.msra.mxu0 %v561
    %2637 = vmatprep.subr.mxu0 %v566
    %2638 = vmatpush1.msra.mxu0 %v565
    %2639 = vmatprep.subr.mxu0 %v570
    %2640 = vmatpush1.msra.mxu0 %v569
    %2641 = vmatprep.subr.mxu0 %v574
    %2642 = vmatpush1.msra.mxu0 %v573
    %2643 = vmatprep.subr.mxu0 %v578
    %2644 = vmatpush1.msra.mxu0 %v577
    %2645 = vmatprep.subr.mxu0 %v582
    %2646 = vmatpush1.msra.mxu0 %v581
    %2647 = vmatprep.subr.mxu0 %v586
    %2648 = vmatpush1.msra.mxu0 %v585
    %2649 = vmatprep.subr.mxu0 %v590
    %2650 = vmatpush1.msra.mxu0 %v589
    %2651 = vmatprep.subr.mxu0 %v594
    %2652 = vmatpush1.msra.mxu0 %v593
    %2653 = vmatprep.subr.mxu0 %v598
    %2654 = vmatpush1.msra.mxu0 %v597
    %2655 = vmatprep.subr.mxu0 %v602
    %2656 = vmatpush1.msra.mxu0 %v601
    %2657 = vmatprep.subr.mxu0 %v606
    %2658 = vmatpush1.msra.mxu0 %v605
    %2659 = vmatprep.subr.mxu0 %v610
    %2660 = vmatpush1.msra.mxu0 %v609
    %2661 = vmatprep.subr.mxu0 %v614
    %2662 = vmatpush1.msra.mxu0 %v613
    %2663 = vmatprep.subr.mxu0 %v618
    %2664 = vmatpush1.msra.mxu0 %v617
    %2665 = vmatprep.subr.mxu0 0.0
    %2666 = vmatpush1.msra.mxu0 0.0
    %2667 = vmatprep.subr.mxu0 0.0
    %2668 = vmatpush1.msra.mxu0 0.0
    %2669 = vmatprep.subr.mxu0 0.0
    %2670 = vmatpush1.msra.mxu0 0.0
    %2671 = vmatprep.subr.mxu0 0.0
    %2672 = vmatpush1.msra.mxu0 0.0
    %2673 = vmatprep.subr.mxu0 0.0
    %2674 = vmatpush1.msra.mxu0 0.0
    %2675 = vmatprep.subr.mxu0 0.0
    %2676 = vmatpush1.msra.mxu0 0.0
    %2677 = vmatprep.subr.mxu0 0.0
    %2678 = vmatpush1.msra.mxu0 0.0
    %2679 = vmatprep.subr.mxu0 0.0
    %2680 = vmatpush1.msra.mxu0 0.0
    %2681 = vmatprep.subr.mxu0 0.0
    %2682 = vmatpush1.msra.mxu0 0.0
    %2683 = vmatprep.subr.mxu0 0.0
    %2684 = vmatpush1.msra.mxu0 0.0
    %2685 = vmatprep.subr.mxu0 0.0
    %2686 = vmatpush1.msra.mxu0 0.0
    %2687 = vmatprep.subr.mxu0 0.0
    %2688 = vmatpush1.msra.mxu0 0.0
    %2689 = vmatprep.subr.mxu0 0.0
    %2690 = vmatpush1.msra.mxu0 0.0
    %2691 = vmatprep.subr.mxu0 0.0
    %2692 = vmatpush1.msra.mxu0 0.0
    %2693 = vmatprep.subr.mxu0 0.0
    %2694 = vmatpush1.msra.mxu0 0.0
    %2695 = vmatprep.subr.mxu0 0.0
    %2696 = vmatpush1.msra.mxu0 0.0
    %2697 = vmatprep.mubr.f32.mxu0 0.0
    %2698 = vmatmul.mubr.f32.gmra.mrb[0].mxu0 %v2429
    %v2699 = vpop.f32.mrb[0].mxu0
    %v2700 = vadd.f32 0.0, %v2699
    %v2701 = vpop.f32.mrb[0].mxu0
    %v2702 = vadd.f32 0.0, %v2701
    %2703 = vdwg.mxu0
    %2704 = vmatprep.subr.mxu0 %v560
    %2705 = vmatpush1.msra.mxu0 %v559
    %2706 = vmatprep.subr.mxu0 %v564
    %2707 = vmatpush1.msra.mxu0 %v563
    %2708 = vmatprep.subr.mxu0 %v568
    %2709 = vmatpush1.msra.mxu0 %v567
    %2710 = vmatprep.subr.mxu0 %v572
    %2711 = vmatpush1.msra.mxu0 %v571
    %2712 = vmatprep.subr.mxu0 %v576
    %2713 = vmatpush1.msra.mxu0 %v575
    %2714 = vmatprep.subr.mxu0 %v580
    %2715 = vmatpush1.msra.mxu0 %v579
    %2716 = vmatprep.subr.mxu0 %v584
    %2717 = vmatpush1.msra.mxu0 %v583
    %2718 = vmatprep.subr.mxu0 %v588
    %2719 = vmatpush1.msra.mxu0 %v587
    %2720 = vmatprep.subr.mxu0 %v592
    %2721 = vmatpush1.msra.mxu0 %v591
    %2722 = vmatprep.subr.mxu0 %v596
    %2723 = vmatpush1.msra.mxu0 %v595
    %2724 = vmatprep.subr.mxu0 %v600
    %2725 = vmatpush1.msra.mxu0 %v599
    %2726 = vmatprep.subr.mxu0 %v604
    %2727 = vmatpush1.msra.mxu0 %v603
    %2728 = vmatprep.subr.mxu0 %v608
    %2729 = vmatpush1.msra.mxu0 %v607
    %2730 = vmatprep.subr.mxu0 %v612
    %2731 = vmatpush1.msra.mxu0 %v611
    %2732 = vmatprep.subr.mxu0 %v616
    %2733 = vmatpush1.msra.mxu0 %v615
    %2734 = vmatprep.subr.mxu0 %v620
    %2735 = vmatpush1.msra.mxu0 %v619
    %2736 = vmatprep.subr.mxu0 0.0
    %2737 = vmatpush1.msra.mxu0 0.0
    %2738 = vmatprep.subr.mxu0 0.0
    %2739 = vmatpush1.msra.mxu0 0.0
    %2740 = vmatprep.subr.mxu0 0.0
    %2741 = vmatpush1.msra.mxu0 0.0
    %2742 = vmatprep.subr.mxu0 0.0
    %2743 = vmatpush1.msra.mxu0 0.0
    %2744 = vmatprep.subr.mxu0 0.0
    %2745 = vmatpush1.msra.mxu0 0.0
    %2746 = vmatprep.subr.mxu0 0.0
    %2747 = vmatpush1.msra.mxu0 0.0
    %2748 = vmatprep.subr.mxu0 0.0
    %2749 = vmatpush1.msra.mxu0 0.0
    %2750 = vmatprep.subr.mxu0 0.0
    %2751 = vmatpush1.msra.mxu0 0.0
    %2752 = vmatprep.subr.mxu0 0.0
    %2753 = vmatpush1.msra.mxu0 0.0
    %2754 = vmatprep.subr.mxu0 0.0
    %2755 = vmatpush1.msra.mxu0 0.0
    %2756 = vmatprep.subr.mxu0 0.0
    %2757 = vmatpush1.msra.mxu0 0.0
    %2758 = vmatprep.subr.mxu0 0.0
    %2759 = vmatpush1.msra.mxu0 0.0
    %2760 = vmatprep.subr.mxu0 0.0
    %2761 = vmatpush1.msra.mxu0 0.0
    %2762 = vmatprep.subr.mxu0 0.0
    %2763 = vmatpush1.msra.mxu0 0.0
    %2764 = vmatprep.subr.mxu0 0.0
    %2765 = vmatpush1.msra.mxu0 0.0
    %2766 = vmatprep.subr.mxu0 0.0
    %2767 = vmatpush1.msra.mxu0 0.0
    %2768 = vmatprep.mubr.f32.mxu0 0.0
    %2769 = vmatmul.mubr.f32.gmra.mrb[0].mxu0 %v2429
    %v2770 = vpop.f32.mrb[0].mxu0
    %v2771 = vadd.f32 0.0, %v2770
    %v2772 = vpop.f32.mrb[0].mxu0
    %v2773 = vadd.f32 0.0, %v2772
    %2774 = vdwg.mxu0
    %v2779 = vrot.slane %v2700, 6
    %v2780 = vrot.slane %v2702, 6
    %v2781 = vrot.slane %v2771, 6
    %v2782 = vrot.slane %v2773, 6
    %v2787 = vadd.f32 %v2629, %v2779
    %v2788 = vadd.f32 %v2630, %v2780
    %v2789 = vadd.f32 %v2631, %v2781
    %v2790 = vadd.f32 %v2632, %v2782
    %v2791 = vxor.u32 %v2787, 2147483648
    %v2792 = vmul.f32 %v2791, 1.442695
    %v2793 = vpow.pop %v2792
    %v2794 = vadd.f32 %v2793, 1.0
    %v2795 = vrcp.pop %v2794
    %v2796 = vmul.f32 1.0, %v2795
    %v2797 = vxor.u32 %v2788, 2147483648
    %v2798 = vmul.f32 %v2797, 1.442695
    %v2799 = vpow.pop %v2798
    %v2800 = vadd.f32 %v2799, 1.0
    %v2801 = vrcp.pop %v2800
    %v2802 = vmul.f32 1.0, %v2801
    %v2803 = vtanh.pop %v2789
    %v2804 = vxor.u32 %v2790, 2147483648
    %v2805 = vmul.f32 %v2804, 1.442695
    %v2806 = vpow.pop %v2805
    %v2807 = vadd.f32 %v2806, 1.0
    %v2808 = vrcp.pop %v2807
    %v2809 = vmul.f32 1.0, %v2808
    %v2811 = vrot.slane %v2427, 6
    %v2813 = vmul.f32 %v2802, %v2811
    %v2814 = vmul.f32 %v2796, %v2803
    %v2815 = vadd.f32 %v2813, %v2814
    %v2816 = vtanh.pop %v2815
    %v2817 = vmul.f32 %v2809, %v2816
    %v2818 = vmul.f32 %v2817, %v867
    %v2819 = vsel %vm1265, %v2818, 0.0
    %2820 = vadd.xlane.f32.xlu0 %v2819
    %v2821 = vpop.xlane.xlu0 %2820
    %2822 = vst.msk [vmem:[%s7 - $0x2] sm:$0xc] %vm1864, %v2821
    %v2823 = vld [vmem:[#allocation2 + $0x20] sm:$0x30]
    %v2824 = vld [vmem:[#allocation2 + $0x28] sm:$0x30]
    %v2825 = vld [vmem:[#allocation2 + $0x30] sm:$0x30]
    %v2826 = vld [vmem:[#allocation2 + $0x38] sm:$0x30]
    %v2828 = vrot.slane %v2623, 6
    %2830 = vmatprep.subr.mxu0 %v623
    %2831 = vmatpush1.msra.mxu0 %v622
    %2832 = vmatprep.subr.mxu0 %v627
    %2833 = vmatpush1.msra.mxu0 %v626
    %2834 = vmatprep.subr.mxu0 %v631
    %2835 = vmatpush1.msra.mxu0 %v630
    %2836 = vmatprep.subr.mxu0 %v635
    %2837 = vmatpush1.msra.mxu0 %v634
    %2838 = vmatprep.subr.mxu0 %v639
    %2839 = vmatpush1.msra.mxu0 %v638
    %2840 = vmatprep.subr.mxu0 %v643
    %2841 = vmatpush1.msra.mxu0 %v642
    %2842 = vmatprep.subr.mxu0 %v647
    %2843 = vmatpush1.msra.mxu0 %v646
    %2844 = vmatprep.subr.mxu0 %v651
    %2845 = vmatpush1.msra.mxu0 %v650
    %2846 = vmatprep.subr.mxu0 %v655
    %2847 = vmatpush1.msra.mxu0 %v654
    %2848 = vmatprep.subr.mxu0 %v659
    %2849 = vmatpush1.msra.mxu0 %v658
    %2850 = vmatprep.subr.mxu0 %v663
    %2851 = vmatpush1.msra.mxu0 %v662
    %2852 = vmatprep.subr.mxu0 %v667
    %2853 = vmatpush1.msra.mxu0 %v666
    %2854 = vmatprep.subr.mxu0 %v671
    %2855 = vmatpush1.msra.mxu0 %v670
    %2856 = vmatprep.subr.mxu0 %v675
    %2857 = vmatpush1.msra.mxu0 %v674
    %2858 = vmatprep.subr.mxu0 %v679
    %2859 = vmatpush1.msra.mxu0 %v678
    %2860 = vmatprep.subr.mxu0 %v683
    %2861 = vmatpush1.msra.mxu0 %v682
    %2862 = vmatprep.subr.mxu0 0.0
    %2863 = vmatpush1.msra.mxu0 0.0
    %2864 = vmatprep.subr.mxu0 0.0
    %2865 = vmatpush1.msra.mxu0 0.0
    %2866 = vmatprep.subr.mxu0 0.0
    %2867 = vmatpush1.msra.mxu0 0.0
    %2868 = vmatprep.subr.mxu0 0.0
    %2869 = vmatpush1.msra.mxu0 0.0
    %2870 = vmatprep.subr.mxu0 0.0
    %2871 = vmatpush1.msra.mxu0 0.0
    %2872 = vmatprep.subr.mxu0 0.0
    %2873 = vmatpush1.msra.mxu0 0.0
    %2874 = vmatprep.subr.mxu0 0.0
    %2875 = vmatpush1.msra.mxu0 0.0
    %2876 = vmatprep.subr.mxu0 0.0
    %2877 = vmatpush1.msra.mxu0 0.0
    %2878 = vmatprep.subr.mxu0 0.0
    %2879 = vmatpush1.msra.mxu0 0.0
    %2880 = vmatprep.subr.mxu0 0.0
    %2881 = vmatpush1.msra.mxu0 0.0
    %2882 = vmatprep.subr.mxu0 0.0
    %2883 = vmatpush1.msra.mxu0 0.0
    %2884 = vmatprep.subr.mxu0 0.0
    %2885 = vmatpush1.msra.mxu0 0.0
    %2886 = vmatprep.subr.mxu0 0.0
    %2887 = vmatpush1.msra.mxu0 0.0
    %2888 = vmatprep.subr.mxu0 0.0
    %2889 = vmatpush1.msra.mxu0 0.0
    %2890 = vmatprep.subr.mxu0 0.0
    %2891 = vmatpush1.msra.mxu0 0.0
    %2892 = vmatprep.subr.mxu0 0.0
    %2893 = vmatpush1.msra.mxu0 0.0
    %2894 = vmatprep.mubr.f32.mxu0 0.0
    %2895 = vmatmul.mubr.f32.gmra.mrb[0].mxu0 %v2828
    %v2896 = vpop.f32.mrb[0].mxu0
    %v2897 = vadd.f32 0.0, %v2896
    %v2898 = vpop.f32.mrb[0].mxu0
    %v2899 = vadd.f32 0.0, %v2898
    %2900 = vdwg.mxu0
    %2901 = vmatprep.subr.mxu0 %v625
    %2902 = vmatpush1.msra.mxu0 %v624
    %2903 = vmatprep.subr.mxu0 %v629
    %2904 = vmatpush1.msra.mxu0 %v628
    %2905 = vmatprep.subr.mxu0 %v633
    %2906 = vmatpush1.msra.mxu0 %v632
    %2907 = vmatprep.subr.mxu0 %v637
    %2908 = vmatpush1.msra.mxu0 %v636
    %2909 = vmatprep.subr.mxu0 %v641
    %2910 = vmatpush1.msra.mxu0 %v640
    %2911 = vmatprep.subr.mxu0 %v645
    %2912 = vmatpush1.msra.mxu0 %v644
    %2913 = vmatprep.subr.mxu0 %v649
    %2914 = vmatpush1.msra.mxu0 %v648
    %2915 = vmatprep.subr.mxu0 %v653
    %2916 = vmatpush1.msra.mxu0 %v652
    %2917 = vmatprep.subr.mxu0 %v657
    %2918 = vmatpush1.msra.mxu0 %v656
    %2919 = vmatprep.subr.mxu0 %v661
    %2920 = vmatpush1.msra.mxu0 %v660
    %2921 = vmatprep.subr.mxu0 %v665
    %2922 = vmatpush1.msra.mxu0 %v664
    %2923 = vmatprep.subr.mxu0 %v669
    %2924 = vmatpush1.msra.mxu0 %v668
    %2925 = vmatprep.subr.mxu0 %v673
    %2926 = vmatpush1.msra.mxu0 %v672
    %2927 = vmatprep.subr.mxu0 %v677
    %2928 = vmatpush1.msra.mxu0 %v676
    %2929 = vmatprep.subr.mxu0 %v681
    %2930 = vmatpush1.msra.mxu0 %v680
    %2931 = vmatprep.subr.mxu0 %v685
    %2932 = vmatpush1.msra.mxu0 %v684
    %2933 = vmatprep.subr.mxu0 0.0
    %2934 = vmatpush1.msra.mxu0 0.0
    %2935 = vmatprep.subr.mxu0 0.0
    %2936 = vmatpush1.msra.mxu0 0.0
    %2937 = vmatprep.subr.mxu0 0.0
    %2938 = vmatpush1.msra.mxu0 0.0
    %2939 = vmatprep.subr.mxu0 0.0
    %2940 = vmatpush1.msra.mxu0 0.0
    %2941 = vmatprep.subr.mxu0 0.0
    %2942 = vmatpush1.msra.mxu0 0.0
    %2943 = vmatprep.subr.mxu0 0.0
    %2944 = vmatpush1.msra.mxu0 0.0
    %2945 = vmatprep.subr.mxu0 0.0
    %2946 = vmatpush1.msra.mxu0 0.0
    %2947 = vmatprep.subr.mxu0 0.0
    %2948 = vmatpush1.msra.mxu0 0.0
    %2949 = vmatprep.subr.mxu0 0.0
    %2950 = vmatpush1.msra.mxu0 0.0
    %2951 = vmatprep.subr.mxu0 0.0
    %2952 = vmatpush1.msra.mxu0 0.0
    %2953 = vmatprep.subr.mxu0 0.0
    %2954 = vmatpush1.msra.mxu0 0.0
    %2955 = vmatprep.subr.mxu0 0.0
    %2956 = vmatpush1.msra.mxu0 0.0
    %2957 = vmatprep.subr.mxu0 0.0
    %2958 = vmatpush1.msra.mxu0 0.0
    %2959 = vmatprep.subr.mxu0 0.0
    %2960 = vmatpush1.msra.mxu0 0.0
    %2961 = vmatprep.subr.mxu0 0.0
    %2962 = vmatpush1.msra.mxu0 0.0
    %2963 = vmatprep.subr.mxu0 0.0
    %2964 = vmatpush1.msra.mxu0 0.0
    %2965 = vmatprep.mubr.f32.mxu0 0.0
    %2966 = vmatmul.mubr.f32.gmra.mrb[0].mxu0 %v2828
    %v2967 = vpop.f32.mrb[0].mxu0
    %v2968 = vadd.f32 0.0, %v2967
    %v2969 = vpop.f32.mrb[0].mxu0
    %v2970 = vadd.f32 0.0, %v2969
    %2971 = vdwg.mxu0
    %v2976 = vrot.slane %v2897, 4
    %v2977 = vrot.slane %v2899, 4
    %v2978 = vrot.slane %v2968, 4
    %v2979 = vrot.slane %v2970, 4
    %v2984 = vadd.f32 %v2823, %v2976
    %v2985 = vadd.f32 %v2824, %v2977
    %v2986 = vadd.f32 %v2825, %v2978
    %v2987 = vadd.f32 %v2826, %v2979
    %v2988 = vxor.u32 %v2984, 2147483648
    %v2989 = vmul.f32 %v2988, 1.442695
    %v2990 = vpow.pop %v2989
    %v2991 = vadd.f32 %v2990, 1.0
    %v2992 = vrcp.pop %v2991
    %v2993 = vmul.f32 1.0, %v2992
    %v2994 = vxor.u32 %v2985, 2147483648
    %v2995 = vmul.f32 %v2994, 1.442695
    %v2996 = vpow.pop %v2995
    %v2997 = vadd.f32 %v2996, 1.0
    %v2998 = vrcp.pop %v2997
    %v2999 = vmul.f32 1.0, %v2998
    %v3000 = vtanh.pop %v2986
    %v3001 = vxor.u32 %v2987, 2147483648
    %v3002 = vmul.f32 %v3001, 1.442695
    %v3003 = vpow.pop %v3002
    %v3004 = vadd.f32 %v3003, 1.0
    %v3005 = vrcp.pop %v3004
    %v3006 = vmul.f32 1.0, %v3005
    %v3008 = vrot.slane %v2621, 2
    %v3010 = vmul.f32 %v2999, %v3008
    %v3011 = vmul.f32 %v2993, %v3000
    %v3012 = vadd.f32 %v3010, %v3011
    %v3013 = vtanh.pop %v3012
    %v3014 = vmul.f32 %v3006, %v3013
    %v3015 = vmul.f32 %v3014, %v1066
    %v3016 = vsel %vm1464, %v3015, 0.0
    %3017 = vadd.xlane.f32.xlu0 %v3016
    %v3018 = vpop.xlane.xlu0 %3017
    %3019 = vst.msk [vmem:[%s8 - $0x4] sm:$0x30] %vm1666, %v3018
    %v3020 = vld [vmem:[#allocation2 + $0x40] sm:$0x30]
    %v3021 = vld [vmem:[#allocation2 + $0x48] sm:$0x30]
    %v3022 = vld [vmem:[#allocation2 + $0x50] sm:$0x30]
    %v3023 = vld [vmem:[#allocation2 + $0x58] sm:$0x30]
    %v3025 = vrot.slane %v2817, 2
    %3027 = vmatprep.subr.mxu0 %v558
    %3028 = vmatpush1.msra.mxu0 %v557
    %3029 = vmatprep.subr.mxu0 %v562
    %3030 = vmatpush1.msra.mxu0 %v561
    %3031 = vmatprep.subr.mxu0 %v566
    %3032 = vmatpush1.msra.mxu0 %v565
    %3033 = vmatprep.subr.mxu0 %v570
    %3034 = vmatpush1.msra.mxu0 %v569
    %3035 = vmatprep.subr.mxu0 %v574
    %3036 = vmatpush1.msra.mxu0 %v573
    %3037 = vmatprep.subr.mxu0 %v578
    %3038 = vmatpush1.msra.mxu0 %v577
    %3039 = vmatprep.subr.mxu0 %v582
    %3040 = vmatpush1.msra.mxu0 %v581
    %3041 = vmatprep.subr.mxu0 %v586
    %3042 = vmatpush1.msra.mxu0 %v585
    %3043 = vmatprep.subr.mxu0 %v590
    %3044 = vmatpush1.msra.mxu0 %v589
    %3045 = vmatprep.subr.mxu0 %v594
    %3046 = vmatpush1.msra.mxu0 %v593
    %3047 = vmatprep.subr.mxu0 %v598
    %3048 = vmatpush1.msra.mxu0 %v597
    %3049 = vmatprep.subr.mxu0 %v602
    %3050 = vmatpush1.msra.mxu0 %v601
    %3051 = vmatprep.subr.mxu0 %v606
    %3052 = vmatpush1.msra.mxu0 %v605
    %3053 = vmatprep.subr.mxu0 %v610
    %3054 = vmatpush1.msra.mxu0 %v609
    %3055 = vmatprep.subr.mxu0 %v614
    %3056 = vmatpush1.msra.mxu0 %v613
    %3057 = vmatprep.subr.mxu0 %v618
    %3058 = vmatpush1.msra.mxu0 %v617
    %3059 = vmatprep.subr.mxu0 0.0
    %3060 = vmatpush1.msra.mxu0 0.0
    %3061 = vmatprep.subr.mxu0 0.0
    %3062 = vmatpush1.msra.mxu0 0.0
    %3063 = vmatprep.subr.mxu0 0.0
    %3064 = vmatpush1.msra.mxu0 0.0
    %3065 = vmatprep.subr.mxu0 0.0
    %3066 = vmatpush1.msra.mxu0 0.0
    %3067 = vmatprep.subr.mxu0 0.0
    %3068 = vmatpush1.msra.mxu0 0.0
    %3069 = vmatprep.subr.mxu0 0.0
    %3070 = vmatpush1.msra.mxu0 0.0
    %3071 = vmatprep.subr.mxu0 0.0
    %3072 = vmatpush1.msra.mxu0 0.0
    %3073 = vmatprep.subr.mxu0 0.0
    %3074 = vmatpush1.msra.mxu0 0.0
    %3075 = vmatprep.subr.mxu0 0.0
    %3076 = vmatpush1.msra.mxu0 0.0
    %3077 = vmatprep.subr.mxu0 0.0
    %3078 = vmatpush1.msra.mxu0 0.0
    %3079 = vmatprep.subr.mxu0 0.0
    %3080 = vmatpush1.msra.mxu0 0.0
    %3081 = vmatprep.subr.mxu0 0.0
    %3082 = vmatpush1.msra.mxu0 0.0
    %3083 = vmatprep.subr.mxu0 0.0
    %3084 = vmatpush1.msra.mxu0 0.0
    %3085 = vmatprep.subr.mxu0 0.0
    %3086 = vmatpush1.msra.mxu0 0.0
    %3087 = vmatprep.subr.mxu0 0.0
    %3088 = vmatpush1.msra.mxu0 0.0
    %3089 = vmatprep.subr.mxu0 0.0
    %3090 = vmatpush1.msra.mxu0 0.0
    %3091 = vmatprep.mubr.f32.mxu0 0.0
    %3092 = vmatmul.mubr.f32.gmra.mrb[0].mxu0 %v3025
    %v3093 = vpop.f32.mrb[0].mxu0
    %v3094 = vadd.f32 0.0, %v3093
    %v3095 = vpop.f32.mrb[0].mxu0
    %v3096 = vadd.f32 0.0, %v3095
    %3097 = vdwg.mxu0
    %3098 = vmatprep.subr.mxu0 %v560
    %3099 = vmatpush1.msra.mxu0 %v559
    %3100 = vmatprep.subr.mxu0 %v564
    %3101 = vmatpush1.msra.mxu0 %v563
    %3102 = vmatprep.subr.mxu0 %v568
    %3103 = vmatpush1.msra.mxu0 %v567
    %3104 = vmatprep.subr.mxu0 %v572
    %3105 = vmatpush1.msra.mxu0 %v571
    %3106 = vmatprep.subr.mxu0 %v576
    %3107 = vmatpush1.msra.mxu0 %v575
    %3108 = vmatprep.subr.mxu0 %v580
    %3109 = vmatpush1.msra.mxu0 %v579
    %3110 = vmatprep.subr.mxu0 %v584
    %3111 = vmatpush1.msra.mxu0 %v583
    %3112 = vmatprep.subr.mxu0 %v588
    %3113 = vmatpush1.msra.mxu0 %v587
    %3114 = vmatprep.subr.mxu0 %v592
    %3115 = vmatpush1.msra.mxu0 %v591
    %3116 = vmatprep.subr.mxu0 %v596
    %3117 = vmatpush1.msra.mxu0 %v595
    %3118 = vmatprep.subr.mxu0 %v600
    %3119 = vmatpush1.msra.mxu0 %v599
    %3120 = vmatprep.subr.mxu0 %v604
    %3121 = vmatpush1.msra.mxu0 %v603
    %3122 = vmatprep.subr.mxu0 %v608
    %3123 = vmatpush1.msra.mxu0 %v607
    %3124 = vmatprep.subr.mxu0 %v612
    %3125 = vmatpush1.msra.mxu0 %v611
    %3126 = vmatprep.subr.mxu0 %v616
    %3127 = vmatpush1.msra.mxu0 %v615
    %3128 = vmatprep.subr.mxu0 %v620
    %3129 = vmatpush1.msra.mxu0 %v619
    %3130 = vmatprep.subr.mxu0 0.0
    %3131 = vmatpush1.msra.mxu0 0.0
    %3132 = vmatprep.subr.mxu0 0.0
    %3133 = vmatpush1.msra.mxu0 0.0
    %3134 = vmatprep.subr.mxu0 0.0
    %3135 = vmatpush1.msra.mxu0 0.0
    %3136 = vmatprep.subr.mxu0 0.0
    %3137 = vmatpush1.msra.mxu0 0.0
    %3138 = vmatprep.subr.mxu0 0.0
    %3139 = vmatpush1.msra.mxu0 0.0
    %3140 = vmatprep.subr.mxu0 0.0
    %3141 = vmatpush1.msra.mxu0 0.0
    %3142 = vmatprep.subr.mxu0 0.0
    %3143 = vmatpush1.msra.mxu0 0.0
    %3144 = vmatprep.subr.mxu0 0.0
    %3145 = vmatpush1.msra.mxu0 0.0
    %3146 = vmatprep.subr.mxu0 0.0
    %3147 = vmatpush1.msra.mxu0 0.0
    %3148 = vmatprep.subr.mxu0 0.0
    %3149 = vmatpush1.msra.mxu0 0.0
    %3150 = vmatprep.subr.mxu0 0.0
    %3151 = vmatpush1.msra.mxu0 0.0
    %3152 = vmatprep.subr.mxu0 0.0
    %3153 = vmatpush1.msra.mxu0 0.0
    %3154 = vmatprep.subr.mxu0 0.0
    %3155 = vmatpush1.msra.mxu0 0.0
    %3156 = vmatprep.subr.mxu0 0.0
    %3157 = vmatpush1.msra.mxu0 0.0
    %3158 = vmatprep.subr.mxu0 0.0
    %3159 = vmatpush1.msra.mxu0 0.0
    %3160 = vmatprep.subr.mxu0 0.0
    %3161 = vmatpush1.msra.mxu0 0.0
    %3162 = vmatprep.mubr.f32.mxu0 0.0
    %3163 = vmatmul.mubr.f32.gmra.mrb[0].mxu0 %v3025
    %v3164 = vpop.f32.mrb[0].mxu0
    %v3165 = vadd.f32 0.0, %v3164
    %v3166 = vpop.f32.mrb[0].mxu0
    %v3167 = vadd.f32 0.0, %v3166
    %3168 = vdwg.mxu0
    %v3173 = vrot.slane %v3094, 4
    %v3174 = vrot.slane %v3096, 4
    %v3175 = vrot.slane %v3165, 4
    %v3176 = vrot.slane %v3167, 4
    %v3181 = vadd.f32 %v3020, %v3173
    %v3182 = vadd.f32 %v3021, %v3174
    %v3183 = vadd.f32 %v3022, %v3175
    %v3184 = vadd.f32 %v3023, %v3176
    %v3185 = vxor.u32 %v3181, 2147483648
    %v3186 = vmul.f32 %v3185, 1.442695
    %v3187 = vpow.pop %v3186
    %v3188 = vadd.f32 %v3187, 1.0
    %v3189 = vrcp.pop %v3188
    %v3190 = vmul.f32 1.0, %v3189
    %v3191 = vxor.u32 %v3182, 2147483648
    %v3192 = vmul.f32 %v3191, 1.442695
    %v3193 = vpow.pop %v3192
    %v3194 = vadd.f32 %v3193, 1.0
    %v3195 = vrcp.pop %v3194
    %v3196 = vmul.f32 1.0, %v3195
    %v3197 = vtanh.pop %v3183
    %v3198 = vxor.u32 %v3184, 2147483648
    %v3199 = vmul.f32 %v3198, 1.442695
    %v3200 = vpow.pop %v3199
    %v3201 = vadd.f32 %v3200, 1.0
    %v3202 = vrcp.pop %v3201
    %v3203 = vmul.f32 1.0, %v3202
    %v3205 = vrot.slane %v2815, 6
    %v3207 = vmul.f32 %v3196, %v3205
    %v3208 = vmul.f32 %v3190, %v3197
    %v3209 = vadd.f32 %v3207, %v3208
    %v3210 = vtanh.pop %v3209
    %v3211 = vmul.f32 %v3203, %v3210
    %v3212 = vmul.f32 %v3211, %v867
    %v3213 = vsel %vm1464, %v3212, 0.0
    %3214 = vadd.xlane.f32.xlu0 %v3213
    %v3215 = vpop.xlane.xlu0 %3214
    %3216 = vst.msk [vmem:[%s7 - $0x4] sm:$0x30] %vm1468, %v3215
    %v3217 = vld [vmem:[#allocation2 + $0x20] sm:$0xc]
    %v3218 = vld [vmem:[#allocation2 + $0x28] sm:$0xc]
    %v3219 = vld [vmem:[#allocation2 + $0x30] sm:$0xc]
    %v3220 = vld [vmem:[#allocation2 + $0x38] sm:$0xc]
    %v3222 = vrot.slane %v3014, 4
    %3224 = vmatprep.subr.mxu0 %v623
    %3225 = vmatpush1.msra.mxu0 %v622
    %3226 = vmatprep.subr.mxu0 %v627
    %3227 = vmatpush1.msra.mxu0 %v626
    %3228 = vmatprep.subr.mxu0 %v631
    %3229 = vmatpush1.msra.mxu0 %v630
    %3230 = vmatprep.subr.mxu0 %v635
    %3231 = vmatpush1.msra.mxu0 %v634
    %3232 = vmatprep.subr.mxu0 %v639
    %3233 = vmatpush1.msra.mxu0 %v638
    %3234 = vmatprep.subr.mxu0 %v643
    %3235 = vmatpush1.msra.mxu0 %v642
    %3236 = vmatprep.subr.mxu0 %v647
    %3237 = vmatpush1.msra.mxu0 %v646
    %3238 = vmatprep.subr.mxu0 %v651
    %3239 = vmatpush1.msra.mxu0 %v650
    %3240 = vmatprep.subr.mxu0 %v655
    %3241 = vmatpush1.msra.mxu0 %v654
    %3242 = vmatprep.subr.mxu0 %v659
    %3243 = vmatpush1.msra.mxu0 %v658
    %3244 = vmatprep.subr.mxu0 %v663
    %3245 = vmatpush1.msra.mxu0 %v662
    %3246 = vmatprep.subr.mxu0 %v667
    %3247 = vmatpush1.msra.mxu0 %v666
    %3248 = vmatprep.subr.mxu0 %v671
    %3249 = vmatpush1.msra.mxu0 %v670
    %3250 = vmatprep.subr.mxu0 %v675
    %3251 = vmatpush1.msra.mxu0 %v674
    %3252 = vmatprep.subr.mxu0 %v679
    %3253 = vmatpush1.msra.mxu0 %v678
    %3254 = vmatprep.subr.mxu0 %v683
    %3255 = vmatpush1.msra.mxu0 %v682
    %3256 = vmatprep.subr.mxu0 0.0
    %3257 = vmatpush1.msra.mxu0 0.0
    %3258 = vmatprep.subr.mxu0 0.0
    %3259 = vmatpush1.msra.mxu0 0.0
    %3260 = vmatprep.subr.mxu0 0.0
    %3261 = vmatpush1.msra.mxu0 0.0
    %3262 = vmatprep.subr.mxu0 0.0
    %3263 = vmatpush1.msra.mxu0 0.0
    %3264 = vmatprep.subr.mxu0 0.0
    %3265 = vmatpush1.msra.mxu0 0.0
    %3266 = vmatprep.subr.mxu0 0.0
    %3267 = vmatpush1.msra.mxu0 0.0
    %3268 = vmatprep.subr.mxu0 0.0
    %3269 = vmatpush1.msra.mxu0 0.0
    %3270 = vmatprep.subr.mxu0 0.0
    %3271 = vmatpush1.msra.mxu0 0.0
    %3272 = vmatprep.subr.mxu0 0.0
    %3273 = vmatpush1.msra.mxu0 0.0
    %3274 = vmatprep.subr.mxu0 0.0
    %3275 = vmatpush1.msra.mxu0 0.0
    %3276 = vmatprep.subr.mxu0 0.0
    %3277 = vmatpush1.msra.mxu0 0.0
    %3278 = vmatprep.subr.mxu0 0.0
    %3279 = vmatpush1.msra.mxu0 0.0
    %3280 = vmatprep.subr.mxu0 0.0
    %3281 = vmatpush1.msra.mxu0 0.0
    %3282 = vmatprep.subr.mxu0 0.0
    %3283 = vmatpush1.msra.mxu0 0.0
    %3284 = vmatprep.subr.mxu0 0.0
    %3285 = vmatpush1.msra.mxu0 0.0
    %3286 = vmatprep.subr.mxu0 0.0
    %3287 = vmatpush1.msra.mxu0 0.0
    %3288 = vmatprep.mubr.f32.mxu0 0.0
    %3289 = vmatmul.mubr.f32.gmra.mrb[0].mxu0 %v3222
    %v3290 = vpop.f32.mrb[0].mxu0
    %v3291 = vadd.f32 0.0, %v3290
    %v3292 = vpop.f32.mrb[0].mxu0
    %v3293 = vadd.f32 0.0, %v3292
    %3294 = vdwg.mxu0
    %3295 = vmatprep.subr.mxu0 %v625
    %3296 = vmatpush1.msra.mxu0 %v624
    %3297 = vmatprep.subr.mxu0 %v629
    %3298 = vmatpush1.msra.mxu0 %v628
    %3299 = vmatprep.subr.mxu0 %v633
    %3300 = vmatpush1.msra.mxu0 %v632
    %3301 = vmatprep.subr.mxu0 %v637
    %3302 = vmatpush1.msra.mxu0 %v636
    %3303 = vmatprep.subr.mxu0 %v641
    %3304 = vmatpush1.msra.mxu0 %v640
    %3305 = vmatprep.subr.mxu0 %v645
    %3306 = vmatpush1.msra.mxu0 %v644
    %3307 = vmatprep.subr.mxu0 %v649
    %3308 = vmatpush1.msra.mxu0 %v648
    %3309 = vmatprep.subr.mxu0 %v653
    %3310 = vmatpush1.msra.mxu0 %v652
    %3311 = vmatprep.subr.mxu0 %v657
    %3312 = vmatpush1.msra.mxu0 %v656
    %3313 = vmatprep.subr.mxu0 %v661
    %3314 = vmatpush1.msra.mxu0 %v660
    %3315 = vmatprep.subr.mxu0 %v665
    %3316 = vmatpush1.msra.mxu0 %v664
    %3317 = vmatprep.subr.mxu0 %v669
    %3318 = vmatpush1.msra.mxu0 %v668
    %3319 = vmatprep.subr.mxu0 %v673
    %3320 = vmatpush1.msra.mxu0 %v672
    %3321 = vmatprep.subr.mxu0 %v677
    %3322 = vmatpush1.msra.mxu0 %v676
    %3323 = vmatprep.subr.mxu0 %v681
    %3324 = vmatpush1.msra.mxu0 %v680
    %3325 = vmatprep.subr.mxu0 %v685
    %3326 = vmatpush1.msra.mxu0 %v684
    %3327 = vmatprep.subr.mxu0 0.0
    %3328 = vmatpush1.msra.mxu0 0.0
    %3329 = vmatprep.subr.mxu0 0.0
    %3330 = vmatpush1.msra.mxu0 0.0
    %3331 = vmatprep.subr.mxu0 0.0
    %3332 = vmatpush1.msra.mxu0 0.0
    %3333 = vmatprep.subr.mxu0 0.0
    %3334 = vmatpush1.msra.mxu0 0.0
    %3335 = vmatprep.subr.mxu0 0.0
    %3336 = vmatpush1.msra.mxu0 0.0
    %3337 = vmatprep.subr.mxu0 0.0
    %3338 = vmatpush1.msra.mxu0 0.0
    %3339 = vmatprep.subr.mxu0 0.0
    %3340 = vmatpush1.msra.mxu0 0.0
    %3341 = vmatprep.subr.mxu0 0.0
    %3342 = vmatpush1.msra.mxu0 0.0
    %3343 = vmatprep.subr.mxu0 0.0
    %3344 = vmatpush1.msra.mxu0 0.0
    %3345 = vmatprep.subr.mxu0 0.0
    %3346 = vmatpush1.msra.mxu0 0.0
    %3347 = vmatprep.subr.mxu0 0.0
    %3348 = vmatpush1.msra.mxu0 0.0
    %3349 = vmatprep.subr.mxu0 0.0
    %3350 = vmatpush1.msra.mxu0 0.0
    %3351 = vmatprep.subr.mxu0 0.0
    %3352 = vmatpush1.msra.mxu0 0.0
    %3353 = vmatprep.subr.mxu0 0.0
    %3354 = vmatpush1.msra.mxu0 0.0
    %3355 = vmatprep.subr.mxu0 0.0
    %3356 = vmatpush1.msra.mxu0 0.0
    %3357 = vmatprep.subr.mxu0 0.0
    %3358 = vmatpush1.msra.mxu0 0.0
    %3359 = vmatprep.mubr.f32.mxu0 0.0
    %3360 = vmatmul.mubr.f32.gmra.mrb[0].mxu0 %v3222
    %v3361 = vpop.f32.mrb[0].mxu0
    %v3362 = vadd.f32 0.0, %v3361
    %v3363 = vpop.f32.mrb[0].mxu0
    %v3364 = vadd.f32 0.0, %v3363
    %3365 = vdwg.mxu0
    %v3370 = vrot.slane %v3291, 6
    %v3371 = vrot.slane %v3293, 6
    %v3372 = vrot.slane %v3362, 6
    %v3373 = vrot.slane %v3364, 6
    %v3378 = vadd.f32 %v3217, %v3370
    %v3379 = vadd.f32 %v3218, %v3371
    %v3380 = vadd.f32 %v3219, %v3372
    %v3381 = vadd.f32 %v3220, %v3373
    %v3382 = vxor.u32 %v3378, 2147483648
    %v3383 = vmul.f32 %v3382, 1.442695
    %v3384 = vpow.pop %v3383
    %v3385 = vadd.f32 %v3384, 1.0
    %v3386 = vrcp.pop %v3385
    %v3387 = vmul.f32 1.0, %v3386
    %v3388 = vxor.u32 %v3379, 2147483648
    %v3389 = vmul.f32 %v3388, 1.442695
    %v3390 = vpow.pop %v3389
    %v3391 = vadd.f32 %v3390, 1.0
    %v3392 = vrcp.pop %v3391
    %v3393 = vmul.f32 1.0, %v3392
    %v3394 = vtanh.pop %v3380
    %v3395 = vxor.u32 %v3381, 2147483648
    %v3396 = vmul.f32 %v3395, 1.442695
    %v3397 = vpow.pop %v3396
    %v3398 = vadd.f32 %v3397, 1.0
    %v3399 = vrcp.pop %v3398
    %v3400 = vmul.f32 1.0, %v3399
    %v3402 = vrot.slane %v3012, 2
    %v3404 = vmul.f32 %v3393, %v3402
    %v3405 = vmul.f32 %v3387, %v3394
    %v3406 = vadd.f32 %v3404, %v3405
    %v3407 = vtanh.pop %v3406
    %v3408 = vmul.f32 %v3400, %v3407
    %v3409 = vmul.f32 %v3408, %v1066
    %v3410 = vsel %vm1265, %v3409, 0.0
    %3411 = vadd.xlane.f32.xlu0 %v3410
    %v3412 = vpop.xlane.xlu0 %3411
    %3413 = vst.msk [vmem:[%s8 - $0x2] sm:$0xc] %vm1269, %v3412
    %v3414 = vld [vmem:[#allocation2 + $0x40] sm:$0xc0]
    %v3415 = vld [vmem:[#allocation2 + $0x48] sm:$0xc0]
    %v3416 = vld [vmem:[#allocation2 + $0x50] sm:$0xc0]
    %v3417 = vld [vmem:[#allocation2 + $0x58] sm:$0xc0]
    %v3419 = vrot.slane %v3211, 4
    %3421 = vmatprep.subr.mxu0 %v558
    %3422 = vmatpush1.msra.mxu0 %v557
    %3423 = vmatprep.subr.mxu0 %v562
    %3424 = vmatpush1.msra.mxu0 %v561
    %3425 = vmatprep.subr.mxu0 %v566
    %3426 = vmatpush1.msra.mxu0 %v565
    %3427 = vmatprep.subr.mxu0 %v570
    %3428 = vmatpush1.msra.mxu0 %v569
    %3429 = vmatprep.subr.mxu0 %v574
    %3430 = vmatpush1.msra.mxu0 %v573
    %3431 = vmatprep.subr.mxu0 %v578
    %3432 = vmatpush1.msra.mxu0 %v577
    %3433 = vmatprep.subr.mxu0 %v582
    %3434 = vmatpush1.msra.mxu0 %v581
    %3435 = vmatprep.subr.mxu0 %v586
    %3436 = vmatpush1.msra.mxu0 %v585
    %3437 = vmatprep.subr.mxu0 %v590
    %3438 = vmatpush1.msra.mxu0 %v589
    %3439 = vmatprep.subr.mxu0 %v594
    %3440 = vmatpush1.msra.mxu0 %v593
    %3441 = vmatprep.subr.mxu0 %v598
    %3442 = vmatpush1.msra.mxu0 %v597
    %3443 = vmatprep.subr.mxu0 %v602
    %3444 = vmatpush1.msra.mxu0 %v601
    %3445 = vmatprep.subr.mxu0 %v606
    %3446 = vmatpush1.msra.mxu0 %v605
    %3447 = vmatprep.subr.mxu0 %v610
    %3448 = vmatpush1.msra.mxu0 %v609
    %3449 = vmatprep.subr.mxu0 %v614
    %3450 = vmatpush1.msra.mxu0 %v613
    %3451 = vmatprep.subr.mxu0 %v618
    %3452 = vmatpush1.msra.mxu0 %v617
    %3453 = vmatprep.subr.mxu0 0.0
    %3454 = vmatpush1.msra.mxu0 0.0
    %3455 = vmatprep.subr.mxu0 0.0
    %3456 = vmatpush1.msra.mxu0 0.0
    %3457 = vmatprep.subr.mxu0 0.0
    %3458 = vmatpush1.msra.mxu0 0.0
    %3459 = vmatprep.subr.mxu0 0.0
    %3460 = vmatpush1.msra.mxu0 0.0
    %3461 = vmatprep.subr.mxu0 0.0
    %3462 = vmatpush1.msra.mxu0 0.0
    %3463 = vmatprep.subr.mxu0 0.0
    %3464 = vmatpush1.msra.mxu0 0.0
    %3465 = vmatprep.subr.mxu0 0.0
    %3466 = vmatpush1.msra.mxu0 0.0
    %3467 = vmatprep.subr.mxu0 0.0
    %3468 = vmatpush1.msra.mxu0 0.0
    %3469 = vmatprep.subr.mxu0 0.0
    %3470 = vmatpush1.msra.mxu0 0.0
    %3471 = vmatprep.subr.mxu0 0.0
    %3472 = vmatpush1.msra.mxu0 0.0
    %3473 = vmatprep.subr.mxu0 0.0
    %3474 = vmatpush1.msra.mxu0 0.0
    %3475 = vmatprep.subr.mxu0 0.0
    %3476 = vmatpush1.msra.mxu0 0.0
    %3477 = vmatprep.subr.mxu0 0.0
    %3478 = vmatpush1.msra.mxu0 0.0
    %3479 = vmatprep.subr.mxu0 0.0
    %3480 = vmatpush1.msra.mxu0 0.0
    %3481 = vmatprep.subr.mxu0 0.0
    %3482 = vmatpush1.msra.mxu0 0.0
    %3483 = vmatprep.subr.mxu0 0.0
    %3484 = vmatpush1.msra.mxu0 0.0
    %3485 = vmatprep.mubr.f32.mxu0 0.0
    %3486 = vmatmul.mubr.f32.gmra.mrb[0].mxu0 %v3419
    %v3487 = vpop.f32.mrb[0].mxu0
    %v3488 = vadd.f32 0.0, %v3487
    %v3489 = vpop.f32.mrb[0].mxu0
    %v3490 = vadd.f32 0.0, %v3489
    %3491 = vdwg.mxu0
    %3492 = vmatprep.subr.mxu0 %v560
    %3493 = vmatpush1.msra.mxu0 %v559
    %3494 = vmatprep.subr.mxu0 %v564
    %3495 = vmatpush1.msra.mxu0 %v563
    %3496 = vmatprep.subr.mxu0 %v568
    %3497 = vmatpush1.msra.mxu0 %v567
    %3498 = vmatprep.subr.mxu0 %v572
    %3499 = vmatpush1.msra.mxu0 %v571
    %3500 = vmatprep.subr.mxu0 %v576
    %3501 = vmatpush1.msra.mxu0 %v575
    %3502 = vmatprep.subr.mxu0 %v580
    %3503 = vmatpush1.msra.mxu0 %v579
    %3504 = vmatprep.subr.mxu0 %v584
    %3505 = vmatpush1.msra.mxu0 %v583
    %3506 = vmatprep.subr.mxu0 %v588
    %3507 = vmatpush1.msra.mxu0 %v587
    %3508 = vmatprep.subr.mxu0 %v592
    %3509 = vmatpush1.msra.mxu0 %v591
    %3510 = vmatprep.subr.mxu0 %v596
    %3511 = vmatpush1.msra.mxu0 %v595
    %3512 = vmatprep.subr.mxu0 %v600
    %3513 = vmatpush1.msra.mxu0 %v599
    %3514 = vmatprep.subr.mxu0 %v604
    %3515 = vmatpush1.msra.mxu0 %v603
    %3516 = vmatprep.subr.mxu0 %v608
    %3517 = vmatpush1.msra.mxu0 %v607
    %3518 = vmatprep.subr.mxu0 %v612
    %3519 = vmatpush1.msra.mxu0 %v611
    %3520 = vmatprep.subr.mxu0 %v616
    %3521 = vmatpush1.msra.mxu0 %v615
    %3522 = vmatprep.subr.mxu0 %v620
    %3523 = vmatpush1.msra.mxu0 %v619
    %3524 = vmatprep.subr.mxu0 0.0
    %3525 = vmatpush1.msra.mxu0 0.0
    %3526 = vmatprep.subr.mxu0 0.0
    %3527 = vmatpush1.msra.mxu0 0.0
    %3528 = vmatprep.subr.mxu0 0.0
    %3529 = vmatpush1.msra.mxu0 0.0
    %3530 = vmatprep.subr.mxu0 0.0
    %3531 = vmatpush1.msra.mxu0 0.0
    %3532 = vmatprep.subr.mxu0 0.0
    %3533 = vmatpush1.msra.mxu0 0.0
    %3534 = vmatprep.subr.mxu0 0.0
    %3535 = vmatpush1.msra.mxu0 0.0
    %3536 = vmatprep.subr.mxu0 0.0
    %3537 = vmatpush1.msra.mxu0 0.0
    %3538 = vmatprep.subr.mxu0 0.0
    %3539 = vmatpush1.msra.mxu0 0.0
    %3540 = vmatprep.subr.mxu0 0.0
    %3541 = vmatpush1.msra.mxu0 0.0
    %3542 = vmatprep.subr.mxu0 0.0
    %3543 = vmatpush1.msra.mxu0 0.0
    %3544 = vmatprep.subr.mxu0 0.0
    %3545 = vmatpush1.msra.mxu0 0.0
    %3546 = vmatprep.subr.mxu0 0.0
    %3547 = vmatpush1.msra.mxu0 0.0
    %3548 = vmatprep.subr.mxu0 0.0
    %3549 = vmatpush1.msra.mxu0 0.0
    %3550 = vmatprep.subr.mxu0 0.0
    %3551 = vmatpush1.msra.mxu0 0.0
    %3552 = vmatprep.subr.mxu0 0.0
    %3553 = vmatpush1.msra.mxu0 0.0
    %3554 = vmatprep.subr.mxu0 0.0
    %3555 = vmatpush1.msra.mxu0 0.0
    %3556 = vmatprep.mubr.f32.mxu0 0.0
    %3557 = vmatmul.mubr.f32.gmra.mrb[0].mxu0 %v3419
    %v3558 = vpop.f32.mrb[0].mxu0
    %v3559 = vadd.f32 0.0, %v3558
    %v3560 = vpop.f32.mrb[0].mxu0
    %v3561 = vadd.f32 0.0, %v3560
    %3562 = vdwg.mxu0
    %v3567 = vrot.slane %v3488, 2
    %v3568 = vrot.slane %v3490, 2
    %v3569 = vrot.slane %v3559, 2
    %v3570 = vrot.slane %v3561, 2
    %v3575 = vadd.f32 %v3414, %v3567
    %v3576 = vadd.f32 %v3415, %v3568
    %v3577 = vadd.f32 %v3416, %v3569
    %v3578 = vadd.f32 %v3417, %v3570
    %v3579 = vxor.u32 %v3575, 2147483648
    %v3580 = vmul.f32 %v3579, 1.442695
    %v3581 = vpow.pop %v3580
    %v3582 = vadd.f32 %v3581, 1.0
    %v3583 = vrcp.pop %v3582
    %v3584 = vmul.f32 1.0, %v3583
    %v3585 = vxor.u32 %v3576, 2147483648
    %v3586 = vmul.f32 %v3585, 1.442695
    %v3587 = vpow.pop %v3586
    %v3588 = vadd.f32 %v3587, 1.0
    %v3589 = vrcp.pop %v3588
    %v3590 = vmul.f32 1.0, %v3589
    %v3591 = vtanh.pop %v3577
    %v3592 = vxor.u32 %v3578, 2147483648
    %v3593 = vmul.f32 %v3592, 1.442695
    %v3594 = vpow.pop %v3593
    %v3595 = vadd.f32 %v3594, 1.0
    %v3596 = vrcp.pop %v3595
    %v3597 = vmul.f32 1.0, %v3596
    %v3599 = vrot.slane %v3209, 6
    %v3601 = vmul.f32 %v3590, %v3599
    %v3602 = vmul.f32 %v3584, %v3591
    %v3603 = vadd.f32 %v3601, %v3602
    %v3604 = vtanh.pop %v3603
    %v3605 = vmul.f32 %v3597, %v3604
    %v3606 = vmul.f32 %v3605, %v867
    %v3607 = vsel %vm1069, %v3606, 0.0
    %3608 = vadd.xlane.f32.xlu0 %v3607
    %v3609 = vpop.xlane.xlu0 %3608
    %3610 = vst.msk [vmem:[%s7 - $0x6] sm:$0xc0] %vm1073, %v3609
    %v3611 = vld [vmem:[#allocation2 + $0x20] sm:$0x3]
    %v3612 = vld [vmem:[#allocation2 + $0x28] sm:$0x3]
    %v3613 = vld [vmem:[#allocation2 + $0x30] sm:$0x3]
    %v3614 = vld [vmem:[#allocation2 + $0x38] sm:$0x3]
    %v3616 = vrot.slane %v3408, 2
    %3618 = vmatprep.subr.mxu0 %v623
    %3619 = vmatpush1.msra.mxu0 %v622
    %3620 = vmatprep.subr.mxu0 %v627
    %3621 = vmatpush1.msra.mxu0 %v626
    %3622 = vmatprep.subr.mxu0 %v631
    %3623 = vmatpush1.msra.mxu0 %v630
    %3624 = vmatprep.subr.mxu0 %v635
    %3625 = vmatpush1.msra.mxu0 %v634
    %3626 = vmatprep.subr.mxu0 %v639
    %3627 = vmatpush1.msra.mxu0 %v638
    %3628 = vmatprep.subr.mxu0 %v643
    %3629 = vmatpush1.msra.mxu0 %v642
    %3630 = vmatprep.subr.mxu0 %v647
    %3631 = vmatpush1.msra.mxu0 %v646
    %3632 = vmatprep.subr.mxu0 %v651
    %3633 = vmatpush1.msra.mxu0 %v650
    %3634 = vmatprep.subr.mxu0 %v655
    %3635 = vmatpush1.msra.mxu0 %v654
    %3636 = vmatprep.subr.mxu0 %v659
    %3637 = vmatpush1.msra.mxu0 %v658
    %3638 = vmatprep.subr.mxu0 %v663
    %3639 = vmatpush1.msra.mxu0 %v662
    %3640 = vmatprep.subr.mxu0 %v667
    %3641 = vmatpush1.msra.mxu0 %v666
    %3642 = vmatprep.subr.mxu0 %v671
    %3643 = vmatpush1.msra.mxu0 %v670
    %3644 = vmatprep.subr.mxu0 %v675
    %3645 = vmatpush1.msra.mxu0 %v674
    %3646 = vmatprep.subr.mxu0 %v679
    %3647 = vmatpush1.msra.mxu0 %v678
    %3648 = vmatprep.subr.mxu0 %v683
    %3649 = vmatpush1.msra.mxu0 %v682
    %3650 = vmatprep.subr.mxu0 0.0
    %3651 = vmatpush1.msra.mxu0 0.0
    %3652 = vmatprep.subr.mxu0 0.0
    %3653 = vmatpush1.msra.mxu0 0.0
    %3654 = vmatprep.subr.mxu0 0.0
    %3655 = vmatpush1.msra.mxu0 0.0
    %3656 = vmatprep.subr.mxu0 0.0
    %3657 = vmatpush1.msra.mxu0 0.0
    %3658 = vmatprep.subr.mxu0 0.0
    %3659 = vmatpush1.msra.mxu0 0.0
    %3660 = vmatprep.subr.mxu0 0.0
    %3661 = vmatpush1.msra.mxu0 0.0
    %3662 = vmatprep.subr.mxu0 0.0
    %3663 = vmatpush1.msra.mxu0 0.0
    %3664 = vmatprep.subr.mxu0 0.0
    %3665 = vmatpush1.msra.mxu0 0.0
    %3666 = vmatprep.subr.mxu0 0.0
    %3667 = vmatpush1.msra.mxu0 0.0
    %3668 = vmatprep.subr.mxu0 0.0
    %3669 = vmatpush1.msra.mxu0 0.0
    %3670 = vmatprep.subr.mxu0 0.0
    %3671 = vmatpush1.msra.mxu0 0.0
    %3672 = vmatprep.subr.mxu0 0.0
    %3673 = vmatpush1.msra.mxu0 0.0
    %3674 = vmatprep.subr.mxu0 0.0
    %3675 = vmatpush1.msra.mxu0 0.0
    %3676 = vmatprep.subr.mxu0 0.0
    %3677 = vmatpush1.msra.mxu0 0.0
    %3678 = vmatprep.subr.mxu0 0.0
    %3679 = vmatpush1.msra.mxu0 0.0
    %3680 = vmatprep.subr.mxu0 0.0
    %3681 = vmatpush1.msra.mxu0 0.0
    %3682 = vmatprep.mubr.f32.mxu0 0.0
    %3683 = vmatmul.mubr.f32.gmra.mrb[0].mxu0 %v3616
    %v3684 = vpop.f32.mrb[0].mxu0
    %v3685 = vadd.f32 0.0, %v3684
    %v3686 = vpop.f32.mrb[0].mxu0
    %v3687 = vadd.f32 0.0, %v3686
    %3688 = vdwg.mxu0
    %3689 = vmatprep.subr.mxu0 %v625
    %3690 = vmatpush1.msra.mxu0 %v624
    %3691 = vmatprep.subr.mxu0 %v629
    %3692 = vmatpush1.msra.mxu0 %v628
    %3693 = vmatprep.subr.mxu0 %v633
    %3694 = vmatpush1.msra.mxu0 %v632
    %3695 = vmatprep.subr.mxu0 %v637
    %3696 = vmatpush1.msra.mxu0 %v636
    %3697 = vmatprep.subr.mxu0 %v641
    %3698 = vmatpush1.msra.mxu0 %v640
    %3699 = vmatprep.subr.mxu0 %v645
    %3700 = vmatpush1.msra.mxu0 %v644
    %3701 = vmatprep.subr.mxu0 %v649
    %3702 = vmatpush1.msra.mxu0 %v648
    %3703 = vmatprep.subr.mxu0 %v653
    %3704 = vmatpush1.msra.mxu0 %v652
    %3705 = vmatprep.subr.mxu0 %v657
    %3706 = vmatpush1.msra.mxu0 %v656
    %3707 = vmatprep.subr.mxu0 %v661
    %3708 = vmatpush1.msra.mxu0 %v660
    %3709 = vmatprep.subr.mxu0 %v665
    %3710 = vmatpush1.msra.mxu0 %v664
    %3711 = vmatprep.subr.mxu0 %v669
    %3712 = vmatpush1.msra.mxu0 %v668
    %3713 = vmatprep.subr.mxu0 %v673
    %3714 = vmatpush1.msra.mxu0 %v672
    %3715 = vmatprep.subr.mxu0 %v677
    %3716 = vmatpush1.msra.mxu0 %v676
    %3717 = vmatprep.subr.mxu0 %v681
    %3718 = vmatpush1.msra.mxu0 %v680
    %3719 = vmatprep.subr.mxu0 %v685
    %3720 = vmatpush1.msra.mxu0 %v684
    %3721 = vmatprep.subr.mxu0 0.0
    %3722 = vmatpush1.msra.mxu0 0.0
    %3723 = vmatprep.subr.mxu0 0.0
    %3724 = vmatpush1.msra.mxu0 0.0
    %3725 = vmatprep.subr.mxu0 0.0
    %3726 = vmatpush1.msra.mxu0 0.0
    %3727 = vmatprep.subr.mxu0 0.0
    %3728 = vmatpush1.msra.mxu0 0.0
    %3729 = vmatprep.subr.mxu0 0.0
    %3730 = vmatpush1.msra.mxu0 0.0
    %3731 = vmatprep.subr.mxu0 0.0
    %3732 = vmatpush1.msra.mxu0 0.0
    %3733 = vmatprep.subr.mxu0 0.0
    %3734 = vmatpush1.msra.mxu0 0.0
    %3735 = vmatprep.subr.mxu0 0.0
    %3736 = vmatpush1.msra.mxu0 0.0
    %3737 = vmatprep.subr.mxu0 0.0
    %3738 = vmatpush1.msra.mxu0 0.0
    %3739 = vmatprep.subr.mxu0 0.0
    %3740 = vmatpush1.msra.mxu0 0.0
    %3741 = vmatprep.subr.mxu0 0.0
    %3742 = vmatpush1.msra.mxu0 0.0
    %3743 = vmatprep.subr.mxu0 0.0
    %3744 = vmatpush1.msra.mxu0 0.0
    %3745 = vmatprep.subr.mxu0 0.0
    %3746 = vmatpush1.msra.mxu0 0.0
    %3747 = vmatprep.subr.mxu0 0.0
    %3748 = vmatpush1.msra.mxu0 0.0
    %3749 = vmatprep.subr.mxu0 0.0
    %3750 = vmatpush1.msra.mxu0 0.0
    %3751 = vmatprep.subr.mxu0 0.0
    %3752 = vmatpush1.msra.mxu0 0.0
    %3753 = vmatprep.mubr.f32.mxu0 0.0
    %3754 = vmatmul.mubr.f32.gmra.mrb[0].mxu0 %v3616
    %v3755 = vpop.f32.mrb[0].mxu0
    %v3756 = vadd.f32 0.0, %v3755
    %v3757 = vpop.f32.mrb[0].mxu0
    %v3758 = vadd.f32 0.0, %v3757
    %3759 = vdwg.mxu0
    %v3760 = vadd.f32 %v3611, %v3685
    %v3761 = vadd.f32 %v3612, %v3687
    %v3762 = vadd.f32 %v3613, %v3756
    %v3763 = vadd.f32 %v3614, %v3758
    %v3764 = vxor.u32 %v3760, 2147483648
    %v3765 = vmul.f32 %v3764, 1.442695
    %v3766 = vpow.pop %v3765
    %v3767 = vadd.f32 %v3766, 1.0
    %v3768 = vrcp.pop %v3767
    %v3769 = vmul.f32 1.0, %v3768
    %v3770 = vxor.u32 %v3761, 2147483648
    %v3771 = vmul.f32 %v3770, 1.442695
    %v3772 = vpow.pop %v3771
    %v3773 = vadd.f32 %v3772, 1.0
    %v3774 = vrcp.pop %v3773
    %v3775 = vmul.f32 1.0, %v3774
    %v3776 = vtanh.pop %v3762
    %v3777 = vxor.u32 %v3763, 2147483648
    %v3778 = vmul.f32 %v3777, 1.442695
    %v3779 = vpow.pop %v3778
    %v3780 = vadd.f32 %v3779, 1.0
    %v3781 = vrcp.pop %v3780
    %v3782 = vmul.f32 1.0, %v3781
    %v3784 = vrot.slane %v3406, 2
    %v3786 = vmul.f32 %v3775, %v3784
    %v3787 = vmul.f32 %v3769, %v3776
    %v3788 = vadd.f32 %v3786, %v3787
    %v3789 = vtanh.pop %v3788
    %v3790 = vmul.f32 %v3782, %v3789
    %v3791 = vmul.f32 %v3790, %v1066
    %v3792 = vsel %vm870, %v3791, 0.0
    %3793 = vadd.xlane.f32.xlu0 %v3792
    %v3794 = vpop.xlane.xlu0 %3793
    %3795 = vst.msk [vmem:[%s8] sm:$0x3] %vm874, %v3794
    // Predicated region
    $region38: #{lstm_model_forward.1} parent=1 // pred_check
      _
    $region39: #{lstm_model_forward.1} parent=1 // pred_check_branch
      %3797 = sbr.rel (0) target = $region41
    $region40: #{lstm_model_forward.1} parent=1 // pred_region
      _
    $region41: #{lstm_model_forward.1} parent=1 // pred_fallthru
      _
    // Predicated region
    $region42: #{lstm_model_forward.1} parent=1 // pred_check
      _
    $region43: #{lstm_model_forward.1} parent=1 // pred_check_branch
      %3799 = sbr.rel (0) target = $region45
    $region44: #{lstm_model_forward.1} parent=1 // pred_region
      _
    $region45: #{lstm_model_forward.1} parent=1 // pred_fallthru
      _
    // Predicated region
    $region46: #{lstm_model_forward.1} parent=1 // pred_check
      _
    $region47: #{lstm_model_forward.1} parent=1 // pred_check_branch
      %3801 = sbr.rel (0) target = $region49
    $region48: #{lstm_model_forward.1} parent=1 // pred_region
      _
    $region49: #{lstm_model_forward.1} parent=1 // pred_fallthru
      _
    // Predicated region
    $region50: #{lstm_model_forward.1} parent=1 // pred_check
      _
    $region51: #{lstm_model_forward.1} parent=1 // pred_check_branch
      %3803 = sbr.rel (0) target = $region53
    $region52: #{lstm_model_forward.1} parent=1 // pred_region
      _
    $region53: #{lstm_model_forward.1} parent=1 // pred_fallthru
      _
    %3804 = vsyncpa [#allocation4], 1
    %3805 = vsyncpa [#allocation6], 1

</llo_original>
